<compile_context>
chip_gen: v6e
topology: v6e:2x2x1
jax: 0.10.0
libtpu: 0.0.40
codegen_flags: <defaults>
</compile_context>

<pallas_src>
import functools

import jax
import jax.numpy as jnp
from jax import lax
from jax.experimental import pallas as pl
from jax.experimental.pallas import tpu as pltpu


# ----------------------- fused conv-stage Pallas kernel ----------------------

def _conv_stage_kernel(p_ref, w_ref, o_ref, y_ref, *, B, Ho, Wo, Hp, Wp,
                       pool_k, pool_s, eps):
    """Conv (as one matmul) + BatchNorm(train) + ReLU + MaxPool, fully fused.

    p_ref : [M, K]          im2col patches, rows enumerate (b, ho, wo)
    w_ref : [K, Cout]       conv weight as a (kh, kw, cin) x cout matrix
    o_ref : [B*Hp*Wp, Cout] pooled output, rows enumerate (b, hp, wp)
    y_ref : VMEM scratch [M, Cout] — post-BN/ReLU activation, never hits HBM
    """
    M = B * Ho * Wo

    # Conv as a single MXU matmul with f32 accumulation.  (Conv bias omitted:
    # it cancels exactly under training-mode BatchNorm.)
    y = jnp.dot(p_ref[...], w_ref[...], preferred_element_type=jnp.float32)

    # Training-mode BatchNorm2d statistics over the (b, h, w) rows
    # (biased variance, gamma=1, beta=0 — fresh torch module defaults).
    inv_m = 1.0 / M
    mean = jnp.sum(y, axis=0, keepdims=True) * inv_m
    var = jnp.sum(y * y, axis=0, keepdims=True) * inv_m - mean * mean
    scale = lax.rsqrt(var + eps)

    # BN + ReLU, kept resident in VMEM for the pooling pass.
    y_ref[...] = jnp.maximum((y - mean) * scale, 0.0)

    # pool_k x pool_k / stride pool_s max pool, fully unrolled (Hp, Wp tiny).
    span = Wo - (pool_k - 1)
    for b in range(B):
        for hp in range(Hp):
            # max over the pool_k activation rows h = pool_s*hp + dh
            hm = y_ref[pl.ds((b * Ho + pool_s * hp) * Wo, Wo), :]       # [Wo, C]
            for dh in range(1, pool_k):
                h = pool_s * hp + dh
                hm = jnp.maximum(hm, y_ref[pl.ds((b * Ho + h) * Wo, Wo), :])
            # stride-1 window max along w (vectorized over all span rows) ...
            q = hm[0:span, :]
            for dw in range(1, pool_k):
                q = jnp.maximum(q, hm[dw:dw + span, :])
            # ... subsample every pool_s-th row and write ONE block of Wp
            # pooled pixels per (b, hp) instead of Wp single-row stores.
            rows = [q[pool_s * wp:pool_s * wp + 1, :] for wp in range(Wp)]
            o_ref[pl.ds((b * Hp + hp) * Wp, Wp), :] = jnp.concatenate(rows, axis=0)


def conv_bn_relu_pool(x_nhwc, w_oihw, *, k, stride, pad,
                      pool_k=3, pool_s=2, eps=1e-5):
    B = x_nhwc.shape[0]
    Cout = w_oihw.shape[0]
    patches, Ho, Wo = _im2col(x_nhwc, k, stride, pad)     # [B*Ho*Wo, k*k*Cin]
    Hp = (Ho - pool_k) // pool_s + 1
    Wp = (Wo - pool_k) // pool_s + 1
    wmat = _conv_weight_to_matrix(w_oihw)                 # [k*k*Cin, Cout]

    kern = functools.partial(
        _conv_stage_kernel, B=B, Ho=Ho, Wo=Wo, Hp=Hp, Wp=Wp,
        pool_k=pool_k, pool_s=pool_s, eps=eps)
    # Single full-array block: at these shapes everything (<1 MiB padded)
    # co-resides in VMEM on v5e/v6e/v7x.  If B or resolution grow, add an
    # M-tiled grid marked "parallel" (v7x 2-TC sharding / 64 MiB VMEM).
    pooled = pl.pallas_call(
        kern,
        out_shape=jax.ShapeDtypeStruct((B * Hp * Wp, Cout), jnp.float32),
        scratch_shapes=[pltpu.VMEM((B * Ho * Wo, Cout), jnp.float32)],
    )(patches, wmat)
    return pooled.reshape(B, Hp, Wp, Cout)                # NHWC


# ------------------- fused FC-heads + Gaussian-mask kernel -------------------

def _head_mask_kernel(f_ref, w_ref, b_ref, o_ref, *, H, W, half):
    """fc_cent & fc_std (one matmul) + tanh/sigmoid + per-pixel mask.

    f_ref : [B, fcsize]   features flattened in torch (c, h, w) order
    w_ref : [fcsize, 4]   [fc_cent.weight ; fc_std.weight]^T
    b_ref : [1, 4]        [fc_cent.bias , fc_std.bias]
    o_ref : [B, H*W]      lane-dense mask rows (reshaped outside)
    """
    logits = (jnp.dot(f_ref[...], w_ref[...],
                      preferred_element_type=jnp.float32) + b_ref[...])   # [B,4]
    mean = half + half * jnp.tanh(logits[:, 0:2])                         # [B,2]
    std = 2.0 + 10.0 * jax.nn.sigmoid(logits[:, 2:4])                     # [B,2]
    inv = 1.0 / (2.0 * std * std)                                         # 1/(2σ²)
    mu_h, mu_w = mean[:, 0:1], mean[:, 1:2]                               # [B,1]
    iv_h, iv_w = inv[:, 0:1], inv[:, 1:2]

    # Row / column coordinate of every pixel, generated lane-dense over H*W.
    flat = lax.broadcasted_iota(jnp.int32, o_ref.shape, 1).astype(jnp.float32)
    h_f = jnp.floor((flat + 0.5) * (1.0 / W))     # == floor(flat / W), exactly
    w_f = flat - h_f * W
    e = -((mu_h - h_f) ** 2 * iv_h + (mu_w - w_f) ** 2 * iv_w)
    o_ref[...] = 0.5 + jnp.exp(e)


def head_mask(feat, wc, bc, ws, bs, H, W):
    B = feat.shape[0]
    w4 = jnp.concatenate([wc, ws], axis=0).T               # [fcsize, 4]
    b4 = jnp.concatenate([bc, bs], axis=0).reshape(1, 4)
    kern = functools.partial(_head_mask_kernel, H=H, W=W, half=H // 2)
    mask = pl.pallas_call(
        kern,
        out_shape=jax.ShapeDtypeStruct((B, H * W), jnp.float32),
    )(feat, w4, b4)
    return mask.reshape(B, H, W)


# -------------------------------- JAX glue -----------------------------------

def _im2col(x_nhwc, k, stride, pad):
    B, H, W, C = x_nhwc.shape
    xp = jnp.pad(x_nhwc, ((0, 0), (pad, pad), (pad, pad), (0, 0)))
    Hpad, Wpad = H + 2 * pad, W + 2 * pad
    Ho = (Hpad - k) // stride + 1
    Wo = (Wpad - k) // stride + 1
    cols = []
    for di in range(k):
        for dj in range(k):
            cols.append(
                xp[:, di:di + stride * (Ho - 1) + 1:stride,
                      dj:dj + stride * (Wo - 1) + 1:stride, :])
    patches = jnp.stack(cols, axis=3)                      # [B, Ho, Wo, k*k, C]
    return patches.reshape(B * Ho * Wo, k * k * C), Ho, Wo


def _conv_weight_to_matrix(w_oihw):
    # torch layout [Cout, Cin, kH, kW] -> [kH*kW*Cin, Cout], matching the
    # (kh, kw, cin) column order produced by _im2col.
    Cout, Cin, kH, kW = w_oihw.shape
    return jnp.transpose(w_oihw, (2, 3, 1, 0)).reshape(kH * kW * Cin, Cout)


def cbr_teacher_forward(x_nchw, params):
    B, C, H, W = x_nchw.shape
    x_nhwc = jnp.transpose(x_nchw, (0, 2, 3, 1)).astype(jnp.float32)

    out = conv_bn_relu_pool(x_nhwc, params["w1"], k=5, stride=2, pad=2)
    out = conv_bn_relu_pool(out, params["w2"], k=3, stride=2, pad=2)

    # torch's out.reshape(B, -1) flattens the NCHW tensor in (c, h, w) order.
    feat = jnp.transpose(out, (0, 3, 1, 2)).reshape(B, -1)  # [B, fcsize]

    # TODO(synk): the PyTorch forward also print()s mean/std statistics and
    # (in training mode) updates BatchNorm running-stat buffers; those host /
    # module side effects are omitted here.
    mask = head_mask(feat, params["wc"], params["bc"],
                     params["ws"], params["bs"], H, W)       # [B, H, W]
    return jnp.broadcast_to(mask[:, None, :, :], (B, C, H, W))


# ------------------------------- parameters ----------------------------------

def init_params(key, num_channels):
    fcsize = 64 if num_channels == 1 else 256
    ks = jax.random.split(key, 8)
    s = 0.05
    return {
        # b1/b2 mirror the torch conv biases but are mathematically dead under
        # training-mode BatchNorm (they cancel in y - mean(y)); unused below.
        "w1": s * jax.random.normal(ks[0], (32, num_channels, 5, 5), jnp.float32),
        "b1": s * jax.random.normal(ks[1], (32,), jnp.float32),
        "w2": s * jax.random.normal(ks[2], (64, 32, 3, 3), jnp.float32),
        "b2": s * jax.random.normal(ks[3], (64,), jnp.float32),
        "wc": s * jax.random.normal(ks[4], (2, fcsize), jnp.float32),
        "bc": s * jax.random.normal(ks[5], (2,), jnp.float32),
        "ws": s * jax.random.normal(ks[6], (2, fcsize), jnp.float32),
        "bs": s * jax.random.normal(ks[7], (2,), jnp.float32),
    }


if __name__ == "__main__":
    key = jax.random.PRNGKey(0)
    k_x, k_p = jax.random.split(key)
    num_channels = 3                   # fcsize=256 branch => requires 32x32 input
    x = jax.random.normal(k_x, (2, num_channels, 32, 32), jnp.float32)
    params = init_params(k_p, num_channels)

    out = jax.jit(cbr_teacher_forward)(x, params)
    out = jax.block_until_ready(out)
    assert out.shape == (2, num_channels, 32, 32)
    assert out.dtype == jnp.float32
    assert bool(jnp.all(jnp.isfinite(out)))
    print("KERNEL_OK")
</pallas_src>

<mosaic_0001>
module attributes {stable_mosaic.version = 11 : i64} {
  func.func @_conv_stage_kernel(%arg0: memref<512x75xf32, #tpu.memory_space<vmem>>, %arg1: memref<75x32xf32, #tpu.memory_space<vmem>>, %arg2: memref<98x32xf32, #tpu.memory_space<vmem>>, %arg3: memref<512x32xf32, #tpu.memory_space<vmem>>) attributes {dimension_semantics = [], scalar_prefetch = 0 : i64, scratch_operands = 1 : i64, tpu.core_type = #tpu.core_type<tc>} {
    %c0 = arith.constant 0 : index
    %c0_0 = arith.constant 0 : index
    %0 = vector.load %arg0[%c0, %c0_0] : memref<512x75xf32, #tpu.memory_space<vmem>>, vector<512x75xf32>
    %c0_1 = arith.constant 0 : index
    %c0_2 = arith.constant 0 : index
    %1 = vector.load %arg1[%c0_1, %c0_2] : memref<75x32xf32, #tpu.memory_space<vmem>>, vector<75x32xf32>
    %cst = arith.constant dense<0.000000e+00> : vector<512x32xf32>
    %2 = tpu.matmul %0, %1, %cst {dimension_numbers = #tpu.dot_dimension_numbers<[1], [0], [0], [1], [0, 0, 1, 1], [], []>} : vector<512x75xf32>, vector<75x32xf32>, vector<512x32xf32> -> vector<512x32xf32>
    %cst_3 = arith.constant dense<0.000000e+00> : vector<32xf32>
    %3 = vector.multi_reduction <add>, %2, %cst_3 [0] : vector<512x32xf32> to vector<32xf32>
    %4 = vector.shape_cast %3 : vector<32xf32> to vector<1x32xf32>
    %cst_4 = arith.constant 0.001953125 : f32
    %5 = vector.broadcast %cst_4 : f32 to vector<1x32xf32>
    %6 = arith.mulf %4, %5 : vector<1x32xf32>
    %7 = arith.mulf %2, %2 : vector<512x32xf32>
    %cst_5 = arith.constant dense<0.000000e+00> : vector<32xf32>
    %8 = vector.multi_reduction <add>, %7, %cst_5 [0] : vector<512x32xf32> to vector<32xf32>
    %9 = vector.shape_cast %8 : vector<32xf32> to vector<1x32xf32>
    %cst_6 = arith.constant 0.001953125 : f32
    %10 = vector.broadcast %cst_6 : f32 to vector<1x32xf32>
    %11 = arith.mulf %9, %10 : vector<1x32xf32>
    %12 = arith.mulf %6, %6 : vector<1x32xf32>
    %13 = arith.subf %11, %12 : vector<1x32xf32>
    %cst_7 = arith.constant 9.99999974E-6 : f32
    %14 = vector.broadcast %cst_7 : f32 to vector<1x32xf32>
    %15 = arith.addf %13, %14 : vector<1x32xf32>
    %16 = math.rsqrt %15 : vector<1x32xf32>
    %17 = vector.broadcast %6 : vector<1x32xf32> to vector<512x32xf32>
    %18 = arith.subf %2, %17 : vector<512x32xf32>
    %19 = vector.broadcast %16 : vector<1x32xf32> to vector<512x32xf32>
    %20 = arith.mulf %18, %19 : vector<512x32xf32>
    %cst_8 = arith.constant 0.000000e+00 : f32
    %21 = vector.broadcast %cst_8 : f32 to vector<512x32xf32>
    %22 = arith.maximumf %20, %21 : vector<512x32xf32>
    %c0_9 = arith.constant 0 : index
    %c0_10 = arith.constant 0 : index
    %23 = vector.load %arg3[%c0_9, %c0_10] : memref<512x32xf32, #tpu.memory_space<vmem>>, vector<512x32xf32>
    tpu.vector_store %arg3[%c0_9, %c0_10], %22 {strides = array<i32>} : memref<512x32xf32, #tpu.memory_space<vmem>>, vector<512x32xf32>,
    %c0_11 = arith.constant 0 : index
    %c0_12 = arith.constant 0 : index
    %24 = vector.load %arg3[%c0_11, %c0_12] : memref<512x32xf32, #tpu.memory_space<vmem>>, vector<16x32xf32>
    %c16 = arith.constant 16 : index
    %c0_13 = arith.constant 0 : index
    %25 = vector.load %arg3[%c16, %c0_13] : memref<512x32xf32, #tpu.memory_space<vmem>>, vector<16x32xf32>
    %26 = arith.maximumf %24, %25 : vector<16x32xf32>
    %c32 = arith.constant 32 : index
    %c0_14 = arith.constant 0 : index
    %27 = vector.load %arg3[%c32, %c0_14] : memref<512x32xf32, #tpu.memory_space<vmem>>, vector<16x32xf32>
    %28 = arith.maximumf %26, %27 : vector<16x32xf32>
    %29 = vector.extract_strided_slice %28 {offsets = [0, 0], sizes = [14, 32], strides = [1, 1]} : vector<16x32xf32> to vector<14x32xf32>
    %30 = vector.extract_strided_slice %28 {offsets = [1, 0], sizes = [14, 32], strides = [1, 1]} : vector<16x32xf32> to vector<14x32xf32>
    %31 = arith.maximumf %29, %30 : vector<14x32xf32>
    %32 = vector.extract_strided_slice %28 {offsets = [2, 0], sizes = [14, 32], strides = [1, 1]} : vector<16x32xf32> to vector<14x32xf32>
    %33 = arith.maximumf %31, %32 : vector<14x32xf32>
    %34 = vector.extract_strided_slice %33 {offsets = [0, 0], sizes = [1, 32], strides = [1, 1]} : vector<14x32xf32> to vector<1x32xf32>
    %35 = vector.extract_strided_slice %33 {offsets = [2, 0], sizes = [1, 32], strides = [1, 1]} : vector<14x32xf32> to vector<1x32xf32>
    %36 = vector.extract_strided_slice %33 {offsets = [4, 0], sizes = [1, 32], strides = [1, 1]} : vector<14x32xf32> to vector<1x32xf32>
    %37 = vector.extract_strided_slice %33 {offsets = [6, 0], sizes = [1, 32], strides = [1, 1]} : vector<14x32xf32> to vector<1x32xf32>
    %38 = vector.extract_strided_slice %33 {offsets = [8, 0], sizes = [1, 32], strides = [1, 1]} : vector<14x32xf32> to vector<1x32xf32>
    %39 = vector.extract_strided_slice %33 {offsets = [10, 0], sizes = [1, 32], strides = [1, 1]} : vector<14x32xf32> to vector<1x32xf32>
    %40 = vector.extract_strided_slice %33 {offsets = [12, 0], sizes = [1, 32], strides = [1, 1]} : vector<14x32xf32> to vector<1x32xf32>
    %41 = tpu.concatenate %34, %35, %36, %37, %38, %39, %40 in 0 : vector<1x32xf32>, vector<1x32xf32>, vector<1x32xf32>, vector<1x32xf32>, vector<1x32xf32>, vector<1x32xf32>, vector<1x32xf32> -> vector<7x32xf32>
    %c0_15 = arith.constant 0 : index
    %c0_16 = arith.constant 0 : index
    %42 = vector.load %arg2[%c0_15, %c0_16] : memref<98x32xf32, #tpu.memory_space<vmem>>, vector<7x32xf32>
    tpu.vector_store %arg2[%c0_15, %c0_16], %41 {strides = array<i32>} : memref<98x32xf32, #tpu.memory_space<vmem>>, vector<7x32xf32>,
    %c32_17 = arith.constant 32 : index
    %c0_18 = arith.constant 0 : index
    %43 = vector.load %arg3[%c32_17, %c0_18] : memref<512x32xf32, #tpu.memory_space<vmem>>, vector<16x32xf32>
    %c48 = arith.constant 48 : index
    %c0_19 = arith.constant 0 : index
    %44 = vector.load %arg3[%c48, %c0_19] : memref<512x32xf32, #tpu.memory_space<vmem>>, vector<16x32xf32>
    %45 = arith.maximumf %43, %44 : vector<16x32xf32>
    %c64 = arith.constant 64 : index
    %c0_20 = arith.constant 0 : index
    %46 = vector.load %arg3[%c64, %c0_20] : memref<512x32xf32, #tpu.memory_space<vmem>>, vector<16x32xf32>
    %47 = arith.maximumf %45, %46 : vector<16x32xf32>
    %48 = vector.extract_strided_slice %47 {offsets = [0, 0], sizes = [14, 32], strides = [1, 1]} : vector<16x32xf32> to vector<14x32xf32>
    %49 = vector.extract_strided_slice %47 {offsets = [1, 0], sizes = [14, 32], strides = [1, 1]} : vector<16x32xf32> to vector<14x32xf32>
    %50 = arith.maximumf %48, %49 : vector<14x32xf32>
    %51 = vector.extract_strided_slice %47 {offsets = [2, 0], sizes = [14, 32], strides = [1, 1]} : vector<16x32xf32> to vector<14x32xf32>
    %52 = arith.maximumf %50, %51 : vector<14x32xf32>
    %53 = vector.extract_strided_slice %52 {offsets = [0, 0], sizes = [1, 32], strides = [1, 1]} : vector<14x32xf32> to vector<1x32xf32>
    %54 = vector.extract_strided_slice %52 {offsets = [2, 0], sizes = [1, 32], strides = [1, 1]} : vector<14x32xf32> to vector<1x32xf32>
    %55 = vector.extract_strided_slice %52 {offsets = [4, 0], sizes = [1, 32], strides = [1, 1]} : vector<14x32xf32> to vector<1x32xf32>
    %56 = vector.extract_strided_slice %52 {offsets = [6, 0], sizes = [1, 32], strides = [1, 1]} : vector<14x32xf32> to vector<1x32xf32>
    %57 = vector.extract_strided_slice %52 {offsets = [8, 0], sizes = [1, 32], strides = [1, 1]} : vector<14x32xf32> to vector<1x32xf32>
    %58 = vector.extract_strided_slice %52 {offsets = [10, 0], sizes = [1, 32], strides = [1, 1]} : vector<14x32xf32> to vector<1x32xf32>
    %59 = vector.extract_strided_slice %52 {offsets = [12, 0], sizes = [1, 32], strides = [1, 1]} : vector<14x32xf32> to vector<1x32xf32>
    %60 = tpu.concatenate %53, %54, %55, %56, %57, %58, %59 in 0 : vector<1x32xf32>, vector<1x32xf32>, vector<1x32xf32>, vector<1x32xf32>, vector<1x32xf32>, vector<1x32xf32>, vector<1x32xf32> -> vector<7x32xf32>
    %c7 = arith.constant 7 : index
    %c0_21 = arith.constant 0 : index
    %61 = vector.load %arg2[%c7, %c0_21] : memref<98x32xf32, #tpu.memory_space<vmem>>, vector<7x32xf32>
    tpu.vector_store %arg2[%c7, %c0_21], %60 {strides = array<i32>} : memref<98x32xf32, #tpu.memory_space<vmem>>, vector<7x32xf32>,
    %c64_22 = arith.constant 64 : index
    %c0_23 = arith.constant 0 : index
    %62 = vector.load %arg3[%c64_22, %c0_23] : memref<512x32xf32, #tpu.memory_space<vmem>>, vector<16x32xf32>
    %c80 = arith.constant 80 : index
    %c0_24 = arith.constant 0 : index
    %63 = vector.load %arg3[%c80, %c0_24] : memref<512x32xf32, #tpu.memory_space<vmem>>, vector<16x32xf32>
    %64 = arith.maximumf %62, %63 : vector<16x32xf32>
    %c96 = arith.constant 96 : index
    %c0_25 = arith.constant 0 : index
    %65 = vector.load %arg3[%c96, %c0_25] : memref<512x32xf32, #tpu.memory_space<vmem>>, vector<16x32xf32>
    %66 = arith.maximumf %64, %65 : vector<16x32xf32>
    %67 = vector.extract_strided_slice %66 {offsets = [0, 0], sizes = [14, 32], strides = [1, 1]} : vector<16x32xf32> to vector<14x32xf32>
    %68 = vector.extract_strided_slice %66 {offsets = [1, 0], sizes = [14, 32], strides = [1, 1]} : vector<16x32xf32> to vector<14x32xf32>
    %69 = arith.maximumf %67, %68 : vector<14x32xf32>
    %70 = vector.extract_strided_slice %66 {offsets = [2, 0], sizes = [14, 32], strides = [1, 1]} : vector<16x32xf32> to vector<14x32xf32>
    %71 = arith.maximumf %69, %70 : vector<14x32xf32>
    %72 = vector.extract_strided_slice %71 {offsets = [0, 0], sizes = [1, 32], strides = [1, 1]} : vector<14x32xf32> to vector<1x32xf32>
    %73 = vector.extract_strided_slice %71 {offsets = [2, 0], sizes = [1, 32], strides = [1, 1]} : vector<14x32xf32> to vector<1x32xf32>
    %74 = vector.extract_strided_slice %71 {offsets = [4, 0], sizes = [1, 32], strides = [1, 1]} : vector<14x32xf32> to vector<1x32xf32>
    %75 = vector.extract_strided_slice %71 {offsets = [6, 0], sizes = [1, 32], strides = [1, 1]} : vector<14x32xf32> to vector<1x32xf32>
    %76 = vector.extract_strided_slice %71 {offsets = [8, 0], sizes = [1, 32], strides = [1, 1]} : vector<14x32xf32> to vector<1x32xf32>
    %77 = vector.extract_strided_slice %71 {offsets = [10, 0], sizes = [1, 32], strides = [1, 1]} : vector<14x32xf32> to vector<1x32xf32>
    %78 = vector.extract_strided_slice %71 {offsets = [12, 0], sizes = [1, 32], strides = [1, 1]} : vector<14x32xf32> to vector<1x32xf32>
    %79 = tpu.concatenate %72, %73, %74, %75, %76, %77, %78 in 0 : vector<1x32xf32>, vector<1x32xf32>, vector<1x32xf32>, vector<1x32xf32>, vector<1x32xf32>, vector<1x32xf32>, vector<1x32xf32> -> vector<7x32xf32>
    %c14 = arith.constant 14 : index
    %c0_26 = arith.constant 0 : index
    %80 = vector.load %arg2[%c14, %c0_26] : memref<98x32xf32, #tpu.memory_space<vmem>>, vector<7x32xf32>
    tpu.vector_store %arg2[%c14, %c0_26], %79 {strides = array<i32>} : memref<98x32xf32, #tpu.memory_space<vmem>>, vector<7x32xf32>,
    %c96_27 = arith.constant 96 : index
    %c0_28 = arith.constant 0 : index
    %81 = vector.load %arg3[%c96_27, %c0_28] : memref<512x32xf32, #tpu.memory_space<vmem>>, vector<16x32xf32>
    %c112 = arith.constant 112 : index
    %c0_29 = arith.constant 0 : index
    %82 = vector.load %arg3[%c112, %c0_29] : memref<512x32xf32, #tpu.memory_space<vmem>>, vector<16x32xf32>
    %83 = arith.maximumf %81, %82 : vector<16x32xf32>
    %c128 = arith.constant 128 : index
    %c0_30 = arith.constant 0 : index
    %84 = vector.load %arg3[%c128, %c0_30] : memref<512x32xf32, #tpu.memory_space<vmem>>, vector<16x32xf32>
    %85 = arith.maximumf %83, %84 : vector<16x32xf32>
    %86 = vector.extract_strided_slice %85 {offsets = [0, 0], sizes = [14, 32], strides = [1, 1]} : vector<16x32xf32> to vector<14x32xf32>
    %87 = vector.extract_strided_slice %85 {offsets = [1, 0], sizes = [14, 32], strides = [1, 1]} : vector<16x32xf32> to vector<14x32xf32>
    %88 = arith.maximumf %86, %87 : vector<14x32xf32>
    %89 = vector.extract_strided_slice %85 {offsets = [2, 0], sizes = [14, 32], strides = [1, 1]} : vector<16x32xf32> to vector<14x32xf32>
    %90 = arith.maximumf %88, %89 : vector<14x32xf32>
    %91 = vector.extract_strided_slice %90 {offsets = [0, 0], sizes = [1, 32], strides = [1, 1]} : vector<14x32xf32> to vector<1x32xf32>
    %92 = vector.extract_strided_slice %90 {offsets = [2, 0], sizes = [1, 32], strides = [1, 1]} : vector<14x32xf32> to vector<1x32xf32>
    %93 = vector.extract_strided_slice %90 {offsets = [4, 0], sizes = [1, 32], strides = [1, 1]} : vector<14x32xf32> to vector<1x32xf32>
    %94 = vector.extract_strided_slice %90 {offsets = [6, 0], sizes = [1, 32], strides = [1, 1]} : vector<14x32xf32> to vector<1x32xf32>
    %95 = vector.extract_strided_slice %90 {offsets = [8, 0], sizes = [1, 32], strides = [1, 1]} : vector<14x32xf32> to vector<1x32xf32>
    %96 = vector.extract_strided_slice %90 {offsets = [10, 0], sizes = [1, 32], strides = [1, 1]} : vector<14x32xf32> to vector<1x32xf32>
    %97 = vector.extract_strided_slice %90 {offsets = [12, 0], sizes = [1, 32], strides = [1, 1]} : vector<14x32xf32> to vector<1x32xf32>
    %98 = tpu.concatenate %91, %92, %93, %94, %95, %96, %97 in 0 : vector<1x32xf32>, vector<1x32xf32>, vector<1x32xf32>, vector<1x32xf32>, vector<1x32xf32>, vector<1x32xf32>, vector<1x32xf32> -> vector<7x32xf32>
    %c21 = arith.constant 21 : index
    %c0_31 = arith.constant 0 : index
    %99 = vector.load %arg2[%c21, %c0_31] : memref<98x32xf32, #tpu.memory_space<vmem>>, vector<7x32xf32>
    tpu.vector_store %arg2[%c21, %c0_31], %98 {strides = array<i32>} : memref<98x32xf32, #tpu.memory_space<vmem>>, vector<7x32xf32>,
    %c128_32 = arith.constant 128 : index
    %c0_33 = arith.constant 0 : index
    %100 = vector.load %arg3[%c128_32, %c0_33] : memref<512x32xf32, #tpu.memory_space<vmem>>, vector<16x32xf32>
    %c144 = arith.constant 144 : index
    %c0_34 = arith.constant 0 : index
    %101 = vector.load %arg3[%c144, %c0_34] : memref<512x32xf32, #tpu.memory_space<vmem>>, vector<16x32xf32>
    %102 = arith.maximumf %100, %101 : vector<16x32xf32>
    %c160 = arith.constant 160 : index
    %c0_35 = arith.constant 0 : index
    %103 = vector.load %arg3[%c160, %c0_35] : memref<512x32xf32, #tpu.memory_space<vmem>>, vector<16x32xf32>
    %104 = arith.maximumf %102, %103 : vector<16x32xf32>
    %105 = vector.extract_strided_slice %104 {offsets = [0, 0], sizes = [14, 32], strides = [1, 1]} : vector<16x32xf32> to vector<14x32xf32>
    %106 = vector.extract_strided_slice %104 {offsets = [1, 0], sizes = [14, 32], strides = [1, 1]} : vector<16x32xf32> to vector<14x32xf32>
    %107 = arith.maximumf %105, %106 : vector<14x32xf32>
    %108 = vector.extract_strided_slice %104 {offsets = [2, 0], sizes = [14, 32], strides = [1, 1]} : vector<16x32xf32> to vector<14x32xf32>
    %109 = arith.maximumf %107, %108 : vector<14x32xf32>
    %110 = vector.extract_strided_slice %109 {offsets = [0, 0], sizes = [1, 32], strides = [1, 1]} : vector<14x32xf32> to vector<1x32xf32>
    %111 = vector.extract_strided_slice %109 {offsets = [2, 0], sizes = [1, 32], strides = [1, 1]} : vector<14x32xf32> to vector<1x32xf32>
    %112 = vector.extract_strided_slice %109 {offsets = [4, 0], sizes = [1, 32], strides = [1, 1]} : vector<14x32xf32> to vector<1x32xf32>
    %113 = vector.extract_strided_slice %109 {offsets = [6, 0], sizes = [1, 32], strides = [1, 1]} : vector<14x32xf32> to vector<1x32xf32>
    %114 = vector.extract_strided_slice %109 {offsets = [8, 0], sizes = [1, 32], strides = [1, 1]} : vector<14x32xf32> to vector<1x32xf32>
    %115 = vector.extract_strided_slice %109 {offsets = [10, 0], sizes = [1, 32], strides = [1, 1]} : vector<14x32xf32> to vector<1x32xf32>
    %116 = vector.extract_strided_slice %109 {offsets = [12, 0], sizes = [1, 32], strides = [1, 1]} : vector<14x32xf32> to vector<1x32xf32>
    %117 = tpu.concatenate %110, %111, %112, %113, %114, %115, %116 in 0 : vector<1x32xf32>, vector<1x32xf32>, vector<1x32xf32>, vector<1x32xf32>, vector<1x32xf32>, vector<1x32xf32>, vector<1x32xf32> -> vector<7x32xf32>
    %c28 = arith.constant 28 : index
    %c0_36 = arith.constant 0 : index
    %118 = vector.load %arg2[%c28, %c0_36] : memref<98x32xf32, #tpu.memory_space<vmem>>, vector<7x32xf32>
    tpu.vector_store %arg2[%c28, %c0_36], %117 {strides = array<i32>} : memref<98x32xf32, #tpu.memory_space<vmem>>, vector<7x32xf32>,
    %c160_37 = arith.constant 160 : index
    %c0_38 = arith.constant 0 : index
    %119 = vector.load %arg3[%c160_37, %c0_38] : memref<512x32xf32, #tpu.memory_space<vmem>>, vector<16x32xf32>
    %c176 = arith.constant 176 : index
    %c0_39 = arith.constant 0 : index
    %120 = vector.load %arg3[%c176, %c0_39] : memref<512x32xf32, #tpu.memory_space<vmem>>, vector<16x32xf32>
    %121 = arith.maximumf %119, %120 : vector<16x32xf32>
    %c192 = arith.constant 192 : index
    %c0_40 = arith.constant 0 : index
    %122 = vector.load %arg3[%c192, %c0_40] : memref<512x32xf32, #tpu.memory_space<vmem>>, vector<16x32xf32>
    %123 = arith.maximumf %121, %122 : vector<16x32xf32>
    %124 = vector.extract_strided_slice %123 {offsets = [0, 0], sizes = [14, 32], strides = [1, 1]} : vector<16x32xf32> to vector<14x32xf32>
    %125 = vector.extract_strided_slice %123 {offsets = [1, 0], sizes = [14, 32], strides = [1, 1]} : vector<16x32xf32> to vector<14x32xf32>
    %126 = arith.maximumf %124, %125 : vector<14x32xf32>
    %127 = vector.extract_strided_slice %123 {offsets = [2, 0], sizes = [14, 32], strides = [1, 1]} : vector<16x32xf32> to vector<14x32xf32>
    %128 = arith.maximumf %126, %127 : vector<14x32xf32>
    %129 = vector.extract_strided_slice %128 {offsets = [0, 0], sizes = [1, 32], strides = [1, 1]} : vector<14x32xf32> to vector<1x32xf32>
    %130 = vector.extract_strided_slice %128 {offsets = [2, 0], sizes = [1, 32], strides = [1, 1]} : vector<14x32xf32> to vector<1x32xf32>
    %131 = vector.extract_strided_slice %128 {offsets = [4, 0], sizes = [1, 32], strides = [1, 1]} : vector<14x32xf32> to vector<1x32xf32>
    %132 = vector.extract_strided_slice %128 {offsets = [6, 0], sizes = [1, 32], strides = [1, 1]} : vector<14x32xf32> to vector<1x32xf32>
    %133 = vector.extract_strided_slice %128 {offsets = [8, 0], sizes = [1, 32], strides = [1, 1]} : vector<14x32xf32> to vector<1x32xf32>
    %134 = vector.extract_strided_slice %128 {offsets = [10, 0], sizes = [1, 32], strides = [1, 1]} : vector<14x32xf32> to vector<1x32xf32>
    %135 = vector.extract_strided_slice %128 {offsets = [12, 0], sizes = [1, 32], strides = [1, 1]} : vector<14x32xf32> to vector<1x32xf32>
    %136 = tpu.concatenate %129, %130, %131, %132, %133, %134, %135 in 0 : vector<1x32xf32>, vector<1x32xf32>, vector<1x32xf32>, vector<1x32xf32>, vector<1x32xf32>, vector<1x32xf32>, vector<1x32xf32> -> vector<7x32xf32>
    %c35 = arith.constant 35 : index
    %c0_41 = arith.constant 0 : index
    %137 = vector.load %arg2[%c35, %c0_41] : memref<98x32xf32, #tpu.memory_space<vmem>>, vector<7x32xf32>
    tpu.vector_store %arg2[%c35, %c0_41], %136 {strides = array<i32>} : memref<98x32xf32, #tpu.memory_space<vmem>>, vector<7x32xf32>,
    %c192_42 = arith.constant 192 : index
    %c0_43 = arith.constant 0 : index
    %138 = vector.load %arg3[%c192_42, %c0_43] : memref<512x32xf32, #tpu.memory_space<vmem>>, vector<16x32xf32>
    %c208 = arith.constant 208 : index
    %c0_44 = arith.constant 0 : index
    %139 = vector.load %arg3[%c208, %c0_44] : memref<512x32xf32, #tpu.memory_space<vmem>>, vector<16x32xf32>
    %140 = arith.maximumf %138, %139 : vector<16x32xf32>
    %c224 = arith.constant 224 : index
    %c0_45 = arith.constant 0 : index
    %141 = vector.load %arg3[%c224, %c0_45] : memref<512x32xf32, #tpu.memory_space<vmem>>, vector<16x32xf32>
    %142 = arith.maximumf %140, %141 : vector<16x32xf32>
    %143 = vector.extract_strided_slice %142 {offsets = [0, 0], sizes = [14, 32], strides = [1, 1]} : vector<16x32xf32> to vector<14x32xf32>
    %144 = vector.extract_strided_slice %142 {offsets = [1, 0], sizes = [14, 32], strides = [1, 1]} : vector<16x32xf32> to vector<14x32xf32>
    %145 = arith.maximumf %143, %144 : vector<14x32xf32>
    %146 = vector.extract_strided_slice %142 {offsets = [2, 0], sizes = [14, 32], strides = [1, 1]} : vector<16x32xf32> to vector<14x32xf32>
    %147 = arith.maximumf %145, %146 : vector<14x32xf32>
    %148 = vector.extract_strided_slice %147 {offsets = [0, 0], sizes = [1, 32], strides = [1, 1]} : vector<14x32xf32> to vector<1x32xf32>
    %149 = vector.extract_strided_slice %147 {offsets = [2, 0], sizes = [1, 32], strides = [1, 1]} : vector<14x32xf32> to vector<1x32xf32>
    %150 = vector.extract_strided_slice %147 {offsets = [4, 0], sizes = [1, 32], strides = [1, 1]} : vector<14x32xf32> to vector<1x32xf32>
    %151 = vector.extract_strided_slice %147 {offsets = [6, 0], sizes = [1, 32], strides = [1, 1]} : vector<14x32xf32> to vector<1x32xf32>
    %152 = vector.extract_strided_slice %147 {offsets = [8, 0], sizes = [1, 32], strides = [1, 1]} : vector<14x32xf32> to vector<1x32xf32>
    %153 = vector.extract_strided_slice %147 {offsets = [10, 0], sizes = [1, 32], strides = [1, 1]} : vector<14x32xf32> to vector<1x32xf32>
    %154 = vector.extract_strided_slice %147 {offsets = [12, 0], sizes = [1, 32], strides = [1, 1]} : vector<14x32xf32> to vector<1x32xf32>
    %155 = tpu.concatenate %148, %149, %150, %151, %152, %153, %154 in 0 : vector<1x32xf32>, vector<1x32xf32>, vector<1x32xf32>, vector<1x32xf32>, vector<1x32xf32>, vector<1x32xf32>, vector<1x32xf32> -> vector<7x32xf32>
    %c42 = arith.constant 42 : index
    %c0_46 = arith.constant 0 : index
    %156 = vector.load %arg2[%c42, %c0_46] : memref<98x32xf32, #tpu.memory_space<vmem>>, vector<7x32xf32>
    tpu.vector_store %arg2[%c42, %c0_46], %155 {strides = array<i32>} : memref<98x32xf32, #tpu.memory_space<vmem>>, vector<7x32xf32>,
    %c256 = arith.constant 256 : index
    %c0_47 = arith.constant 0 : index
    %157 = vector.load %arg3[%c256, %c0_47] : memref<512x32xf32, #tpu.memory_space<vmem>>, vector<16x32xf32>
    %c272 = arith.constant 272 : index
    %c0_48 = arith.constant 0 : index
    %158 = vector.load %arg3[%c272, %c0_48] : memref<512x32xf32, #tpu.memory_space<vmem>>, vector<16x32xf32>
    %159 = arith.maximumf %157, %158 : vector<16x32xf32>
    %c288 = arith.constant 288 : index
    %c0_49 = arith.constant 0 : index
    %160 = vector.load %arg3[%c288, %c0_49] : memref<512x32xf32, #tpu.memory_space<vmem>>, vector<16x32xf32>
    %161 = arith.maximumf %159, %160 : vector<16x32xf32>
    %162 = vector.extract_strided_slice %161 {offsets = [0, 0], sizes = [14, 32], strides = [1, 1]} : vector<16x32xf32> to vector<14x32xf32>
    %163 = vector.extract_strided_slice %161 {offsets = [1, 0], sizes = [14, 32], strides = [1, 1]} : vector<16x32xf32> to vector<14x32xf32>
    %164 = arith.maximumf %162, %163 : vector<14x32xf32>
    %165 = vector.extract_strided_slice %161 {offsets = [2, 0], sizes = [14, 32], strides = [1, 1]} : vector<16x32xf32> to vector<14x32xf32>
    %166 = arith.maximumf %164, %165 : vector<14x32xf32>
    %167 = vector.extract_strided_slice %166 {offsets = [0, 0], sizes = [1, 32], strides = [1, 1]} : vector<14x32xf32> to vector<1x32xf32>
    %168 = vector.extract_strided_slice %166 {offsets = [2, 0], sizes = [1, 32], strides = [1, 1]} : vector<14x32xf32> to vector<1x32xf32>
    %169 = vector.extract_strided_slice %166 {offsets = [4, 0], sizes = [1, 32], strides = [1, 1]} : vector<14x32xf32> to vector<1x32xf32>
    %170 = vector.extract_strided_slice %166 {offsets = [6, 0], sizes = [1, 32], strides = [1, 1]} : vector<14x32xf32> to vector<1x32xf32>
    %171 = vector.extract_strided_slice %166 {offsets = [8, 0], sizes = [1, 32], strides = [1, 1]} : vector<14x32xf32> to vector<1x32xf32>
    %172 = vector.extract_strided_slice %166 {offsets = [10, 0], sizes = [1, 32], strides = [1, 1]} : vector<14x32xf32> to vector<1x32xf32>
    %173 = vector.extract_strided_slice %166 {offsets = [12, 0], sizes = [1, 32], strides = [1, 1]} : vector<14x32xf32> to vector<1x32xf32>
    %174 = tpu.concatenate %167, %168, %169, %170, %171, %172, %173 in 0 : vector<1x32xf32>, vector<1x32xf32>, vector<1x32xf32>, vector<1x32xf32>, vector<1x32xf32>, vector<1x32xf32>, vector<1x32xf32> -> vector<7x32xf32>
    %c49 = arith.constant 49 : index
    %c0_50 = arith.constant 0 : index
    %175 = vector.load %arg2[%c49, %c0_50] : memref<98x32xf32, #tpu.memory_space<vmem>>, vector<7x32xf32>
    tpu.vector_store %arg2[%c49, %c0_50], %174 {strides = array<i32>} : memref<98x32xf32, #tpu.memory_space<vmem>>, vector<7x32xf32>,
    %c288_51 = arith.constant 288 : index
    %c0_52 = arith.constant 0 : index
    %176 = vector.load %arg3[%c288_51, %c0_52] : memref<512x32xf32, #tpu.memory_space<vmem>>, vector<16x32xf32>
    %c304 = arith.constant 304 : index
    %c0_53 = arith.constant 0 : index
    %177 = vector.load %arg3[%c304, %c0_53] : memref<512x32xf32, #tpu.memory_space<vmem>>, vector<16x32xf32>
    %178 = arith.maximumf %176, %177 : vector<16x32xf32>
    %c320 = arith.constant 320 : index
    %c0_54 = arith.constant 0 : index
    %179 = vector.load %arg3[%c320, %c0_54] : memref<512x32xf32, #tpu.memory_space<vmem>>, vector<16x32xf32>
    %180 = arith.maximumf %178, %179 : vector<16x32xf32>
    %181 = vector.extract_strided_slice %180 {offsets = [0, 0], sizes = [14, 32], strides = [1, 1]} : vector<16x32xf32> to vector<14x32xf32>
    %182 = vector.extract_strided_slice %180 {offsets = [1, 0], sizes = [14, 32], strides = [1, 1]} : vector<16x32xf32> to vector<14x32xf32>
    %183 = arith.maximumf %181, %182 : vector<14x32xf32>
    %184 = vector.extract_strided_slice %180 {offsets = [2, 0], sizes = [14, 32], strides = [1, 1]} : vector<16x32xf32> to vector<14x32xf32>
    %185 = arith.maximumf %183, %184 : vector<14x32xf32>
    %186 = vector.extract_strided_slice %185 {offsets = [0, 0], sizes = [1, 32], strides = [1, 1]} : vector<14x32xf32> to vector<1x32xf32>
    %187 = vector.extract_strided_slice %185 {offsets = [2, 0], sizes = [1, 32], strides = [1, 1]} : vector<14x32xf32> to vector<1x32xf32>
    %188 = vector.extract_strided_slice %185 {offsets = [4, 0], sizes = [1, 32], strides = [1, 1]} : vector<14x32xf32> to vector<1x32xf32>
    %189 = vector.extract_strided_slice %185 {offsets = [6, 0], sizes = [1, 32], strides = [1, 1]} : vector<14x32xf32> to vector<1x32xf32>
    %190 = vector.extract_strided_slice %185 {offsets = [8, 0], sizes = [1, 32], strides = [1, 1]} : vector<14x32xf32> to vector<1x32xf32>
    %191 = vector.extract_strided_slice %185 {offsets = [10, 0], sizes = [1, 32], strides = [1, 1]} : vector<14x32xf32> to vector<1x32xf32>
    %192 = vector.extract_strided_slice %185 {offsets = [12, 0], sizes = [1, 32], strides = [1, 1]} : vector<14x32xf32> to vector<1x32xf32>
    %193 = tpu.concatenate %186, %187, %188, %189, %190, %191, %192 in 0 : vector<1x32xf32>, vector<1x32xf32>, vector<1x32xf32>, vector<1x32xf32>, vector<1x32xf32>, vector<1x32xf32>, vector<1x32xf32> -> vector<7x32xf32>
    %c56 = arith.constant 56 : index
    %c0_55 = arith.constant 0 : index
    %194 = vector.load %arg2[%c56, %c0_55] : memref<98x32xf32, #tpu.memory_space<vmem>>, vector<7x32xf32>
    tpu.vector_store %arg2[%c56, %c0_55], %193 {strides = array<i32>} : memref<98x32xf32, #tpu.memory_space<vmem>>, vector<7x32xf32>,
    %c320_56 = arith.constant 320 : index
    %c0_57 = arith.constant 0 : index
    %195 = vector.load %arg3[%c320_56, %c0_57] : memref<512x32xf32, #tpu.memory_space<vmem>>, vector<16x32xf32>
    %c336 = arith.constant 336 : index
    %c0_58 = arith.constant 0 : index
    %196 = vector.load %arg3[%c336, %c0_58] : memref<512x32xf32, #tpu.memory_space<vmem>>, vector<16x32xf32>
    %197 = arith.maximumf %195, %196 : vector<16x32xf32>
    %c352 = arith.constant 352 : index
    %c0_59 = arith.constant 0 : index
    %198 = vector.load %arg3[%c352, %c0_59] : memref<512x32xf32, #tpu.memory_space<vmem>>, vector<16x32xf32>
    %199 = arith.maximumf %197, %198 : vector<16x32xf32>
    %200 = vector.extract_strided_slice %199 {offsets = [0, 0], sizes = [14, 32], strides = [1, 1]} : vector<16x32xf32> to vector<14x32xf32>
    %201 = vector.extract_strided_slice %199 {offsets = [1, 0], sizes = [14, 32], strides = [1, 1]} : vector<16x32xf32> to vector<14x32xf32>
    %202 = arith.maximumf %200, %201 : vector<14x32xf32>
    %203 = vector.extract_strided_slice %199 {offsets = [2, 0], sizes = [14, 32], strides = [1, 1]} : vector<16x32xf32> to vector<14x32xf32>
    %204 = arith.maximumf %202, %203 : vector<14x32xf32>
    %205 = vector.extract_strided_slice %204 {offsets = [0, 0], sizes = [1, 32], strides = [1, 1]} : vector<14x32xf32> to vector<1x32xf32>
    %206 = vector.extract_strided_slice %204 {offsets = [2, 0], sizes = [1, 32], strides = [1, 1]} : vector<14x32xf32> to vector<1x32xf32>
    %207 = vector.extract_strided_slice %204 {offsets = [4, 0], sizes = [1, 32], strides = [1, 1]} : vector<14x32xf32> to vector<1x32xf32>
    %208 = vector.extract_strided_slice %204 {offsets = [6, 0], sizes = [1, 32], strides = [1, 1]} : vector<14x32xf32> to vector<1x32xf32>
    %209 = vector.extract_strided_slice %204 {offsets = [8, 0], sizes = [1, 32], strides = [1, 1]} : vector<14x32xf32> to vector<1x32xf32>
    %210 = vector.extract_strided_slice %204 {offsets = [10, 0], sizes = [1, 32], strides = [1, 1]} : vector<14x32xf32> to vector<1x32xf32>
    %211 = vector.extract_strided_slice %204 {offsets = [12, 0], sizes = [1, 32], strides = [1, 1]} : vector<14x32xf32> to vector<1x32xf32>
    %212 = tpu.concatenate %205, %206, %207, %208, %209, %210, %211 in 0 : vector<1x32xf32>, vector<1x32xf32>, vector<1x32xf32>, vector<1x32xf32>, vector<1x32xf32>, vector<1x32xf32>, vector<1x32xf32> -> vector<7x32xf32>
    %c63 = arith.constant 63 : index
    %c0_60 = arith.constant 0 : index
    %213 = vector.load %arg2[%c63, %c0_60] : memref<98x32xf32, #tpu.memory_space<vmem>>, vector<7x32xf32>
    tpu.vector_store %arg2[%c63, %c0_60], %212 {strides = array<i32>} : memref<98x32xf32, #tpu.memory_space<vmem>>, vector<7x32xf32>,
    %c352_61 = arith.constant 352 : index
    %c0_62 = arith.constant 0 : index
    %214 = vector.load %arg3[%c352_61, %c0_62] : memref<512x32xf32, #tpu.memory_space<vmem>>, vector<16x32xf32>
    %c368 = arith.constant 368 : index
    %c0_63 = arith.constant 0 : index
    %215 = vector.load %arg3[%c368, %c0_63] : memref<512x32xf32, #tpu.memory_space<vmem>>, vector<16x32xf32>
    %216 = arith.maximumf %214, %215 : vector<16x32xf32>
    %c384 = arith.constant 384 : index
    %c0_64 = arith.constant 0 : index
    %217 = vector.load %arg3[%c384, %c0_64] : memref<512x32xf32, #tpu.memory_space<vmem>>, vector<16x32xf32>
    %218 = arith.maximumf %216, %217 : vector<16x32xf32>
    %219 = vector.extract_strided_slice %218 {offsets = [0, 0], sizes = [14, 32], strides = [1, 1]} : vector<16x32xf32> to vector<14x32xf32>
    %220 = vector.extract_strided_slice %218 {offsets = [1, 0], sizes = [14, 32], strides = [1, 1]} : vector<16x32xf32> to vector<14x32xf32>
    %221 = arith.maximumf %219, %220 : vector<14x32xf32>
    %222 = vector.extract_strided_slice %218 {offsets = [2, 0], sizes = [14, 32], strides = [1, 1]} : vector<16x32xf32> to vector<14x32xf32>
    %223 = arith.maximumf %221, %222 : vector<14x32xf32>
    %224 = vector.extract_strided_slice %223 {offsets = [0, 0], sizes = [1, 32], strides = [1, 1]} : vector<14x32xf32> to vector<1x32xf32>
    %225 = vector.extract_strided_slice %223 {offsets = [2, 0], sizes = [1, 32], strides = [1, 1]} : vector<14x32xf32> to vector<1x32xf32>
    %226 = vector.extract_strided_slice %223 {offsets = [4, 0], sizes = [1, 32], strides = [1, 1]} : vector<14x32xf32> to vector<1x32xf32>
    %227 = vector.extract_strided_slice %223 {offsets = [6, 0], sizes = [1, 32], strides = [1, 1]} : vector<14x32xf32> to vector<1x32xf32>
    %228 = vector.extract_strided_slice %223 {offsets = [8, 0], sizes = [1, 32], strides = [1, 1]} : vector<14x32xf32> to vector<1x32xf32>
    %229 = vector.extract_strided_slice %223 {offsets = [10, 0], sizes = [1, 32], strides = [1, 1]} : vector<14x32xf32> to vector<1x32xf32>
    %230 = vector.extract_strided_slice %223 {offsets = [12, 0], sizes = [1, 32], strides = [1, 1]} : vector<14x32xf32> to vector<1x32xf32>
    %231 = tpu.concatenate %224, %225, %226, %227, %228, %229, %230 in 0 : vector<1x32xf32>, vector<1x32xf32>, vector<1x32xf32>, vector<1x32xf32>, vector<1x32xf32>, vector<1x32xf32>, vector<1x32xf32> -> vector<7x32xf32>
    %c70 = arith.constant 70 : index
    %c0_65 = arith.constant 0 : index
    %232 = vector.load %arg2[%c70, %c0_65] : memref<98x32xf32, #tpu.memory_space<vmem>>, vector<7x32xf32>
    tpu.vector_store %arg2[%c70, %c0_65], %231 {strides = array<i32>} : memref<98x32xf32, #tpu.memory_space<vmem>>, vector<7x32xf32>,
    %c384_66 = arith.constant 384 : index
    %c0_67 = arith.constant 0 : index
    %233 = vector.load %arg3[%c384_66, %c0_67] : memref<512x32xf32, #tpu.memory_space<vmem>>, vector<16x32xf32>
    %c400 = arith.constant 400 : index
    %c0_68 = arith.constant 0 : index
    %234 = vector.load %arg3[%c400, %c0_68] : memref<512x32xf32, #tpu.memory_space<vmem>>, vector<16x32xf32>
    %235 = arith.maximumf %233, %234 : vector<16x32xf32>
    %c416 = arith.constant 416 : index
    %c0_69 = arith.constant 0 : index
    %236 = vector.load %arg3[%c416, %c0_69] : memref<512x32xf32, #tpu.memory_space<vmem>>, vector<16x32xf32>
    %237 = arith.maximumf %235, %236 : vector<16x32xf32>
    %238 = vector.extract_strided_slice %237 {offsets = [0, 0], sizes = [14, 32], strides = [1, 1]} : vector<16x32xf32> to vector<14x32xf32>
    %239 = vector.extract_strided_slice %237 {offsets = [1, 0], sizes = [14, 32], strides = [1, 1]} : vector<16x32xf32> to vector<14x32xf32>
    %240 = arith.maximumf %238, %239 : vector<14x32xf32>
    %241 = vector.extract_strided_slice %237 {offsets = [2, 0], sizes = [14, 32], strides = [1, 1]} : vector<16x32xf32> to vector<14x32xf32>
    %242 = arith.maximumf %240, %241 : vector<14x32xf32>
    %243 = vector.extract_strided_slice %242 {offsets = [0, 0], sizes = [1, 32], strides = [1, 1]} : vector<14x32xf32> to vector<1x32xf32>
    %244 = vector.extract_strided_slice %242 {offsets = [2, 0], sizes = [1, 32], strides = [1, 1]} : vector<14x32xf32> to vector<1x32xf32>
    %245 = vector.extract_strided_slice %242 {offsets = [4, 0], sizes = [1, 32], strides = [1, 1]} : vector<14x32xf32> to vector<1x32xf32>
    %246 = vector.extract_strided_slice %242 {offsets = [6, 0], sizes = [1, 32], strides = [1, 1]} : vector<14x32xf32> to vector<1x32xf32>
    %247 = vector.extract_strided_slice %242 {offsets = [8, 0], sizes = [1, 32], strides = [1, 1]} : vector<14x32xf32> to vector<1x32xf32>
    %248 = vector.extract_strided_slice %242 {offsets = [10, 0], sizes = [1, 32], strides = [1, 1]} : vector<14x32xf32> to vector<1x32xf32>
    %249 = vector.extract_strided_slice %242 {offsets = [12, 0], sizes = [1, 32], strides = [1, 1]} : vector<14x32xf32> to vector<1x32xf32>
    %250 = tpu.concatenate %243, %244, %245, %246, %247, %248, %249 in 0 : vector<1x32xf32>, vector<1x32xf32>, vector<1x32xf32>, vector<1x32xf32>, vector<1x32xf32>, vector<1x32xf32>, vector<1x32xf32> -> vector<7x32xf32>
    %c77 = arith.constant 77 : index
    %c0_70 = arith.constant 0 : index
    %251 = vector.load %arg2[%c77, %c0_70] : memref<98x32xf32, #tpu.memory_space<vmem>>, vector<7x32xf32>
    tpu.vector_store %arg2[%c77, %c0_70], %250 {strides = array<i32>} : memref<98x32xf32, #tpu.memory_space<vmem>>, vector<7x32xf32>,
    %c416_71 = arith.constant 416 : index
    %c0_72 = arith.constant 0 : index
    %252 = vector.load %arg3[%c416_71, %c0_72] : memref<512x32xf32, #tpu.memory_space<vmem>>, vector<16x32xf32>
    %c432 = arith.constant 432 : index
    %c0_73 = arith.constant 0 : index
    %253 = vector.load %arg3[%c432, %c0_73] : memref<512x32xf32, #tpu.memory_space<vmem>>, vector<16x32xf32>
    %254 = arith.maximumf %252, %253 : vector<16x32xf32>
    %c448 = arith.constant 448 : index
    %c0_74 = arith.constant 0 : index
    %255 = vector.load %arg3[%c448, %c0_74] : memref<512x32xf32, #tpu.memory_space<vmem>>, vector<16x32xf32>
    %256 = arith.maximumf %254, %255 : vector<16x32xf32>
    %257 = vector.extract_strided_slice %256 {offsets = [0, 0], sizes = [14, 32], strides = [1, 1]} : vector<16x32xf32> to vector<14x32xf32>
    %258 = vector.extract_strided_slice %256 {offsets = [1, 0], sizes = [14, 32], strides = [1, 1]} : vector<16x32xf32> to vector<14x32xf32>
    %259 = arith.maximumf %257, %258 : vector<14x32xf32>
    %260 = vector.extract_strided_slice %256 {offsets = [2, 0], sizes = [14, 32], strides = [1, 1]} : vector<16x32xf32> to vector<14x32xf32>
    %261 = arith.maximumf %259, %260 : vector<14x32xf32>
    %262 = vector.extract_strided_slice %261 {offsets = [0, 0], sizes = [1, 32], strides = [1, 1]} : vector<14x32xf32> to vector<1x32xf32>
    %263 = vector.extract_strided_slice %261 {offsets = [2, 0], sizes = [1, 32], strides = [1, 1]} : vector<14x32xf32> to vector<1x32xf32>
    %264 = vector.extract_strided_slice %261 {offsets = [4, 0], sizes = [1, 32], strides = [1, 1]} : vector<14x32xf32> to vector<1x32xf32>
    %265 = vector.extract_strided_slice %261 {offsets = [6, 0], sizes = [1, 32], strides = [1, 1]} : vector<14x32xf32> to vector<1x32xf32>
    %266 = vector.extract_strided_slice %261 {offsets = [8, 0], sizes = [1, 32], strides = [1, 1]} : vector<14x32xf32> to vector<1x32xf32>
    %267 = vector.extract_strided_slice %261 {offsets = [10, 0], sizes = [1, 32], strides = [1, 1]} : vector<14x32xf32> to vector<1x32xf32>
    %268 = vector.extract_strided_slice %261 {offsets = [12, 0], sizes = [1, 32], strides = [1, 1]} : vector<14x32xf32> to vector<1x32xf32>
    %269 = tpu.concatenate %262, %263, %264, %265, %266, %267, %268 in 0 : vector<1x32xf32>, vector<1x32xf32>, vector<1x32xf32>, vector<1x32xf32>, vector<1x32xf32>, vector<1x32xf32>, vector<1x32xf32> -> vector<7x32xf32>
    %c84 = arith.constant 84 : index
    %c0_75 = arith.constant 0 : index
    %270 = vector.load %arg2[%c84, %c0_75] : memref<98x32xf32, #tpu.memory_space<vmem>>, vector<7x32xf32>
    tpu.vector_store %arg2[%c84, %c0_75], %269 {strides = array<i32>} : memref<98x32xf32, #tpu.memory_space<vmem>>, vector<7x32xf32>,
    %c448_76 = arith.constant 448 : index
    %c0_77 = arith.constant 0 : index
    %271 = vector.load %arg3[%c448_76, %c0_77] : memref<512x32xf32, #tpu.memory_space<vmem>>, vector<16x32xf32>
    %c464 = arith.constant 464 : index
    %c0_78 = arith.constant 0 : index
    %272 = vector.load %arg3[%c464, %c0_78] : memref<512x32xf32, #tpu.memory_space<vmem>>, vector<16x32xf32>
    %273 = arith.maximumf %271, %272 : vector<16x32xf32>
    %c480 = arith.constant 480 : index
    %c0_79 = arith.constant 0 : index
    %274 = vector.load %arg3[%c480, %c0_79] : memref<512x32xf32, #tpu.memory_space<vmem>>, vector<16x32xf32>
    %275 = arith.maximumf %273, %274 : vector<16x32xf32>
    %276 = vector.extract_strided_slice %275 {offsets = [0, 0], sizes = [14, 32], strides = [1, 1]} : vector<16x32xf32> to vector<14x32xf32>
    %277 = vector.extract_strided_slice %275 {offsets = [1, 0], sizes = [14, 32], strides = [1, 1]} : vector<16x32xf32> to vector<14x32xf32>
    %278 = arith.maximumf %276, %277 : vector<14x32xf32>
    %279 = vector.extract_strided_slice %275 {offsets = [2, 0], sizes = [14, 32], strides = [1, 1]} : vector<16x32xf32> to vector<14x32xf32>
    %280 = arith.maximumf %278, %279 : vector<14x32xf32>
    %281 = vector.extract_strided_slice %280 {offsets = [0, 0], sizes = [1, 32], strides = [1, 1]} : vector<14x32xf32> to vector<1x32xf32>
    %282 = vector.extract_strided_slice %280 {offsets = [2, 0], sizes = [1, 32], strides = [1, 1]} : vector<14x32xf32> to vector<1x32xf32>
    %283 = vector.extract_strided_slice %280 {offsets = [4, 0], sizes = [1, 32], strides = [1, 1]} : vector<14x32xf32> to vector<1x32xf32>
    %284 = vector.extract_strided_slice %280 {offsets = [6, 0], sizes = [1, 32], strides = [1, 1]} : vector<14x32xf32> to vector<1x32xf32>
    %285 = vector.extract_strided_slice %280 {offsets = [8, 0], sizes = [1, 32], strides = [1, 1]} : vector<14x32xf32> to vector<1x32xf32>
    %286 = vector.extract_strided_slice %280 {offsets = [10, 0], sizes = [1, 32], strides = [1, 1]} : vector<14x32xf32> to vector<1x32xf32>
    %287 = vector.extract_strided_slice %280 {offsets = [12, 0], sizes = [1, 32], strides = [1, 1]} : vector<14x32xf32> to vector<1x32xf32>
    %288 = tpu.concatenate %281, %282, %283, %284, %285, %286, %287 in 0 : vector<1x32xf32>, vector<1x32xf32>, vector<1x32xf32>, vector<1x32xf32>, vector<1x32xf32>, vector<1x32xf32>, vector<1x32xf32> -> vector<7x32xf32>
    %c91 = arith.constant 91 : index
    %c0_80 = arith.constant 0 : index
    %289 = vector.load %arg2[%c91, %c0_80] : memref<98x32xf32, #tpu.memory_space<vmem>>, vector<7x32xf32>
    tpu.vector_store %arg2[%c91, %c0_80], %288 {strides = array<i32>} : memref<98x32xf32, #tpu.memory_space<vmem>>, vector<7x32xf32>,
    return
  }
}

module attributes {stable_mosaic.version = 11 : i64} {
  func.func @_conv_stage_kernel(%arg0: memref<50x288xf32, #tpu.memory_space<vmem>>, %arg1: memref<288x64xf32, #tpu.memory_space<vmem>>, %arg2: memref<8x64xf32, #tpu.memory_space<vmem>>, %arg3: memref<50x64xf32, #tpu.memory_space<vmem>>) attributes {dimension_semantics = [], scalar_prefetch = 0 : i64, scratch_operands = 1 : i64, tpu.core_type = #tpu.core_type<tc>} {
    %c0 = arith.constant 0 : index
    %c0_0 = arith.constant 0 : index
    %0 = vector.load %arg0[%c0, %c0_0] : memref<50x288xf32, #tpu.memory_space<vmem>>, vector<50x288xf32>
    %c0_1 = arith.constant 0 : index
    %c0_2 = arith.constant 0 : index
    %1 = vector.load %arg1[%c0_1, %c0_2] : memref<288x64xf32, #tpu.memory_space<vmem>>, vector<288x64xf32>
    %cst = arith.constant dense<0.000000e+00> : vector<50x64xf32>
    %2 = tpu.matmul %0, %1, %cst {dimension_numbers = #tpu.dot_dimension_numbers<[1], [0], [0], [1], [0, 0, 1, 1], [], []>} : vector<50x288xf32>, vector<288x64xf32>, vector<50x64xf32> -> vector<50x64xf32>
    %cst_3 = arith.constant dense<0.000000e+00> : vector<64xf32>
    %3 = vector.multi_reduction <add>, %2, %cst_3 [0] : vector<50x64xf32> to vector<64xf32>
    %4 = vector.shape_cast %3 : vector<64xf32> to vector<1x64xf32>
    %cst_4 = arith.constant 2.000000e-02 : f32
    %5 = vector.broadcast %cst_4 : f32 to vector<1x64xf32>
    %6 = arith.mulf %4, %5 : vector<1x64xf32>
    %7 = arith.mulf %2, %2 : vector<50x64xf32>
    %cst_5 = arith.constant dense<0.000000e+00> : vector<64xf32>
    %8 = vector.multi_reduction <add>, %7, %cst_5 [0] : vector<50x64xf32> to vector<64xf32>
    %9 = vector.shape_cast %8 : vector<64xf32> to vector<1x64xf32>
    %cst_6 = arith.constant 2.000000e-02 : f32
    %10 = vector.broadcast %cst_6 : f32 to vector<1x64xf32>
    %11 = arith.mulf %9, %10 : vector<1x64xf32>
    %12 = arith.mulf %6, %6 : vector<1x64xf32>
    %13 = arith.subf %11, %12 : vector<1x64xf32>
    %cst_7 = arith.constant 9.99999974E-6 : f32
    %14 = vector.broadcast %cst_7 : f32 to vector<1x64xf32>
    %15 = arith.addf %13, %14 : vector<1x64xf32>
    %16 = math.rsqrt %15 : vector<1x64xf32>
    %17 = vector.broadcast %6 : vector<1x64xf32> to vector<50x64xf32>
    %18 = arith.subf %2, %17 : vector<50x64xf32>
    %19 = vector.broadcast %16 : vector<1x64xf32> to vector<50x64xf32>
    %20 = arith.mulf %18, %19 : vector<50x64xf32>
    %cst_8 = arith.constant 0.000000e+00 : f32
    %21 = vector.broadcast %cst_8 : f32 to vector<50x64xf32>
    %22 = arith.maximumf %20, %21 : vector<50x64xf32>
    %c0_9 = arith.constant 0 : index
    %c0_10 = arith.constant 0 : index
    %23 = vector.load %arg3[%c0_9, %c0_10] : memref<50x64xf32, #tpu.memory_space<vmem>>, vector<50x64xf32>
    tpu.vector_store %arg3[%c0_9, %c0_10], %22 {strides = array<i32>} : memref<50x64xf32, #tpu.memory_space<vmem>>, vector<50x64xf32>,
    %c0_11 = arith.constant 0 : index
    %c0_12 = arith.constant 0 : index
    %24 = vector.load %arg3[%c0_11, %c0_12] : memref<50x64xf32, #tpu.memory_space<vmem>>, vector<5x64xf32>
    %c5 = arith.constant 5 : index
    %c0_13 = arith.constant 0 : index
    %25 = vector.load %arg3[%c5, %c0_13] : memref<50x64xf32, #tpu.memory_space<vmem>>, vector<5x64xf32>
    %26 = arith.maximumf %24, %25 : vector<5x64xf32>
    %c10 = arith.constant 10 : index
    %c0_14 = arith.constant 0 : index
    %27 = vector.load %arg3[%c10, %c0_14] : memref<50x64xf32, #tpu.memory_space<vmem>>, vector<5x64xf32>
    %28 = arith.maximumf %26, %27 : vector<5x64xf32>
    %29 = vector.extract_strided_slice %28 {offsets = [0, 0], sizes = [3, 64], strides = [1, 1]} : vector<5x64xf32> to vector<3x64xf32>
    %30 = vector.extract_strided_slice %28 {offsets = [1, 0], sizes = [3, 64], strides = [1, 1]} : vector<5x64xf32> to vector<3x64xf32>
    %31 = arith.maximumf %29, %30 : vector<3x64xf32>
    %32 = vector.extract_strided_slice %28 {offsets = [2, 0], sizes = [3, 64], strides = [1, 1]} : vector<5x64xf32> to vector<3x64xf32>
    %33 = arith.maximumf %31, %32 : vector<3x64xf32>
    %34 = vector.extract_strided_slice %33 {offsets = [0, 0], sizes = [1, 64], strides = [1, 1]} : vector<3x64xf32> to vector<1x64xf32>
    %35 = vector.extract_strided_slice %33 {offsets = [2, 0], sizes = [1, 64], strides = [1, 1]} : vector<3x64xf32> to vector<1x64xf32>
    %36 = tpu.concatenate %34, %35 in 0 : vector<1x64xf32>, vector<1x64xf32> -> vector<2x64xf32>
    %c0_15 = arith.constant 0 : index
    %c0_16 = arith.constant 0 : index
    %37 = vector.load %arg2[%c0_15, %c0_16] : memref<8x64xf32, #tpu.memory_space<vmem>>, vector<2x64xf32>
    tpu.vector_store %arg2[%c0_15, %c0_16], %36 {strides = array<i32>} : memref<8x64xf32, #tpu.memory_space<vmem>>, vector<2x64xf32>,
    %c10_17 = arith.constant 10 : index
    %c0_18 = arith.constant 0 : index
    %38 = vector.load %arg3[%c10_17, %c0_18] : memref<50x64xf32, #tpu.memory_space<vmem>>, vector<5x64xf32>
    %c15 = arith.constant 15 : index
    %c0_19 = arith.constant 0 : index
    %39 = vector.load %arg3[%c15, %c0_19] : memref<50x64xf32, #tpu.memory_space<vmem>>, vector<5x64xf32>
    %40 = arith.maximumf %38, %39 : vector<5x64xf32>
    %c20 = arith.constant 20 : index
    %c0_20 = arith.constant 0 : index
    %41 = vector.load %arg3[%c20, %c0_20] : memref<50x64xf32, #tpu.memory_space<vmem>>, vector<5x64xf32>
    %42 = arith.maximumf %40, %41 : vector<5x64xf32>
    %43 = vector.extract_strided_slice %42 {offsets = [0, 0], sizes = [3, 64], strides = [1, 1]} : vector<5x64xf32> to vector<3x64xf32>
    %44 = vector.extract_strided_slice %42 {offsets = [1, 0], sizes = [3, 64], strides = [1, 1]} : vector<5x64xf32> to vector<3x64xf32>
    %45 = arith.maximumf %43, %44 : vector<3x64xf32>
    %46 = vector.extract_strided_slice %42 {offsets = [2, 0], sizes = [3, 64], strides = [1, 1]} : vector<5x64xf32> to vector<3x64xf32>
    %47 = arith.maximumf %45, %46 : vector<3x64xf32>
    %48 = vector.extract_strided_slice %47 {offsets = [0, 0], sizes = [1, 64], strides = [1, 1]} : vector<3x64xf32> to vector<1x64xf32>
    %49 = vector.extract_strided_slice %47 {offsets = [2, 0], sizes = [1, 64], strides = [1, 1]} : vector<3x64xf32> to vector<1x64xf32>
    %50 = tpu.concatenate %48, %49 in 0 : vector<1x64xf32>, vector<1x64xf32> -> vector<2x64xf32>
    %c2 = arith.constant 2 : index
    %c0_21 = arith.constant 0 : index
    %51 = vector.load %arg2[%c2, %c0_21] : memref<8x64xf32, #tpu.memory_space<vmem>>, vector<2x64xf32>
    tpu.vector_store %arg2[%c2, %c0_21], %50 {strides = array<i32>} : memref<8x64xf32, #tpu.memory_space<vmem>>, vector<2x64xf32>,
    %c25 = arith.constant 25 : index
    %c0_22 = arith.constant 0 : index
    %52 = vector.load %arg3[%c25, %c0_22] : memref<50x64xf32, #tpu.memory_space<vmem>>, vector<5x64xf32>
    %c30 = arith.constant 30 : index
    %c0_23 = arith.constant 0 : index
    %53 = vector.load %arg3[%c30, %c0_23] : memref<50x64xf32, #tpu.memory_space<vmem>>, vector<5x64xf32>
    %54 = arith.maximumf %52, %53 : vector<5x64xf32>
    %c35 = arith.constant 35 : index
    %c0_24 = arith.constant 0 : index
    %55 = vector.load %arg3[%c35, %c0_24] : memref<50x64xf32, #tpu.memory_space<vmem>>, vector<5x64xf32>
    %56 = arith.maximumf %54, %55 : vector<5x64xf32>
    %57 = vector.extract_strided_slice %56 {offsets = [0, 0], sizes = [3, 64], strides = [1, 1]} : vector<5x64xf32> to vector<3x64xf32>
    %58 = vector.extract_strided_slice %56 {offsets = [1, 0], sizes = [3, 64], strides = [1, 1]} : vector<5x64xf32> to vector<3x64xf32>
    %59 = arith.maximumf %57, %58 : vector<3x64xf32>
    %60 = vector.extract_strided_slice %56 {offsets = [2, 0], sizes = [3, 64], strides = [1, 1]} : vector<5x64xf32> to vector<3x64xf32>
    %61 = arith.maximumf %59, %60 : vector<3x64xf32>
    %62 = vector.extract_strided_slice %61 {offsets = [0, 0], sizes = [1, 64], strides = [1, 1]} : vector<3x64xf32> to vector<1x64xf32>
    %63 = vector.extract_strided_slice %61 {offsets = [2, 0], sizes = [1, 64], strides = [1, 1]} : vector<3x64xf32> to vector<1x64xf32>
    %64 = tpu.concatenate %62, %63 in 0 : vector<1x64xf32>, vector<1x64xf32> -> vector<2x64xf32>
    %c4 = arith.constant 4 : index
    %c0_25 = arith.constant 0 : index
    %65 = vector.load %arg2[%c4, %c0_25] : memref<8x64xf32, #tpu.memory_space<vmem>>, vector<2x64xf32>
    tpu.vector_store %arg2[%c4, %c0_25], %64 {strides = array<i32>} : memref<8x64xf32, #tpu.memory_space<vmem>>, vector<2x64xf32>,
    %c35_26 = arith.constant 35 : index
    %c0_27 = arith.constant 0 : index
    %66 = vector.load %arg3[%c35_26, %c0_27] : memref<50x64xf32, #tpu.memory_space<vmem>>, vector<5x64xf32>
    %c40 = arith.constant 40 : index
    %c0_28 = arith.constant 0 : index
    %67 = vector.load %arg3[%c40, %c0_28] : memref<50x64xf32, #tpu.memory_space<vmem>>, vector<5x64xf32>
    %68 = arith.maximumf %66, %67 : vector<5x64xf32>
    %c45 = arith.constant 45 : index
    %c0_29 = arith.constant 0 : index
    %69 = vector.load %arg3[%c45, %c0_29] : memref<50x64xf32, #tpu.memory_space<vmem>>, vector<5x64xf32>
    %70 = arith.maximumf %68, %69 : vector<5x64xf32>
    %71 = vector.extract_strided_slice %70 {offsets = [0, 0], sizes = [3, 64], strides = [1, 1]} : vector<5x64xf32> to vector<3x64xf32>
    %72 = vector.extract_strided_slice %70 {offsets = [1, 0], sizes = [3, 64], strides = [1, 1]} : vector<5x64xf32> to vector<3x64xf32>
    %73 = arith.maximumf %71, %72 : vector<3x64xf32>
    %74 = vector.extract_strided_slice %70 {offsets = [2, 0], sizes = [3, 64], strides = [1, 1]} : vector<5x64xf32> to vector<3x64xf32>
    %75 = arith.maximumf %73, %74 : vector<3x64xf32>
    %76 = vector.extract_strided_slice %75 {offsets = [0, 0], sizes = [1, 64], strides = [1, 1]} : vector<3x64xf32> to vector<1x64xf32>
    %77 = vector.extract_strided_slice %75 {offsets = [2, 0], sizes = [1, 64], strides = [1, 1]} : vector<3x64xf32> to vector<1x64xf32>
    %78 = tpu.concatenate %76, %77 in 0 : vector<1x64xf32>, vector<1x64xf32> -> vector<2x64xf32>
    %c6 = arith.constant 6 : index
    %c0_30 = arith.constant 0 : index
    %79 = vector.load %arg2[%c6, %c0_30] : memref<8x64xf32, #tpu.memory_space<vmem>>, vector<2x64xf32>
    tpu.vector_store %arg2[%c6, %c0_30], %78 {strides = array<i32>} : memref<8x64xf32, #tpu.memory_space<vmem>>, vector<2x64xf32>,
    return
  }
}

module attributes {stable_mosaic.version = 11 : i64} {
  func.func @_head_mask_kernel(%arg0: memref<2x256xf32, #tpu.memory_space<vmem>>, %arg1: memref<256x4xf32, #tpu.memory_space<vmem>>, %arg2: memref<1x4xf32, #tpu.memory_space<vmem>>, %arg3: memref<2x1024xf32, #tpu.memory_space<vmem>>) attributes {dimension_semantics = [], scalar_prefetch = 0 : i64, scratch_operands = 0 : i64, tpu.core_type = #tpu.core_type<tc>} {
    %c0 = arith.constant 0 : index
    %c0_0 = arith.constant 0 : index
    %0 = vector.load %arg0[%c0, %c0_0] : memref<2x256xf32, #tpu.memory_space<vmem>>, vector<2x256xf32>
    %c0_1 = arith.constant 0 : index
    %c0_2 = arith.constant 0 : index
    %1 = vector.load %arg1[%c0_1, %c0_2] : memref<256x4xf32, #tpu.memory_space<vmem>>, vector<256x4xf32>
    %cst = arith.constant dense<0.000000e+00> : vector<2x4xf32>
    %2 = tpu.matmul %0, %1, %cst {dimension_numbers = #tpu.dot_dimension_numbers<[1], [0], [0], [1], [0, 0, 1, 1], [], []>} : vector<2x256xf32>, vector<256x4xf32>, vector<2x4xf32> -> vector<2x4xf32>
    %c0_3 = arith.constant 0 : index
    %c0_4 = arith.constant 0 : index
    %3 = vector.load %arg2[%c0_3, %c0_4] : memref<1x4xf32, #tpu.memory_space<vmem>>, vector<1x4xf32>
    %4 = vector.broadcast %3 : vector<1x4xf32> to vector<2x4xf32>
    %5 = arith.addf %2, %4 : vector<2x4xf32>
    %6 = vector.extract_strided_slice %5 {offsets = [0, 0], sizes = [2, 2], strides = [1, 1]} : vector<2x4xf32> to vector<2x2xf32>
    %7 = math.tanh %6 : vector<2x2xf32>
    %cst_5 = arith.constant 1.600000e+01 : f32
    %8 = vector.broadcast %cst_5 : f32 to vector<2x2xf32>
    %9 = arith.mulf %8, %7 : vector<2x2xf32>
    %cst_6 = arith.constant 1.600000e+01 : f32
    %10 = vector.broadcast %cst_6 : f32 to vector<2x2xf32>
    %11 = arith.addf %10, %9 : vector<2x2xf32>
    %12 = vector.extract_strided_slice %5 {offsets = [0, 2], sizes = [2, 2], strides = [1, 1]} : vector<2x4xf32> to vector<2x2xf32>
    %13 = arith.negf %12 : vector<2x2xf32>
    %14 = math.exp %13 : vector<2x2xf32>
    %cst_7 = arith.constant 1.000000e+00 : f32
    %15 = vector.broadcast %cst_7 : f32 to vector<2x2xf32>
    %16 = arith.addf %15, %14 : vector<2x2xf32>
    %17 = arith.divf %15, %16 : vector<2x2xf32>
    %cst_8 = arith.constant 1.000000e+01 : f32
    %18 = vector.broadcast %cst_8 : f32 to vector<2x2xf32>
    %19 = arith.mulf %18, %17 : vector<2x2xf32>
    %cst_9 = arith.constant 2.000000e+00 : f32
    %20 = vector.broadcast %cst_9 : f32 to vector<2x2xf32>
    %21 = arith.addf %20, %19 : vector<2x2xf32>
    %cst_10 = arith.constant 2.000000e+00 : f32
    %22 = vector.broadcast %cst_10 : f32 to vector<2x2xf32>
    %23 = arith.mulf %22, %21 : vector<2x2xf32>
    %24 = arith.mulf %23, %21 : vector<2x2xf32>
    %cst_11 = arith.constant 1.000000e+00 : f32
    %25 = vector.broadcast %cst_11 : f32 to vector<2x2xf32>
    %26 = arith.divf %25, %24 : vector<2x2xf32>
    %27 = vector.extract_strided_slice %11 {offsets = [0, 0], sizes = [2, 1], strides = [1, 1]} : vector<2x2xf32> to vector<2x1xf32>
    %28 = vector.extract_strided_slice %11 {offsets = [0, 1], sizes = [2, 1], strides = [1, 1]} : vector<2x2xf32> to vector<2x1xf32>
    %29 = vector.extract_strided_slice %26 {offsets = [0, 0], sizes = [2, 1], strides = [1, 1]} : vector<2x2xf32> to vector<2x1xf32>
    %30 = vector.extract_strided_slice %26 {offsets = [0, 1], sizes = [2, 1], strides = [1, 1]} : vector<2x2xf32> to vector<2x1xf32>
    %31 = tpu.iota {dimensions = array<i32: 1>} : vector<2x1024xi32>
    %32 = arith.sitofp %31 : vector<2x1024xi32> to vector<2x1024xf32>
    %cst_12 = arith.constant 5.000000e-01 : f32
    %33 = vector.broadcast %cst_12 : f32 to vector<2x1024xf32>
    %34 = arith.addf %32, %33 : vector<2x1024xf32>
    %cst_13 = arith.constant 3.125000e-02 : f32
    %35 = vector.broadcast %cst_13 : f32 to vector<2x1024xf32>
    %36 = arith.mulf %34, %35 : vector<2x1024xf32>
    %37 = math.floor %36 : vector<2x1024xf32>
    %cst_14 = arith.constant 3.200000e+01 : f32
    %38 = vector.broadcast %cst_14 : f32 to vector<2x1024xf32>
    %39 = arith.mulf %37, %38 : vector<2x1024xf32>
    %40 = arith.subf %32, %39 : vector<2x1024xf32>
    %41 = vector.broadcast %27 : vector<2x1xf32> to vector<2x1024xf32>
    %42 = arith.subf %41, %37 : vector<2x1024xf32>
    %43 = arith.mulf %42, %42 : vector<2x1024xf32>
    %44 = vector.broadcast %29 : vector<2x1xf32> to vector<2x1024xf32>
    %45 = arith.mulf %43, %44 : vector<2x1024xf32>
    %46 = vector.broadcast %28 : vector<2x1xf32> to vector<2x1024xf32>
    %47 = arith.subf %46, %40 : vector<2x1024xf32>
    %48 = arith.mulf %47, %47 : vector<2x1024xf32>
    %49 = vector.broadcast %30 : vector<2x1xf32> to vector<2x1024xf32>
    %50 = arith.mulf %48, %49 : vector<2x1024xf32>
    %51 = arith.addf %45, %50 : vector<2x1024xf32>
    %cst_15 = arith.constant 0.000000e+00 : f32
    %52 = vector.broadcast %cst_15 : f32 to vector<2x1024xf32>
    %53 = arith.subf %52, %51 : vector<2x1024xf32>
    %54 = math.exp %53 : vector<2x1024xf32>
    %cst_16 = arith.constant 5.000000e-01 : f32
    %55 = vector.broadcast %cst_16 : f32 to vector<2x1024xf32>
    %56 = arith.addf %55, %54 : vector<2x1024xf32>
    %c0_17 = arith.constant 0 : index
    %c0_18 = arith.constant 0 : index
    %57 = vector.load %arg3[%c0_17, %c0_18] : memref<2x1024xf32, #tpu.memory_space<vmem>>, vector<2x1024xf32>
    tpu.vector_store %arg3[%c0_17, %c0_18], %56 {strides = array<i32>} : memref<2x1024xf32, #tpu.memory_space<vmem>>, vector<2x1024xf32>,
    return
  }
}

</mosaic_0001>

<llo_original>
// kernel: cbr_teacher_forward.4
$region0: #{cbr_teacher_forward.4}
  #allocation0 [shape = 'u32[]', space=smem, size = 0x4, offset = 0x4, fixed_abs, tag = 'smem constant byte address 0x4 - core index']
  #allocation1 [shape = 'u32[144,128]{1,0:T(1,128)}', space=vmem, size = 0x12000, scoped, tag = 'internal scratch']
  #allocation2 [shape = 'f32[50,64]{1,0:T(8,128)}', space=vmem, size = 0x7000, scoped, tag = 'scratch operand']
  %s0 = inlined_call_operand.vmem [shape: f32[50,288], index: 0, kind: input, shape index: {}]
  %s1 = inlined_call_operand.vmem [shape: f32[288,64], index: 1, kind: input, shape index: {}]
  %s2 = inlined_call_operand.vmem [shape: f32[8,64], index: 2, kind: output, shape index: {}]
  %s3 = sld [smem:[#allocation0]]
  $region18: #{cbr_teacher_forward.4} parent=0
    _
  %s5 = ssub.s32 1, %s3
  %s6 = scalar_select 0, %s5, %s3
  // Predicated region
  $region2: #{cbr_teacher_forward.4} parent=0 // pred_check
    _
  $region3: #{cbr_teacher_forward.4} parent=0 // pred_check_branch
    %8 = sbr.rel (0) target = $region5
  $region4: #{cbr_teacher_forward.4} parent=0 // pred_region
    _
  $region5: #{cbr_teacher_forward.4} parent=0 // pred_fallthru
    _
  // Predicated region
  $region6: #{cbr_teacher_forward.4} parent=0 // pred_check
    _
  $region7: #{cbr_teacher_forward.4} parent=0 // pred_check_branch
    %10 = sbr.rel (0) target = $region9
  $region8: #{cbr_teacher_forward.4} parent=0 // pred_region
    _
  $region9: #{cbr_teacher_forward.4} parent=0 // pred_fallthru
    _
  %v11 = vld [vmem:[%s0] sm:$0xff]
  %v12 = vld [vmem:[%s0 + $0x8] sm:$0xff]
  %v13 = vld [vmem:[%s0 + $0x10] sm:$0xff]
  %v14 = vld [vmem:[%s0 + $0x18] sm:$0xff]
  %v15 = vld [vmem:[%s0 + $0x20] sm:$0xff]
  %v16 = vld [vmem:[%s0 + $0x28] sm:$0xff]
  %v17 = vld [vmem:[%s0 + $0x30] sm:$0xff]
  %v18 = vld [vmem:[%s0 + $0x38] sm:$0xff]
  %v19 = vld [vmem:[%s0 + $0x40] sm:$0xff]
  %v20 = vld [vmem:[%s0 + $0x48] sm:$0xff]
  %v21 = vld [vmem:[%s0 + $0x50] sm:$0xff]
  %v22 = vld [vmem:[%s0 + $0x58] sm:$0xff]
  %v23 = vld [vmem:[%s0 + $0x60] sm:$0xff]
  %v24 = vld [vmem:[%s0 + $0x68] sm:$0xff]
  %v25 = vld [vmem:[%s0 + $0x70] sm:$0xff]
  %v26 = vld [vmem:[%s0 + $0x78] sm:$0xff]
  %v27 = vld [vmem:[%s0 + $0x80] sm:$0xff]
  %v28 = vld [vmem:[%s0 + $0x88] sm:$0xff]
  %v29 = vld [vmem:[%s0 + $0x90] sm:$0x3]
  %v30 = vld [vmem:[%s0 + $0x98] sm:$0x3]
  %v31 = vld [vmem:[%s0 + $0xa0] sm:$0x3]
  %v32 = vld [vmem:[%s1] sm:$0xff]
  %v33 = vld [vmem:[%s1 + $0x8] sm:$0xff]
  %v34 = vld [vmem:[%s1 + $0x10] sm:$0xff]
  %v35 = vld [vmem:[%s1 + $0x18] sm:$0xff]
  %v36 = vld [vmem:[%s1 + $0x20] sm:$0xff]
  %v37 = vld [vmem:[%s1 + $0x28] sm:$0xff]
  %v38 = vld [vmem:[%s1 + $0x30] sm:$0xff]
  %v39 = vld [vmem:[%s1 + $0x38] sm:$0xff]
  %v40 = vld [vmem:[%s1 + $0x40] sm:$0xff]
  %v41 = vld [vmem:[%s1 + $0x48] sm:$0xff]
  %v42 = vld [vmem:[%s1 + $0x50] sm:$0xff]
  %v43 = vld [vmem:[%s1 + $0x58] sm:$0xff]
  %v44 = vld [vmem:[%s1 + $0x60] sm:$0xff]
  %v45 = vld [vmem:[%s1 + $0x68] sm:$0xff]
  %v46 = vld [vmem:[%s1 + $0x70] sm:$0xff]
  %v47 = vld [vmem:[%s1 + $0x78] sm:$0xff]
  %v48 = vld [vmem:[%s1 + $0x80] sm:$0xff]
  %v49 = vld [vmem:[%s1 + $0x88] sm:$0xff]
  %v50 = vld [vmem:[%s1 + $0x90] sm:$0xff]
  %v51 = vld [vmem:[%s1 + $0x98] sm:$0xff]
  %v52 = vld [vmem:[%s1 + $0xa0] sm:$0xff]
  %v53 = vld [vmem:[%s1 + $0xa8] sm:$0xff]
  %v54 = vld [vmem:[%s1 + $0xb0] sm:$0xff]
  %v55 = vld [vmem:[%s1 + $0xb8] sm:$0xff]
  %v56 = vld [vmem:[%s1 + $0xc0] sm:$0xff]
  %v57 = vld [vmem:[%s1 + $0xc8] sm:$0xff]
  %v58 = vld [vmem:[%s1 + $0xd0] sm:$0xff]
  %v59 = vld [vmem:[%s1 + $0xd8] sm:$0xff]
  %v60 = vld [vmem:[%s1 + $0xe0] sm:$0xff]
  %v61 = vld [vmem:[%s1 + $0xe8] sm:$0xff]
  %v62 = vld [vmem:[%s1 + $0xf0] sm:$0xff]
  %v63 = vld [vmem:[%s1 + $0xf8] sm:$0xff]
  %v64 = vld [vmem:[%s1 + $0x100] sm:$0xff]
  %v65 = vld [vmem:[%s1 + $0x108] sm:$0xff]
  %v66 = vld [vmem:[%s1 + $0x110] sm:$0xff]
  %v67 = vld [vmem:[%s1 + $0x118] sm:$0xff]
  %vm68 = vcmask 261120
  %v70 = vsel %vm68, %v13, 0
  %v73 = vsel %vm68, %v16, 0
  %v76 = vsel %vm68, %v19, 0
  %v79 = vsel %vm68, %v22, 0
  %v82 = vsel %vm68, %v25, 0
  %v85 = vsel %vm68, %v28, 0
  %v88 = vsel %vm68, %v31, 0
  %90 = vmatprep.subr.mxu0 0.0
  %91 = vmatpush1.msra.mxu0 %v47
  %92 = vmatprep.subr.mxu0 0.0
  %93 = vmatpush1.msra.mxu0 %v46
  %94 = vmatprep.subr.mxu0 0.0
  %95 = vmatpush1.msra.mxu0 %v45
  %96 = vmatprep.subr.mxu0 0.0
  %97 = vmatpush1.msra.mxu0 %v44
  %98 = vmatprep.subr.mxu0 0.0
  %99 = vmatpush1.msra.mxu0 %v43
  %100 = vmatprep.subr.mxu0 0.0
  %101 = vmatpush1.msra.mxu0 %v42
  %102 = vmatprep.subr.mxu0 0.0
  %103 = vmatpush1.msra.mxu0 %v41
  %104 = vmatprep.subr.mxu0 0.0
  %105 = vmatpush1.msra.mxu0 %v40
  %106 = vmatprep.subr.mxu0 0.0
  %107 = vmatpush1.msra.mxu0 %v39
  %108 = vmatprep.subr.mxu0 0.0
  %109 = vmatpush1.msra.mxu0 %v38
  %110 = vmatprep.subr.mxu0 0.0
  %111 = vmatpush1.msra.mxu0 %v37
  %112 = vmatprep.subr.mxu0 0.0
  %113 = vmatpush1.msra.mxu0 %v36
  %114 = vmatprep.subr.mxu0 0.0
  %115 = vmatpush1.msra.mxu0 %v35
  %116 = vmatprep.subr.mxu0 0.0
  %117 = vmatpush1.msra.mxu0 %v34
  %118 = vmatprep.subr.mxu0 0.0
  %119 = vmatpush1.msra.mxu0 %v33
  %120 = vmatprep.subr.mxu0 0.0
  %121 = vmatpush1.msra.mxu0 %v32
  %122 = vmatprep.subr.mxu0 0.0
  %123 = vmatpush2.msra.mxu0 %v63
  %124 = vmatprep.subr.mxu0 0.0
  %125 = vmatpush2.msra.mxu0 %v62
  %126 = vmatprep.subr.mxu0 0.0
  %127 = vmatpush2.msra.mxu0 %v61
  %128 = vmatprep.subr.mxu0 0.0
  %129 = vmatpush2.msra.mxu0 %v60
  %130 = vmatprep.subr.mxu0 0.0
  %131 = vmatpush2.msra.mxu0 %v59
  %132 = vmatprep.subr.mxu0 0.0
  %133 = vmatpush2.msra.mxu0 %v58
  %134 = vmatprep.subr.mxu0 0.0
  %135 = vmatpush2.msra.mxu0 %v57
  %136 = vmatprep.subr.mxu0 0.0
  %137 = vmatpush2.msra.mxu0 %v56
  %138 = vmatprep.subr.mxu0 0.0
  %139 = vmatpush2.msra.mxu0 %v55
  %140 = vmatprep.subr.mxu0 0.0
  %141 = vmatpush2.msra.mxu0 %v54
  %142 = vmatprep.subr.mxu0 0.0
  %143 = vmatpush2.msra.mxu0 %v53
  %144 = vmatprep.subr.mxu0 0.0
  %145 = vmatpush2.msra.mxu0 %v52
  %146 = vmatprep.subr.mxu0 0.0
  %147 = vmatpush2.msra.mxu0 %v51
  %148 = vmatprep.subr.mxu0 0.0
  %149 = vmatpush2.msra.mxu0 %v50
  %150 = vmatprep.subr.mxu0 0.0
  %151 = vmatpush2.msra.mxu0 %v49
  %152 = vmatprep.subr.mxu0 0.0
  %153 = vmatpush2.msra.mxu0 %v48
  %154 = vmatprep.mubr.f32.mxu0 %v12
  %155 = vmatmul.mubr.f32.gmra.mxu0 %v11
  %v156 = vpop.f32.mrf.mxu0
  %v157 = vadd.f32 0.0, %v156
  %v158 = vpop.f32.mrf.mxu0
  %159 = vmatprep.mubr.f32.mxu0 %v15
  %160 = vmatmul.mubr.f32.gmra.mxu0 %v14
  %v161 = vpop.f32.mrf.mxu0
  %v162 = vadd.f32 0.0, %v161
  %v163 = vpop.f32.mrf.mxu0
  %164 = vmatprep.mubr.f32.mxu0 %v18
  %165 = vmatmul.mubr.f32.gmra.mxu0 %v17
  %v166 = vpop.f32.mrf.mxu0
  %v167 = vadd.f32 0.0, %v166
  %v168 = vpop.f32.mrf.mxu0
  %169 = vmatprep.mubr.f32.mxu0 %v21
  %170 = vmatmul.mubr.f32.gmra.mxu0 %v20
  %v171 = vpop.f32.mrf.mxu0
  %v172 = vadd.f32 0.0, %v171
  %v173 = vpop.f32.mrf.mxu0
  %174 = vmatprep.mubr.f32.mxu0 %v24
  %175 = vmatmul.mubr.f32.gmra.mxu0 %v23
  %v176 = vpop.f32.mrf.mxu0
  %v177 = vadd.f32 0.0, %v176
  %v178 = vpop.f32.mrf.mxu0
  %179 = vmatprep.mubr.f32.mxu0 %v27
  %180 = vmatmul.mubr.f32.gmra.mxu0 %v26
  %v181 = vpop.f32.mrf.mxu0
  %v182 = vadd.f32 0.0, %v181
  %v183 = vpop.f32.mrf.mxu0
  %184 = vmatprep.mubr.f32.mxu0 %v30
  %185 = vmatmul.mubr.f32.gmra.mxu0 %v29
  %v186 = vpop.f32.mrf.mxu0
  %v187 = vadd.f32 0.0, %v186
  %v188 = vpop.f32.mrf.mxu0
  %189 = vdwg.mxu0
  %190 = vmatprep.subr.mxu0 0.0
  %191 = vmatpush1.msra.mxu0 0.0
  %192 = vmatprep.subr.mxu0 0.0
  %193 = vmatpush1.msra.mxu0 0.0
  %194 = vmatprep.subr.mxu0 0.0
  %195 = vmatpush1.msra.mxu0 0.0
  %196 = vmatprep.subr.mxu0 0.0
  %197 = vmatpush1.msra.mxu0 0.0
  %198 = vmatprep.subr.mxu0 0.0
  %199 = vmatpush1.msra.mxu0 0.0
  %200 = vmatprep.subr.mxu0 0.0
  %201 = vmatpush1.msra.mxu0 0.0
  %202 = vmatprep.subr.mxu0 0.0
  %203 = vmatpush1.msra.mxu0 0.0
  %204 = vmatprep.subr.mxu0 0.0
  %205 = vmatpush1.msra.mxu0 0.0
  %206 = vmatprep.subr.mxu0 0.0
  %207 = vmatpush1.msra.mxu0 0.0
  %208 = vmatprep.subr.mxu0 0.0
  %209 = vmatpush1.msra.mxu0 0.0
  %210 = vmatprep.subr.mxu0 0.0
  %211 = vmatpush1.msra.mxu0 0.0
  %212 = vmatprep.subr.mxu0 0.0
  %213 = vmatpush1.msra.mxu0 0.0
  %214 = vmatprep.subr.mxu0 0.0
  %215 = vmatpush1.msra.mxu0 %v67
  %216 = vmatprep.subr.mxu0 0.0
  %217 = vmatpush1.msra.mxu0 %v66
  %218 = vmatprep.subr.mxu0 0.0
  %219 = vmatpush1.msra.mxu0 %v65
  %220 = vmatprep.subr.mxu0 0.0
  %221 = vmatpush1.msra.mxu0 %v64
  %222 = vmatprep.subr.mxu0 0.0
  %223 = vmatpush2.msra.mxu0 0.0
  %224 = vmatprep.subr.mxu0 0.0
  %225 = vmatpush2.msra.mxu0 0.0
  %226 = vmatprep.subr.mxu0 0.0
  %227 = vmatpush2.msra.mxu0 0.0
  %228 = vmatprep.subr.mxu0 0.0
  %229 = vmatpush2.msra.mxu0 0.0
  %230 = vmatprep.subr.mxu0 0.0
  %231 = vmatpush2.msra.mxu0 0.0
  %232 = vmatprep.subr.mxu0 0.0
  %233 = vmatpush2.msra.mxu0 0.0
  %234 = vmatprep.subr.mxu0 0.0
  %235 = vmatpush2.msra.mxu0 0.0
  %236 = vmatprep.subr.mxu0 0.0
  %237 = vmatpush2.msra.mxu0 0.0
  %238 = vmatprep.subr.mxu0 0.0
  %239 = vmatpush2.msra.mxu0 0.0
  %240 = vmatprep.subr.mxu0 0.0
  %241 = vmatpush2.msra.mxu0 0.0
  %242 = vmatprep.subr.mxu0 0.0
  %243 = vmatpush2.msra.mxu0 0.0
  %244 = vmatprep.subr.mxu0 0.0
  %245 = vmatpush2.msra.mxu0 0.0
  %246 = vmatprep.subr.mxu0 0.0
  %247 = vmatpush2.msra.mxu0 0.0
  %248 = vmatprep.subr.mxu0 0.0
  %249 = vmatpush2.msra.mxu0 0.0
  %250 = vmatprep.subr.mxu0 0.0
  %251 = vmatpush2.msra.mxu0 0.0
  %252 = vmatprep.subr.mxu0 0.0
  %253 = vmatpush2.msra.mxu0 0.0
  %254 = vmatprep.mubr.f32.mxu0 0.0
  %255 = vmatmul.mubr.f32.gmra.mxu0 %v70
  %v256 = vpop.f32.mrf.mxu0
  %v257 = vadd.f32 %v157, %v256
  %v258 = vpop.f32.mrf.mxu0
  %259 = vmatprep.mubr.f32.mxu0 0.0
  %260 = vmatmul.mubr.f32.gmra.mxu0 %v73
  %v261 = vpop.f32.mrf.mxu0
  %v262 = vadd.f32 %v162, %v261
  %v263 = vpop.f32.mrf.mxu0
  %264 = vmatprep.mubr.f32.mxu0 0.0
  %265 = vmatmul.mubr.f32.gmra.mxu0 %v76
  %v266 = vpop.f32.mrf.mxu0
  %v267 = vadd.f32 %v167, %v266
  %v268 = vpop.f32.mrf.mxu0
  %269 = vmatprep.mubr.f32.mxu0 0.0
  %270 = vmatmul.mubr.f32.gmra.mxu0 %v79
  %v271 = vpop.f32.mrf.mxu0
  %v272 = vadd.f32 %v172, %v271
  %v273 = vpop.f32.mrf.mxu0
  %274 = vmatprep.mubr.f32.mxu0 0.0
  %275 = vmatmul.mubr.f32.gmra.mxu0 %v82
  %v276 = vpop.f32.mrf.mxu0
  %v277 = vadd.f32 %v177, %v276
  %v278 = vpop.f32.mrf.mxu0
  %279 = vmatprep.mubr.f32.mxu0 0.0
  %280 = vmatmul.mubr.f32.gmra.mxu0 %v85
  %v281 = vpop.f32.mrf.mxu0
  %v282 = vadd.f32 %v182, %v281
  %v283 = vpop.f32.mrf.mxu0
  %284 = vmatprep.mubr.f32.mxu0 0.0
  %285 = vmatmul.mubr.f32.gmra.mxu0 %v88
  %v286 = vpop.f32.mrf.mxu0
  %v287 = vadd.f32 %v187, %v286
  %v288 = vpop.f32.mrf.mxu0
  %289 = vdwg.mxu0
  %vm290 = vcmask 523264
  %v291 = vsel %vm290, %v257, 0.0
  %v292 = vsel %vm290, %v262, 0.0
  %v293 = vadd.f32 %v291, %v292
  %v294 = vsel %vm290, %v267, 0.0
  %v295 = vadd.f32 %v293, %v294
  %v296 = vsel %vm290, %v272, 0.0
  %v297 = vadd.f32 %v295, %v296
  %v298 = vsel %vm290, %v277, 0.0
  %v299 = vadd.f32 %v297, %v298
  %v300 = vsel %vm290, %v282, 0.0
  %v301 = vadd.f32 %v299, %v300
  %vm302 = vcmask 517120
  %v303 = vsel %vm302, %v287, 0.0
  %v304 = vadd.f32 %v301, %v303
  %v305 = vrot.slane %v304, 4
  %v306 = vadd.f32 %v304, %v305
  %v307 = vrot.slane %v306, 2
  %v308 = vadd.f32 %v306, %v307
  %v309 = vrot.slane %v308, 1
  %v310 = vadd.f32 %v308, %v309
  %v311 = vmul.f32 %v310, 0.02
  %v312 = vmul.f32 %v257, %v257
  %v313 = vmul.f32 %v262, %v262
  %v314 = vmul.f32 %v267, %v267
  %v315 = vmul.f32 %v272, %v272
  %v316 = vmul.f32 %v277, %v277
  %v317 = vmul.f32 %v282, %v282
  %v318 = vmul.f32 %v287, %v287
  %v319 = vsel %vm290, %v312, 0.0
  %v320 = vsel %vm290, %v313, 0.0
  %v321 = vadd.f32 %v319, %v320
  %v322 = vsel %vm290, %v314, 0.0
  %v323 = vadd.f32 %v321, %v322
  %v324 = vsel %vm290, %v315, 0.0
  %v325 = vadd.f32 %v323, %v324
  %v326 = vsel %vm290, %v316, 0.0
  %v327 = vadd.f32 %v325, %v326
  %v328 = vsel %vm290, %v317, 0.0
  %v329 = vadd.f32 %v327, %v328
  %v330 = vsel %vm302, %v318, 0.0
  %v331 = vadd.f32 %v329, %v330
  %v332 = vrot.slane %v331, 4
  %v333 = vadd.f32 %v331, %v332
  %v334 = vrot.slane %v333, 2
  %v335 = vadd.f32 %v333, %v334
  %v336 = vrot.slane %v335, 1
  %v337 = vadd.f32 %v335, %v336
  %v338 = vmul.f32 %v337, 0.02
  %v339 = vmul.f32 %v311, %v311
  %v340 = vsub.f32 %v338, %v339
  %v341 = vadd.f32 %v340, 1e-05
  %v342 = vrsqrt.pop %v341
  %v343 = vsub.f32 %v257, %v311
  %v344 = vsub.f32 %v262, %v311
  %v345 = vsub.f32 %v267, %v311
  %v346 = vsub.f32 %v272, %v311
  %v347 = vsub.f32 %v277, %v311
  %v348 = vsub.f32 %v282, %v311
  %v349 = vsub.f32 %v287, %v311
  %v350 = vmul.f32 %v343, %v342
  %v351 = vmul.f32 %v344, %v342
  %v352 = vmul.f32 %v345, %v342
  %v353 = vmul.f32 %v346, %v342
  %v354 = vmul.f32 %v347, %v342
  %v355 = vmul.f32 %v348, %v342
  %v356 = vmul.f32 %v349, %v342
  %v357 = vmax.f32 %v350, 0.0
  %v358 = vmax.f32 %v351, 0.0
  %v359 = vmax.f32 %v352, 0.0
  %v360 = vmax.f32 %v353, 0.0
  %v361 = vmax.f32 %v354, 0.0
  %v362 = vmax.f32 %v355, 0.0
  %v363 = vmax.f32 %v356, 0.0
  %364 = vst.msk [vmem:[#allocation2] sm:$0xff] %vm290, %v357
  %365 = vst.msk [vmem:[#allocation2 + $0x8] sm:$0xff] %vm290, %v358
  %366 = vst.msk [vmem:[#allocation2 + $0x10] sm:$0xff] %vm290, %v359
  %367 = vst.msk [vmem:[#allocation2 + $0x18] sm:$0xff] %vm290, %v360
  %368 = vst.msk [vmem:[#allocation2 + $0x20] sm:$0xff] %vm290, %v361
  %369 = vst.msk [vmem:[#allocation2 + $0x28] sm:$0xff] %vm290, %v362
  %370 = vst.msk [vmem:[#allocation2 + $0x30] sm:$0x3] %vm302, %v363
  %v371 = vld [vmem:[#allocation2] sm:$0x1f]
  %v372 = vld [vmem:[#allocation2 + $0x5] sm:$0x1f]
  %v373 = vmax.f32 %v371, %v372
  %v374 = vld [vmem:[#allocation2 + $0xa] sm:$0x1f]
  %v375 = vmax.f32 %v373, %v374
  %v377 = vrot.slane %v375, 1
  %v379 = vmax.f32 %v375, %v377
  %v380 = vrot.slane %v375, 2
  %v382 = vmax.f32 %v379, %v380
  %v384 = vrot.slane %v382, 1
  %vm386 = vcmask 1040384
  %v387 = vsel %vm386, %v382, %v384
  %388 = vst.msk [vmem:[%s2] sm:$0x3] %vm302, %v387
  %v389 = vld [vmem:[#allocation2 + $0xa] sm:$0x1f]
  %v390 = vld [vmem:[#allocation2 + $0xf] sm:$0x1f]
  %v391 = vmax.f32 %v389, %v390
  %v392 = vld [vmem:[#allocation2 + $0x14] sm:$0x1f]
  %v393 = vmax.f32 %v391, %v392
  %v395 = vrot.slane %v393, 1
  %v397 = vmax.f32 %v393, %v395
  %v398 = vrot.slane %v393, 2
  %v400 = vmax.f32 %v397, %v398
  %v402 = vrot.slane %v400, 1
  %v404 = vsel %vm386, %v400, %v402
  %405 = vst.msk [vmem:[%s2 + $0x2] sm:$0x3] %vm302, %v404
  %v406 = vld [vmem:[#allocation2 + $0x19] sm:$0x1f]
  %v407 = vld [vmem:[#allocation2 + $0x1e] sm:$0x1f]
  %v408 = vmax.f32 %v406, %v407
  %v409 = vld [vmem:[#allocation2 + $0x23] sm:$0x1f]
  %v410 = vmax.f32 %v408, %v409
  %v412 = vrot.slane %v410, 1
  %v414 = vmax.f32 %v410, %v412
  %v415 = vrot.slane %v410, 2
  %v417 = vmax.f32 %v414, %v415
  %v419 = vrot.slane %v417, 1
  %v421 = vsel %vm386, %v417, %v419
  %422 = vst.msk [vmem:[%s2 + $0x4] sm:$0x3] %vm302, %v421
  %v423 = vld [vmem:[#allocation2 + $0x23] sm:$0x1f]
  %v424 = vld [vmem:[#allocation2 + $0x28] sm:$0x1f]
  %v425 = vmax.f32 %v423, %v424
  %v426 = vld [vmem:[#allocation2 + $0x2d] sm:$0x1f]
  %v427 = vmax.f32 %v425, %v426
  %v429 = vrot.slane %v427, 1
  %v431 = vmax.f32 %v427, %v429
  %v432 = vrot.slane %v427, 2
  %v434 = vmax.f32 %v431, %v432
  %v436 = vrot.slane %v434, 1
  %v438 = vsel %vm386, %v434, %v436
  %439 = vst.msk [vmem:[%s2 + $0x6] sm:$0x3] %vm302, %v438
  // Predicated region
  $region10: #{cbr_teacher_forward.4} parent=0 // pred_check
    _
  $region11: #{cbr_teacher_forward.4} parent=0 // pred_check_branch
    %441 = sbr.rel (0) target = $region13
  $region12: #{cbr_teacher_forward.4} parent=0 // pred_region
    _
  $region13: #{cbr_teacher_forward.4} parent=0 // pred_fallthru
    _
  // Predicated region
  $region14: #{cbr_teacher_forward.4} parent=0 // pred_check
    _
  $region15: #{cbr_teacher_forward.4} parent=0 // pred_check_branch
    %443 = sbr.rel (0) target = $region17
  $region16: #{cbr_teacher_forward.4} parent=0 // pred_region
    _
  $region17: #{cbr_teacher_forward.4} parent=0 // pred_fallthru
    _

// kernel: cbr_teacher_forward.3
$region0: #{cbr_teacher_forward.3}
  #allocation0 [shape = 'u32[]', space=smem, size = 0x4, offset = 0x4, fixed_abs, tag = 'smem constant byte address 0x4 - core index']
  #allocation1 [shape = 'u32[144,128]{1,0:T(1,128)}', space=vmem, size = 0x12000, scoped, tag = 'internal scratch']
  #allocation2 [shape = 'f32[512,32]{1,0:T(8,128)}', space=vmem, size = 0x40000, scoped, tag = 'scratch operand']
  %s0 = inlined_call_operand.vmem [shape: f32[512,75], index: 0, kind: input, shape index: {}]
  %s1 = inlined_call_operand.vmem [shape: f32[75,32], index: 1, kind: input, shape index: {}]
  %s2 = inlined_call_operand.vmem [shape: f32[98,32], index: 2, kind: output, shape index: {}]
  %s3 = sld [smem:[#allocation0]]
  $region18: #{cbr_teacher_forward.3} parent=0
    _
  %s5 = ssub.s32 1, %s3
  %s6 = scalar_select 0, %s5, %s3
  // Predicated region
  $region2: #{cbr_teacher_forward.3} parent=0 // pred_check
    _
  $region3: #{cbr_teacher_forward.3} parent=0 // pred_check_branch
    %8 = sbr.rel (0) target = $region5
  $region4: #{cbr_teacher_forward.3} parent=0 // pred_region
    _
  $region5: #{cbr_teacher_forward.3} parent=0 // pred_fallthru
    _
  // Predicated region
  $region6: #{cbr_teacher_forward.3} parent=0 // pred_check
    _
  $region7: #{cbr_teacher_forward.3} parent=0 // pred_check_branch
    %10 = sbr.rel (0) target = $region9
  $region8: #{cbr_teacher_forward.3} parent=0 // pred_region
    _
  $region9: #{cbr_teacher_forward.3} parent=0 // pred_fallthru
    _
  %v11 = vld [vmem:[%s0] sm:$0xff]
  %v12 = vld [vmem:[%s0 + $0x8] sm:$0xff]
  %v13 = vld [vmem:[%s0 + $0x10] sm:$0xff]
  %v14 = vld [vmem:[%s0 + $0x18] sm:$0xff]
  %v15 = vld [vmem:[%s0 + $0x20] sm:$0xff]
  %v16 = vld [vmem:[%s0 + $0x28] sm:$0xff]
  %v17 = vld [vmem:[%s0 + $0x30] sm:$0xff]
  %v18 = vld [vmem:[%s0 + $0x38] sm:$0xff]
  %v19 = vld [vmem:[%s0 + $0x40] sm:$0xff]
  %v20 = vld [vmem:[%s0 + $0x48] sm:$0xff]
  %v21 = vld [vmem:[%s0 + $0x50] sm:$0xff]
  %v22 = vld [vmem:[%s0 + $0x58] sm:$0xff]
  %v23 = vld [vmem:[%s0 + $0x60] sm:$0xff]
  %v24 = vld [vmem:[%s0 + $0x68] sm:$0xff]
  %v25 = vld [vmem:[%s0 + $0x70] sm:$0xff]
  %v26 = vld [vmem:[%s0 + $0x78] sm:$0xff]
  %v27 = vld [vmem:[%s0 + $0x80] sm:$0xff]
  %v28 = vld [vmem:[%s0 + $0x88] sm:$0xff]
  %v29 = vld [vmem:[%s0 + $0x90] sm:$0xff]
  %v30 = vld [vmem:[%s0 + $0x98] sm:$0xff]
  %v31 = vld [vmem:[%s0 + $0xa0] sm:$0xff]
  %v32 = vld [vmem:[%s0 + $0xa8] sm:$0xff]
  %v33 = vld [vmem:[%s0 + $0xb0] sm:$0xff]
  %v34 = vld [vmem:[%s0 + $0xb8] sm:$0xff]
  %v35 = vld [vmem:[%s0 + $0xc0] sm:$0xff]
  %v36 = vld [vmem:[%s0 + $0xc8] sm:$0xff]
  %v37 = vld [vmem:[%s0 + $0xd0] sm:$0xff]
  %v38 = vld [vmem:[%s0 + $0xd8] sm:$0xff]
  %v39 = vld [vmem:[%s0 + $0xe0] sm:$0xff]
  %v40 = vld [vmem:[%s0 + $0xe8] sm:$0xff]
  %v41 = vld [vmem:[%s0 + $0xf0] sm:$0xff]
  %v42 = vld [vmem:[%s0 + $0xf8] sm:$0xff]
  %v43 = vld [vmem:[%s0 + $0x100] sm:$0xff]
  %v44 = vld [vmem:[%s0 + $0x108] sm:$0xff]
  %v45 = vld [vmem:[%s0 + $0x110] sm:$0xff]
  %v46 = vld [vmem:[%s0 + $0x118] sm:$0xff]
  %v47 = vld [vmem:[%s0 + $0x120] sm:$0xff]
  %v48 = vld [vmem:[%s0 + $0x128] sm:$0xff]
  %v49 = vld [vmem:[%s0 + $0x130] sm:$0xff]
  %v50 = vld [vmem:[%s0 + $0x138] sm:$0xff]
  %v51 = vld [vmem:[%s0 + $0x140] sm:$0xff]
  %v52 = vld [vmem:[%s0 + $0x148] sm:$0xff]
  %v53 = vld [vmem:[%s0 + $0x150] sm:$0xff]
  %v54 = vld [vmem:[%s0 + $0x158] sm:$0xff]
  %v55 = vld [vmem:[%s0 + $0x160] sm:$0xff]
  %v56 = vld [vmem:[%s0 + $0x168] sm:$0xff]
  %v57 = vld [vmem:[%s0 + $0x170] sm:$0xff]
  %v58 = vld [vmem:[%s0 + $0x178] sm:$0xff]
  %v59 = vld [vmem:[%s0 + $0x180] sm:$0xff]
  %v60 = vld [vmem:[%s0 + $0x188] sm:$0xff]
  %v61 = vld [vmem:[%s0 + $0x190] sm:$0xff]
  %v62 = vld [vmem:[%s0 + $0x198] sm:$0xff]
  %v63 = vld [vmem:[%s0 + $0x1a0] sm:$0xff]
  %v64 = vld [vmem:[%s0 + $0x1a8] sm:$0xff]
  %v65 = vld [vmem:[%s0 + $0x1b0] sm:$0xff]
  %v66 = vld [vmem:[%s0 + $0x1b8] sm:$0xff]
  %v67 = vld [vmem:[%s0 + $0x1c0] sm:$0xff]
  %v68 = vld [vmem:[%s0 + $0x1c8] sm:$0xff]
  %v69 = vld [vmem:[%s0 + $0x1d0] sm:$0xff]
  %v70 = vld [vmem:[%s0 + $0x1d8] sm:$0xff]
  %v71 = vld [vmem:[%s0 + $0x1e0] sm:$0xff]
  %v72 = vld [vmem:[%s0 + $0x1e8] sm:$0xff]
  %v73 = vld [vmem:[%s0 + $0x1f0] sm:$0xff]
  %v74 = vld [vmem:[%s0 + $0x1f8] sm:$0xff]
  %v75 = vld [vmem:[%s1] sm:$0xff]
  %v76 = vld [vmem:[%s1 + $0x8] sm:$0xff]
  %v77 = vld [vmem:[%s1 + $0x10] sm:$0xff]
  %v78 = vld [vmem:[%s1 + $0x18] sm:$0xff]
  %v79 = vld [vmem:[%s1 + $0x20] sm:$0xff]
  %v80 = vld [vmem:[%s1 + $0x28] sm:$0xff]
  %v81 = vld [vmem:[%s1 + $0x30] sm:$0xff]
  %v82 = vld [vmem:[%s1 + $0x38] sm:$0xff]
  %v83 = vld [vmem:[%s1 + $0x40] sm:$0xff]
  %v84 = vld [vmem:[%s1 + $0x48] sm:$0x7]
  %vm85 = vcmask 613376
  %v87 = vsel %vm85, %v11, 0
  %v90 = vsel %vm85, %v12, 0
  %v93 = vsel %vm85, %v13, 0
  %v96 = vsel %vm85, %v14, 0
  %v99 = vsel %vm85, %v15, 0
  %v102 = vsel %vm85, %v16, 0
  %v105 = vsel %vm85, %v17, 0
  %v108 = vsel %vm85, %v18, 0
  %v111 = vsel %vm85, %v19, 0
  %v114 = vsel %vm85, %v20, 0
  %v117 = vsel %vm85, %v21, 0
  %v120 = vsel %vm85, %v22, 0
  %v123 = vsel %vm85, %v23, 0
  %v126 = vsel %vm85, %v24, 0
  %v129 = vsel %vm85, %v25, 0
  %v132 = vsel %vm85, %v26, 0
  %v135 = vsel %vm85, %v27, 0
  %v138 = vsel %vm85, %v28, 0
  %v141 = vsel %vm85, %v29, 0
  %v144 = vsel %vm85, %v30, 0
  %v147 = vsel %vm85, %v31, 0
  %v150 = vsel %vm85, %v32, 0
  %v153 = vsel %vm85, %v33, 0
  %v156 = vsel %vm85, %v34, 0
  %v159 = vsel %vm85, %v35, 0
  %v162 = vsel %vm85, %v36, 0
  %v165 = vsel %vm85, %v37, 0
  %v168 = vsel %vm85, %v38, 0
  %v171 = vsel %vm85, %v39, 0
  %v174 = vsel %vm85, %v40, 0
  %v177 = vsel %vm85, %v41, 0
  %v180 = vsel %vm85, %v42, 0
  %v183 = vsel %vm85, %v43, 0
  %v186 = vsel %vm85, %v44, 0
  %v189 = vsel %vm85, %v45, 0
  %v192 = vsel %vm85, %v46, 0
  %v195 = vsel %vm85, %v47, 0
  %v198 = vsel %vm85, %v48, 0
  %v201 = vsel %vm85, %v49, 0
  %v204 = vsel %vm85, %v50, 0
  %v207 = vsel %vm85, %v51, 0
  %v210 = vsel %vm85, %v52, 0
  %v213 = vsel %vm85, %v53, 0
  %v216 = vsel %vm85, %v54, 0
  %v219 = vsel %vm85, %v55, 0
  %v222 = vsel %vm85, %v56, 0
  %v225 = vsel %vm85, %v57, 0
  %v228 = vsel %vm85, %v58, 0
  %v231 = vsel %vm85, %v59, 0
  %v234 = vsel %vm85, %v60, 0
  %v237 = vsel %vm85, %v61, 0
  %v240 = vsel %vm85, %v62, 0
  %v243 = vsel %vm85, %v63, 0
  %v246 = vsel %vm85, %v64, 0
  %v249 = vsel %vm85, %v65, 0
  %v252 = vsel %vm85, %v66, 0
  %v255 = vsel %vm85, %v67, 0
  %v258 = vsel %vm85, %v68, 0
  %v261 = vsel %vm85, %v69, 0
  %v264 = vsel %vm85, %v70, 0
  %v267 = vsel %vm85, %v71, 0
  %v270 = vsel %vm85, %v72, 0
  %v273 = vsel %vm85, %v73, 0
  %v276 = vsel %vm85, %v74, 0
  %vm278 = vcmask 1042432
  %v280 = vsel %vm278, %v84, 0
  %282 = vmatprep.subr.mxu0 0.0
  %283 = vmatpush1.msra.mxu0 0.0
  %284 = vmatprep.subr.mxu0 0.0
  %285 = vmatpush1.msra.mxu0 0.0
  %286 = vmatprep.subr.mxu0 0.0
  %287 = vmatpush1.msra.mxu0 0.0
  %288 = vmatprep.subr.mxu0 0.0
  %289 = vmatpush1.msra.mxu0 0.0
  %290 = vmatprep.subr.mxu0 0.0
  %291 = vmatpush1.msra.mxu0 0.0
  %292 = vmatprep.subr.mxu0 0.0
  %293 = vmatpush1.msra.mxu0 0.0
  %294 = vmatprep.subr.mxu0 0.0
  %295 = vmatpush1.msra.mxu0 %v280
  %296 = vmatprep.subr.mxu0 0.0
  %297 = vmatpush1.msra.mxu0 %v83
  %298 = vmatprep.subr.mxu0 0.0
  %299 = vmatpush1.msra.mxu0 %v82
  %300 = vmatprep.subr.mxu0 0.0
  %301 = vmatpush1.msra.mxu0 %v81
  %302 = vmatprep.subr.mxu0 0.0
  %303 = vmatpush1.msra.mxu0 %v80
  %304 = vmatprep.subr.mxu0 0.0
  %305 = vmatpush1.msra.mxu0 %v79
  %306 = vmatprep.subr.mxu0 0.0
  %307 = vmatpush1.msra.mxu0 %v78
  %308 = vmatprep.subr.mxu0 0.0
  %309 = vmatpush1.msra.mxu0 %v77
  %310 = vmatprep.subr.mxu0 0.0
  %311 = vmatpush1.msra.mxu0 %v76
  %312 = vmatprep.subr.mxu0 0.0
  %313 = vmatpush1.msra.mxu0 %v75
  %314 = vmatprep.subr.mxu0 0.0
  %315 = vmatpush2.msra.mxu0 0.0
  %316 = vmatprep.subr.mxu0 0.0
  %317 = vmatpush2.msra.mxu0 0.0
  %318 = vmatprep.subr.mxu0 0.0
  %319 = vmatpush2.msra.mxu0 0.0
  %320 = vmatprep.subr.mxu0 0.0
  %321 = vmatpush2.msra.mxu0 0.0
  %322 = vmatprep.subr.mxu0 0.0
  %323 = vmatpush2.msra.mxu0 0.0
  %324 = vmatprep.subr.mxu0 0.0
  %325 = vmatpush2.msra.mxu0 0.0
  %326 = vmatprep.subr.mxu0 0.0
  %327 = vmatpush2.msra.mxu0 0.0
  %328 = vmatprep.subr.mxu0 0.0
  %329 = vmatpush2.msra.mxu0 0.0
  %330 = vmatprep.subr.mxu0 0.0
  %331 = vmatpush2.msra.mxu0 0.0
  %332 = vmatprep.subr.mxu0 0.0
  %333 = vmatpush2.msra.mxu0 0.0
  %334 = vmatprep.subr.mxu0 0.0
  %335 = vmatpush2.msra.mxu0 0.0
  %336 = vmatprep.subr.mxu0 0.0
  %337 = vmatpush2.msra.mxu0 0.0
  %338 = vmatprep.subr.mxu0 0.0
  %339 = vmatpush2.msra.mxu0 0.0
  %340 = vmatprep.subr.mxu0 0.0
  %341 = vmatpush2.msra.mxu0 0.0
  %342 = vmatprep.subr.mxu0 0.0
  %343 = vmatpush2.msra.mxu0 0.0
  %344 = vmatprep.subr.mxu0 0.0
  %345 = vmatpush2.msra.mxu0 0.0
  %346 = vmatprep.mubr.f32.mxu0 0.0
  %347 = vmatmul.mubr.f32.gmra.mxu0 %v87
  %v348 = vpop.f32.mrf.mxu0
  %v349 = vadd.f32 0.0, %v348
  %v350 = vpop.f32.mrf.mxu0
  %351 = vmatprep.mubr.f32.mxu0 0.0
  %352 = vmatmul.mubr.f32.gmra.mxu0 %v90
  %v353 = vpop.f32.mrf.mxu0
  %v354 = vadd.f32 0.0, %v353
  %v355 = vpop.f32.mrf.mxu0
  %356 = vmatprep.mubr.f32.mxu0 0.0
  %357 = vmatmul.mubr.f32.gmra.mxu0 %v93
  %v358 = vpop.f32.mrf.mxu0
  %v359 = vadd.f32 0.0, %v358
  %v360 = vpop.f32.mrf.mxu0
  %361 = vmatprep.mubr.f32.mxu0 0.0
  %362 = vmatmul.mubr.f32.gmra.mxu0 %v96
  %v363 = vpop.f32.mrf.mxu0
  %v364 = vadd.f32 0.0, %v363
  %v365 = vpop.f32.mrf.mxu0
  %366 = vmatprep.mubr.f32.mxu0 0.0
  %367 = vmatmul.mubr.f32.gmra.mxu0 %v99
  %v368 = vpop.f32.mrf.mxu0
  %v369 = vadd.f32 0.0, %v368
  %v370 = vpop.f32.mrf.mxu0
  %371 = vmatprep.mubr.f32.mxu0 0.0
  %372 = vmatmul.mubr.f32.gmra.mxu0 %v102
  %v373 = vpop.f32.mrf.mxu0
  %v374 = vadd.f32 0.0, %v373
  %v375 = vpop.f32.mrf.mxu0
  %376 = vmatprep.mubr.f32.mxu0 0.0
  %377 = vmatmul.mubr.f32.gmra.mxu0 %v105
  %v378 = vpop.f32.mrf.mxu0
  %v379 = vadd.f32 0.0, %v378
  %v380 = vpop.f32.mrf.mxu0
  %381 = vmatprep.mubr.f32.mxu0 0.0
  %382 = vmatmul.mubr.f32.gmra.mxu0 %v108
  %v383 = vpop.f32.mrf.mxu0
  %v384 = vadd.f32 0.0, %v383
  %v385 = vpop.f32.mrf.mxu0
  %386 = vmatprep.mubr.f32.mxu0 0.0
  %387 = vmatmul.mubr.f32.gmra.mxu0 %v111
  %v388 = vpop.f32.mrf.mxu0
  %v389 = vadd.f32 0.0, %v388
  %v390 = vpop.f32.mrf.mxu0
  %391 = vmatprep.mubr.f32.mxu0 0.0
  %392 = vmatmul.mubr.f32.gmra.mxu0 %v114
  %v393 = vpop.f32.mrf.mxu0
  %v394 = vadd.f32 0.0, %v393
  %v395 = vpop.f32.mrf.mxu0
  %396 = vmatprep.mubr.f32.mxu0 0.0
  %397 = vmatmul.mubr.f32.gmra.mxu0 %v117
  %v398 = vpop.f32.mrf.mxu0
  %v399 = vadd.f32 0.0, %v398
  %v400 = vpop.f32.mrf.mxu0
  %401 = vmatprep.mubr.f32.mxu0 0.0
  %402 = vmatmul.mubr.f32.gmra.mxu0 %v120
  %v403 = vpop.f32.mrf.mxu0
  %v404 = vadd.f32 0.0, %v403
  %v405 = vpop.f32.mrf.mxu0
  %406 = vmatprep.mubr.f32.mxu0 0.0
  %407 = vmatmul.mubr.f32.gmra.mxu0 %v123
  %v408 = vpop.f32.mrf.mxu0
  %v409 = vadd.f32 0.0, %v408
  %v410 = vpop.f32.mrf.mxu0
  %411 = vmatprep.mubr.f32.mxu0 0.0
  %412 = vmatmul.mubr.f32.gmra.mxu0 %v126
  %v413 = vpop.f32.mrf.mxu0
  %v414 = vadd.f32 0.0, %v413
  %v415 = vpop.f32.mrf.mxu0
  %416 = vmatprep.mubr.f32.mxu0 0.0
  %417 = vmatmul.mubr.f32.gmra.mxu0 %v129
  %v418 = vpop.f32.mrf.mxu0
  %v419 = vadd.f32 0.0, %v418
  %v420 = vpop.f32.mrf.mxu0
  %421 = vmatprep.mubr.f32.mxu0 0.0
  %422 = vmatmul.mubr.f32.gmra.mxu0 %v132
  %v423 = vpop.f32.mrf.mxu0
  %v424 = vadd.f32 0.0, %v423
  %v425 = vpop.f32.mrf.mxu0
  %426 = vmatprep.mubr.f32.mxu0 0.0
  %427 = vmatmul.mubr.f32.gmra.mxu0 %v135
  %v428 = vpop.f32.mrf.mxu0
  %v429 = vadd.f32 0.0, %v428
  %v430 = vpop.f32.mrf.mxu0
  %431 = vmatprep.mubr.f32.mxu0 0.0
  %432 = vmatmul.mubr.f32.gmra.mxu0 %v138
  %v433 = vpop.f32.mrf.mxu0
  %v434 = vadd.f32 0.0, %v433
  %v435 = vpop.f32.mrf.mxu0
  %436 = vmatprep.mubr.f32.mxu0 0.0
  %437 = vmatmul.mubr.f32.gmra.mxu0 %v141
  %v438 = vpop.f32.mrf.mxu0
  %v439 = vadd.f32 0.0, %v438
  %v440 = vpop.f32.mrf.mxu0
  %441 = vmatprep.mubr.f32.mxu0 0.0
  %442 = vmatmul.mubr.f32.gmra.mxu0 %v144
  %v443 = vpop.f32.mrf.mxu0
  %v444 = vadd.f32 0.0, %v443
  %v445 = vpop.f32.mrf.mxu0
  %446 = vmatprep.mubr.f32.mxu0 0.0
  %447 = vmatmul.mubr.f32.gmra.mxu0 %v147
  %v448 = vpop.f32.mrf.mxu0
  %v449 = vadd.f32 0.0, %v448
  %v450 = vpop.f32.mrf.mxu0
  %451 = vmatprep.mubr.f32.mxu0 0.0
  %452 = vmatmul.mubr.f32.gmra.mxu0 %v150
  %v453 = vpop.f32.mrf.mxu0
  %v454 = vadd.f32 0.0, %v453
  %v455 = vpop.f32.mrf.mxu0
  %456 = vmatprep.mubr.f32.mxu0 0.0
  %457 = vmatmul.mubr.f32.gmra.mxu0 %v153
  %v458 = vpop.f32.mrf.mxu0
  %v459 = vadd.f32 0.0, %v458
  %v460 = vpop.f32.mrf.mxu0
  %461 = vmatprep.mubr.f32.mxu0 0.0
  %462 = vmatmul.mubr.f32.gmra.mxu0 %v156
  %v463 = vpop.f32.mrf.mxu0
  %v464 = vadd.f32 0.0, %v463
  %v465 = vpop.f32.mrf.mxu0
  %466 = vmatprep.mubr.f32.mxu0 0.0
  %467 = vmatmul.mubr.f32.gmra.mxu0 %v159
  %v468 = vpop.f32.mrf.mxu0
  %v469 = vadd.f32 0.0, %v468
  %v470 = vpop.f32.mrf.mxu0
  %471 = vmatprep.mubr.f32.mxu0 0.0
  %472 = vmatmul.mubr.f32.gmra.mxu0 %v162
  %v473 = vpop.f32.mrf.mxu0
  %v474 = vadd.f32 0.0, %v473
  %v475 = vpop.f32.mrf.mxu0
  %476 = vmatprep.mubr.f32.mxu0 0.0
  %477 = vmatmul.mubr.f32.gmra.mxu0 %v165
  %v478 = vpop.f32.mrf.mxu0
  %v479 = vadd.f32 0.0, %v478
  %v480 = vpop.f32.mrf.mxu0
  %481 = vmatprep.mubr.f32.mxu0 0.0
  %482 = vmatmul.mubr.f32.gmra.mxu0 %v168
  %v483 = vpop.f32.mrf.mxu0
  %v484 = vadd.f32 0.0, %v483
  %v485 = vpop.f32.mrf.mxu0
  %486 = vmatprep.mubr.f32.mxu0 0.0
  %487 = vmatmul.mubr.f32.gmra.mxu0 %v171
  %v488 = vpop.f32.mrf.mxu0
  %v489 = vadd.f32 0.0, %v488
  %v490 = vpop.f32.mrf.mxu0
  %491 = vmatprep.mubr.f32.mxu0 0.0
  %492 = vmatmul.mubr.f32.gmra.mxu0 %v174
  %v493 = vpop.f32.mrf.mxu0
  %v494 = vadd.f32 0.0, %v493
  %v495 = vpop.f32.mrf.mxu0
  %496 = vmatprep.mubr.f32.mxu0 0.0
  %497 = vmatmul.mubr.f32.gmra.mxu0 %v177
  %v498 = vpop.f32.mrf.mxu0
  %v499 = vadd.f32 0.0, %v498
  %v500 = vpop.f32.mrf.mxu0
  %501 = vmatprep.mubr.f32.mxu0 0.0
  %502 = vmatmul.mubr.f32.gmra.mxu0 %v180
  %v503 = vpop.f32.mrf.mxu0
  %v504 = vadd.f32 0.0, %v503
  %v505 = vpop.f32.mrf.mxu0
  %506 = vmatprep.mubr.f32.mxu0 0.0
  %507 = vmatmul.mubr.f32.gmra.mxu0 %v183
  %v508 = vpop.f32.mrf.mxu0
  %v509 = vadd.f32 0.0, %v508
  %v510 = vpop.f32.mrf.mxu0
  %511 = vmatprep.mubr.f32.mxu0 0.0
  %512 = vmatmul.mubr.f32.gmra.mxu0 %v186
  %v513 = vpop.f32.mrf.mxu0
  %v514 = vadd.f32 0.0, %v513
  %v515 = vpop.f32.mrf.mxu0
  %516 = vmatprep.mubr.f32.mxu0 0.0
  %517 = vmatmul.mubr.f32.gmra.mxu0 %v189
  %v518 = vpop.f32.mrf.mxu0
  %v519 = vadd.f32 0.0, %v518
  %v520 = vpop.f32.mrf.mxu0
  %521 = vmatprep.mubr.f32.mxu0 0.0
  %522 = vmatmul.mubr.f32.gmra.mxu0 %v192
  %v523 = vpop.f32.mrf.mxu0
  %v524 = vadd.f32 0.0, %v523
  %v525 = vpop.f32.mrf.mxu0
  %526 = vmatprep.mubr.f32.mxu0 0.0
  %527 = vmatmul.mubr.f32.gmra.mxu0 %v195
  %v528 = vpop.f32.mrf.mxu0
  %v529 = vadd.f32 0.0, %v528
  %v530 = vpop.f32.mrf.mxu0
  %531 = vmatprep.mubr.f32.mxu0 0.0
  %532 = vmatmul.mubr.f32.gmra.mxu0 %v198
  %v533 = vpop.f32.mrf.mxu0
  %v534 = vadd.f32 0.0, %v533
  %v535 = vpop.f32.mrf.mxu0
  %536 = vmatprep.mubr.f32.mxu0 0.0
  %537 = vmatmul.mubr.f32.gmra.mxu0 %v201
  %v538 = vpop.f32.mrf.mxu0
  %v539 = vadd.f32 0.0, %v538
  %v540 = vpop.f32.mrf.mxu0
  %541 = vmatprep.mubr.f32.mxu0 0.0
  %542 = vmatmul.mubr.f32.gmra.mxu0 %v204
  %v543 = vpop.f32.mrf.mxu0
  %v544 = vadd.f32 0.0, %v543
  %v545 = vpop.f32.mrf.mxu0
  %546 = vmatprep.mubr.f32.mxu0 0.0
  %547 = vmatmul.mubr.f32.gmra.mxu0 %v207
  %v548 = vpop.f32.mrf.mxu0
  %v549 = vadd.f32 0.0, %v548
  %v550 = vpop.f32.mrf.mxu0
  %551 = vmatprep.mubr.f32.mxu0 0.0
  %552 = vmatmul.mubr.f32.gmra.mxu0 %v210
  %v553 = vpop.f32.mrf.mxu0
  %v554 = vadd.f32 0.0, %v553
  %v555 = vpop.f32.mrf.mxu0
  %556 = vmatprep.mubr.f32.mxu0 0.0
  %557 = vmatmul.mubr.f32.gmra.mxu0 %v213
  %v558 = vpop.f32.mrf.mxu0
  %v559 = vadd.f32 0.0, %v558
  %v560 = vpop.f32.mrf.mxu0
  %561 = vmatprep.mubr.f32.mxu0 0.0
  %562 = vmatmul.mubr.f32.gmra.mxu0 %v216
  %v563 = vpop.f32.mrf.mxu0
  %v564 = vadd.f32 0.0, %v563
  %v565 = vpop.f32.mrf.mxu0
  %566 = vmatprep.mubr.f32.mxu0 0.0
  %567 = vmatmul.mubr.f32.gmra.mxu0 %v219
  %v568 = vpop.f32.mrf.mxu0
  %v569 = vadd.f32 0.0, %v568
  %v570 = vpop.f32.mrf.mxu0
  %571 = vmatprep.mubr.f32.mxu0 0.0
  %572 = vmatmul.mubr.f32.gmra.mxu0 %v222
  %v573 = vpop.f32.mrf.mxu0
  %v574 = vadd.f32 0.0, %v573
  %v575 = vpop.f32.mrf.mxu0
  %576 = vmatprep.mubr.f32.mxu0 0.0
  %577 = vmatmul.mubr.f32.gmra.mxu0 %v225
  %v578 = vpop.f32.mrf.mxu0
  %v579 = vadd.f32 0.0, %v578
  %v580 = vpop.f32.mrf.mxu0
  %581 = vmatprep.mubr.f32.mxu0 0.0
  %582 = vmatmul.mubr.f32.gmra.mxu0 %v228
  %v583 = vpop.f32.mrf.mxu0
  %v584 = vadd.f32 0.0, %v583
  %v585 = vpop.f32.mrf.mxu0
  %586 = vmatprep.mubr.f32.mxu0 0.0
  %587 = vmatmul.mubr.f32.gmra.mxu0 %v231
  %v588 = vpop.f32.mrf.mxu0
  %v589 = vadd.f32 0.0, %v588
  %v590 = vpop.f32.mrf.mxu0
  %591 = vmatprep.mubr.f32.mxu0 0.0
  %592 = vmatmul.mubr.f32.gmra.mxu0 %v234
  %v593 = vpop.f32.mrf.mxu0
  %v594 = vadd.f32 0.0, %v593
  %v595 = vpop.f32.mrf.mxu0
  %596 = vmatprep.mubr.f32.mxu0 0.0
  %597 = vmatmul.mubr.f32.gmra.mxu0 %v237
  %v598 = vpop.f32.mrf.mxu0
  %v599 = vadd.f32 0.0, %v598
  %v600 = vpop.f32.mrf.mxu0
  %601 = vmatprep.mubr.f32.mxu0 0.0
  %602 = vmatmul.mubr.f32.gmra.mxu0 %v240
  %v603 = vpop.f32.mrf.mxu0
  %v604 = vadd.f32 0.0, %v603
  %v605 = vpop.f32.mrf.mxu0
  %606 = vmatprep.mubr.f32.mxu0 0.0
  %607 = vmatmul.mubr.f32.gmra.mxu0 %v243
  %v608 = vpop.f32.mrf.mxu0
  %v609 = vadd.f32 0.0, %v608
  %v610 = vpop.f32.mrf.mxu0
  %611 = vmatprep.mubr.f32.mxu0 0.0
  %612 = vmatmul.mubr.f32.gmra.mxu0 %v246
  %v613 = vpop.f32.mrf.mxu0
  %v614 = vadd.f32 0.0, %v613
  %v615 = vpop.f32.mrf.mxu0
  %616 = vmatprep.mubr.f32.mxu0 0.0
  %617 = vmatmul.mubr.f32.gmra.mxu0 %v249
  %v618 = vpop.f32.mrf.mxu0
  %v619 = vadd.f32 0.0, %v618
  %v620 = vpop.f32.mrf.mxu0
  %621 = vmatprep.mubr.f32.mxu0 0.0
  %622 = vmatmul.mubr.f32.gmra.mxu0 %v252
  %v623 = vpop.f32.mrf.mxu0
  %v624 = vadd.f32 0.0, %v623
  %v625 = vpop.f32.mrf.mxu0
  %626 = vmatprep.mubr.f32.mxu0 0.0
  %627 = vmatmul.mubr.f32.gmra.mxu0 %v255
  %v628 = vpop.f32.mrf.mxu0
  %v629 = vadd.f32 0.0, %v628
  %v630 = vpop.f32.mrf.mxu0
  %631 = vmatprep.mubr.f32.mxu0 0.0
  %632 = vmatmul.mubr.f32.gmra.mxu0 %v258
  %v633 = vpop.f32.mrf.mxu0
  %v634 = vadd.f32 0.0, %v633
  %v635 = vpop.f32.mrf.mxu0
  %636 = vmatprep.mubr.f32.mxu0 0.0
  %637 = vmatmul.mubr.f32.gmra.mxu0 %v261
  %v638 = vpop.f32.mrf.mxu0
  %v639 = vadd.f32 0.0, %v638
  %v640 = vpop.f32.mrf.mxu0
  %641 = vmatprep.mubr.f32.mxu0 0.0
  %642 = vmatmul.mubr.f32.gmra.mxu0 %v264
  %v643 = vpop.f32.mrf.mxu0
  %v644 = vadd.f32 0.0, %v643
  %v645 = vpop.f32.mrf.mxu0
  %646 = vmatprep.mubr.f32.mxu0 0.0
  %647 = vmatmul.mubr.f32.gmra.mxu0 %v267
  %v648 = vpop.f32.mrf.mxu0
  %v649 = vadd.f32 0.0, %v648
  %v650 = vpop.f32.mrf.mxu0
  %651 = vmatprep.mubr.f32.mxu0 0.0
  %652 = vmatmul.mubr.f32.gmra.mxu0 %v270
  %v653 = vpop.f32.mrf.mxu0
  %v654 = vadd.f32 0.0, %v653
  %v655 = vpop.f32.mrf.mxu0
  %656 = vmatprep.mubr.f32.mxu0 0.0
  %657 = vmatmul.mubr.f32.gmra.mxu0 %v273
  %v658 = vpop.f32.mrf.mxu0
  %v659 = vadd.f32 0.0, %v658
  %v660 = vpop.f32.mrf.mxu0
  %661 = vmatprep.mubr.f32.mxu0 0.0
  %662 = vmatmul.mubr.f32.gmra.mxu0 %v276
  %v663 = vpop.f32.mrf.mxu0
  %v664 = vadd.f32 0.0, %v663
  %v665 = vpop.f32.mrf.mxu0
  %666 = vdwg.mxu0
  %vm667 = vcmask 261120
  %v668 = vsel %vm667, %v349, 0.0
  %v669 = vsel %vm667, %v354, 0.0
  %v670 = vadd.f32 %v668, %v669
  %v671 = vsel %vm667, %v359, 0.0
  %v672 = vadd.f32 %v670, %v671
  %v673 = vsel %vm667, %v364, 0.0
  %v674 = vadd.f32 %v672, %v673
  %v675 = vsel %vm667, %v369, 0.0
  %v676 = vadd.f32 %v674, %v675
  %v677 = vsel %vm667, %v374, 0.0
  %v678 = vadd.f32 %v676, %v677
  %v679 = vsel %vm667, %v379, 0.0
  %v680 = vadd.f32 %v678, %v679
  %v681 = vsel %vm667, %v384, 0.0
  %v682 = vadd.f32 %v680, %v681
  %v683 = vsel %vm667, %v389, 0.0
  %v684 = vadd.f32 %v682, %v683
  %v685 = vsel %vm667, %v394, 0.0
  %v686 = vadd.f32 %v684, %v685
  %v687 = vsel %vm667, %v399, 0.0
  %v688 = vadd.f32 %v686, %v687
  %v689 = vsel %vm667, %v404, 0.0
  %v690 = vadd.f32 %v688, %v689
  %v691 = vsel %vm667, %v409, 0.0
  %v692 = vadd.f32 %v690, %v691
  %v693 = vsel %vm667, %v414, 0.0
  %v694 = vadd.f32 %v692, %v693
  %v695 = vsel %vm667, %v419, 0.0
  %v696 = vadd.f32 %v694, %v695
  %v697 = vsel %vm667, %v424, 0.0
  %v698 = vadd.f32 %v696, %v697
  %v699 = vsel %vm667, %v429, 0.0
  %v700 = vadd.f32 %v698, %v699
  %v701 = vsel %vm667, %v434, 0.0
  %v702 = vadd.f32 %v700, %v701
  %v703 = vsel %vm667, %v439, 0.0
  %v704 = vadd.f32 %v702, %v703
  %v705 = vsel %vm667, %v444, 0.0
  %v706 = vadd.f32 %v704, %v705
  %v707 = vsel %vm667, %v449, 0.0
  %v708 = vadd.f32 %v706, %v707
  %v709 = vsel %vm667, %v454, 0.0
  %v710 = vadd.f32 %v708, %v709
  %v711 = vsel %vm667, %v459, 0.0
  %v712 = vadd.f32 %v710, %v711
  %v713 = vsel %vm667, %v464, 0.0
  %v714 = vadd.f32 %v712, %v713
  %v715 = vsel %vm667, %v469, 0.0
  %v716 = vadd.f32 %v714, %v715
  %v717 = vsel %vm667, %v474, 0.0
  %v718 = vadd.f32 %v716, %v717
  %v719 = vsel %vm667, %v479, 0.0
  %v720 = vadd.f32 %v718, %v719
  %v721 = vsel %vm667, %v484, 0.0
  %v722 = vadd.f32 %v720, %v721
  %v723 = vsel %vm667, %v489, 0.0
  %v724 = vadd.f32 %v722, %v723
  %v725 = vsel %vm667, %v494, 0.0
  %v726 = vadd.f32 %v724, %v725
  %v727 = vsel %vm667, %v499, 0.0
  %v728 = vadd.f32 %v726, %v727
  %v729 = vsel %vm667, %v504, 0.0
  %v730 = vadd.f32 %v728, %v729
  %v731 = vsel %vm667, %v509, 0.0
  %v732 = vadd.f32 %v730, %v731
  %v733 = vsel %vm667, %v514, 0.0
  %v734 = vadd.f32 %v732, %v733
  %v735 = vsel %vm667, %v519, 0.0
  %v736 = vadd.f32 %v734, %v735
  %v737 = vsel %vm667, %v524, 0.0
  %v738 = vadd.f32 %v736, %v737
  %v739 = vsel %vm667, %v529, 0.0
  %v740 = vadd.f32 %v738, %v739
  %v741 = vsel %vm667, %v534, 0.0
  %v742 = vadd.f32 %v740, %v741
  %v743 = vsel %vm667, %v539, 0.0
  %v744 = vadd.f32 %v742, %v743
  %v745 = vsel %vm667, %v544, 0.0
  %v746 = vadd.f32 %v744, %v745
  %v747 = vsel %vm667, %v549, 0.0
  %v748 = vadd.f32 %v746, %v747
  %v749 = vsel %vm667, %v554, 0.0
  %v750 = vadd.f32 %v748, %v749
  %v751 = vsel %vm667, %v559, 0.0
  %v752 = vadd.f32 %v750, %v751
  %v753 = vsel %vm667, %v564, 0.0
  %v754 = vadd.f32 %v752, %v753
  %v755 = vsel %vm667, %v569, 0.0
  %v756 = vadd.f32 %v754, %v755
  %v757 = vsel %vm667, %v574, 0.0
  %v758 = vadd.f32 %v756, %v757
  %v759 = vsel %vm667, %v579, 0.0
  %v760 = vadd.f32 %v758, %v759
  %v761 = vsel %vm667, %v584, 0.0
  %v762 = vadd.f32 %v760, %v761
  %v763 = vsel %vm667, %v589, 0.0
  %v764 = vadd.f32 %v762, %v763
  %v765 = vsel %vm667, %v594, 0.0
  %v766 = vadd.f32 %v764, %v765
  %v767 = vsel %vm667, %v599, 0.0
  %v768 = vadd.f32 %v766, %v767
  %v769 = vsel %vm667, %v604, 0.0
  %v770 = vadd.f32 %v768, %v769
  %v771 = vsel %vm667, %v609, 0.0
  %v772 = vadd.f32 %v770, %v771
  %v773 = vsel %vm667, %v614, 0.0
  %v774 = vadd.f32 %v772, %v773
  %v775 = vsel %vm667, %v619, 0.0
  %v776 = vadd.f32 %v774, %v775
  %v777 = vsel %vm667, %v624, 0.0
  %v778 = vadd.f32 %v776, %v777
  %v779 = vsel %vm667, %v629, 0.0
  %v780 = vadd.f32 %v778, %v779
  %v781 = vsel %vm667, %v634, 0.0
  %v782 = vadd.f32 %v780, %v781
  %v783 = vsel %vm667, %v639, 0.0
  %v784 = vadd.f32 %v782, %v783
  %v785 = vsel %vm667, %v644, 0.0
  %v786 = vadd.f32 %v784, %v785
  %v787 = vsel %vm667, %v649, 0.0
  %v788 = vadd.f32 %v786, %v787
  %v789 = vsel %vm667, %v654, 0.0
  %v790 = vadd.f32 %v788, %v789
  %v791 = vsel %vm667, %v659, 0.0
  %v792 = vadd.f32 %v790, %v791
  %v793 = vsel %vm667, %v664, 0.0
  %v794 = vadd.f32 %v792, %v793
  %v795 = vrot.slane %v794, 4
  %v796 = vadd.f32 %v794, %v795
  %v797 = vrot.slane %v796, 2
  %v798 = vadd.f32 %v796, %v797
  %v799 = vrot.slane %v798, 1
  %v800 = vadd.f32 %v798, %v799
  %v801 = vmul.f32 %v800, 0.001953125
  %v802 = vmul.f32 %v349, %v349
  %v803 = vmul.f32 %v354, %v354
  %v804 = vmul.f32 %v359, %v359
  %v805 = vmul.f32 %v364, %v364
  %v806 = vmul.f32 %v369, %v369
  %v807 = vmul.f32 %v374, %v374
  %v808 = vmul.f32 %v379, %v379
  %v809 = vmul.f32 %v384, %v384
  %v810 = vmul.f32 %v389, %v389
  %v811 = vmul.f32 %v394, %v394
  %v812 = vmul.f32 %v399, %v399
  %v813 = vmul.f32 %v404, %v404
  %v814 = vmul.f32 %v409, %v409
  %v815 = vmul.f32 %v414, %v414
  %v816 = vmul.f32 %v419, %v419
  %v817 = vmul.f32 %v424, %v424
  %v818 = vmul.f32 %v429, %v429
  %v819 = vmul.f32 %v434, %v434
  %v820 = vmul.f32 %v439, %v439
  %v821 = vmul.f32 %v444, %v444
  %v822 = vmul.f32 %v449, %v449
  %v823 = vmul.f32 %v454, %v454
  %v824 = vmul.f32 %v459, %v459
  %v825 = vmul.f32 %v464, %v464
  %v826 = vmul.f32 %v469, %v469
  %v827 = vmul.f32 %v474, %v474
  %v828 = vmul.f32 %v479, %v479
  %v829 = vmul.f32 %v484, %v484
  %v830 = vmul.f32 %v489, %v489
  %v831 = vmul.f32 %v494, %v494
  %v832 = vmul.f32 %v499, %v499
  %v833 = vmul.f32 %v504, %v504
  %v834 = vmul.f32 %v509, %v509
  %v835 = vmul.f32 %v514, %v514
  %v836 = vmul.f32 %v519, %v519
  %v837 = vmul.f32 %v524, %v524
  %v838 = vmul.f32 %v529, %v529
  %v839 = vmul.f32 %v534, %v534
  %v840 = vmul.f32 %v539, %v539
  %v841 = vmul.f32 %v544, %v544
  %v842 = vmul.f32 %v549, %v549
  %v843 = vmul.f32 %v554, %v554
  %v844 = vmul.f32 %v559, %v559
  %v845 = vmul.f32 %v564, %v564
  %v846 = vmul.f32 %v569, %v569
  %v847 = vmul.f32 %v574, %v574
  %v848 = vmul.f32 %v579, %v579
  %v849 = vmul.f32 %v584, %v584
  %v850 = vmul.f32 %v589, %v589
  %v851 = vmul.f32 %v594, %v594
  %v852 = vmul.f32 %v599, %v599
  %v853 = vmul.f32 %v604, %v604
  %v854 = vmul.f32 %v609, %v609
  %v855 = vmul.f32 %v614, %v614
  %v856 = vmul.f32 %v619, %v619
  %v857 = vmul.f32 %v624, %v624
  %v858 = vmul.f32 %v629, %v629
  %v859 = vmul.f32 %v634, %v634
  %v860 = vmul.f32 %v639, %v639
  %v861 = vmul.f32 %v644, %v644
  %v862 = vmul.f32 %v649, %v649
  %v863 = vmul.f32 %v654, %v654
  %v864 = vmul.f32 %v659, %v659
  %v865 = vmul.f32 %v664, %v664
  %v866 = vsel %vm667, %v802, 0.0
  %v867 = vsel %vm667, %v803, 0.0
  %v868 = vadd.f32 %v866, %v867
  %v869 = vsel %vm667, %v804, 0.0
  %v870 = vadd.f32 %v868, %v869
  %v871 = vsel %vm667, %v805, 0.0
  %v872 = vadd.f32 %v870, %v871
  %v873 = vsel %vm667, %v806, 0.0
  %v874 = vadd.f32 %v872, %v873
  %v875 = vsel %vm667, %v807, 0.0
  %v876 = vadd.f32 %v874, %v875
  %v877 = vsel %vm667, %v808, 0.0
  %v878 = vadd.f32 %v876, %v877
  %v879 = vsel %vm667, %v809, 0.0
  %v880 = vadd.f32 %v878, %v879
  %v881 = vsel %vm667, %v810, 0.0
  %v882 = vadd.f32 %v880, %v881
  %v883 = vsel %vm667, %v811, 0.0
  %v884 = vadd.f32 %v882, %v883
  %v885 = vsel %vm667, %v812, 0.0
  %v886 = vadd.f32 %v884, %v885
  %v887 = vsel %vm667, %v813, 0.0
  %v888 = vadd.f32 %v886, %v887
  %v889 = vsel %vm667, %v814, 0.0
  %v890 = vadd.f32 %v888, %v889
  %v891 = vsel %vm667, %v815, 0.0
  %v892 = vadd.f32 %v890, %v891
  %v893 = vsel %vm667, %v816, 0.0
  %v894 = vadd.f32 %v892, %v893
  %v895 = vsel %vm667, %v817, 0.0
  %v896 = vadd.f32 %v894, %v895
  %v897 = vsel %vm667, %v818, 0.0
  %v898 = vadd.f32 %v896, %v897
  %v899 = vsel %vm667, %v819, 0.0
  %v900 = vadd.f32 %v898, %v899
  %v901 = vsel %vm667, %v820, 0.0
  %v902 = vadd.f32 %v900, %v901
  %v903 = vsel %vm667, %v821, 0.0
  %v904 = vadd.f32 %v902, %v903
  %v905 = vsel %vm667, %v822, 0.0
  %v906 = vadd.f32 %v904, %v905
  %v907 = vsel %vm667, %v823, 0.0
  %v908 = vadd.f32 %v906, %v907
  %v909 = vsel %vm667, %v824, 0.0
  %v910 = vadd.f32 %v908, %v909
  %v911 = vsel %vm667, %v825, 0.0
  %v912 = vadd.f32 %v910, %v911
  %v913 = vsel %vm667, %v826, 0.0
  %v914 = vadd.f32 %v912, %v913
  %v915 = vsel %vm667, %v827, 0.0
  %v916 = vadd.f32 %v914, %v915
  %v917 = vsel %vm667, %v828, 0.0
  %v918 = vadd.f32 %v916, %v917
  %v919 = vsel %vm667, %v829, 0.0
  %v920 = vadd.f32 %v918, %v919
  %v921 = vsel %vm667, %v830, 0.0
  %v922 = vadd.f32 %v920, %v921
  %v923 = vsel %vm667, %v831, 0.0
  %v924 = vadd.f32 %v922, %v923
  %v925 = vsel %vm667, %v832, 0.0
  %v926 = vadd.f32 %v924, %v925
  %v927 = vsel %vm667, %v833, 0.0
  %v928 = vadd.f32 %v926, %v927
  %v929 = vsel %vm667, %v834, 0.0
  %v930 = vadd.f32 %v928, %v929
  %v931 = vsel %vm667, %v835, 0.0
  %v932 = vadd.f32 %v930, %v931
  %v933 = vsel %vm667, %v836, 0.0
  %v934 = vadd.f32 %v932, %v933
  %v935 = vsel %vm667, %v837, 0.0
  %v936 = vadd.f32 %v934, %v935
  %v937 = vsel %vm667, %v838, 0.0
  %v938 = vadd.f32 %v936, %v937
  %v939 = vsel %vm667, %v839, 0.0
  %v940 = vadd.f32 %v938, %v939
  %v941 = vsel %vm667, %v840, 0.0
  %v942 = vadd.f32 %v940, %v941
  %v943 = vsel %vm667, %v841, 0.0
  %v944 = vadd.f32 %v942, %v943
  %v945 = vsel %vm667, %v842, 0.0
  %v946 = vadd.f32 %v944, %v945
  %v947 = vsel %vm667, %v843, 0.0
  %v948 = vadd.f32 %v946, %v947
  %v949 = vsel %vm667, %v844, 0.0
  %v950 = vadd.f32 %v948, %v949
  %v951 = vsel %vm667, %v845, 0.0
  %v952 = vadd.f32 %v950, %v951
  %v953 = vsel %vm667, %v846, 0.0
  %v954 = vadd.f32 %v952, %v953
  %v955 = vsel %vm667, %v847, 0.0
  %v956 = vadd.f32 %v954, %v955
  %v957 = vsel %vm667, %v848, 0.0
  %v958 = vadd.f32 %v956, %v957
  %v959 = vsel %vm667, %v849, 0.0
  %v960 = vadd.f32 %v958, %v959
  %v961 = vsel %vm667, %v850, 0.0
  %v962 = vadd.f32 %v960, %v961
  %v963 = vsel %vm667, %v851, 0.0
  %v964 = vadd.f32 %v962, %v963
  %v965 = vsel %vm667, %v852, 0.0
  %v966 = vadd.f32 %v964, %v965
  %v967 = vsel %vm667, %v853, 0.0
  %v968 = vadd.f32 %v966, %v967
  %v969 = vsel %vm667, %v854, 0.0
  %v970 = vadd.f32 %v968, %v969
  %v971 = vsel %vm667, %v855, 0.0
  %v972 = vadd.f32 %v970, %v971
  %v973 = vsel %vm667, %v856, 0.0
  %v974 = vadd.f32 %v972, %v973
  %v975 = vsel %vm667, %v857, 0.0
  %v976 = vadd.f32 %v974, %v975
  %v977 = vsel %vm667, %v858, 0.0
  %v978 = vadd.f32 %v976, %v977
  %v979 = vsel %vm667, %v859, 0.0
  %v980 = vadd.f32 %v978, %v979
  %v981 = vsel %vm667, %v860, 0.0
  %v982 = vadd.f32 %v980, %v981
  %v983 = vsel %vm667, %v861, 0.0
  %v984 = vadd.f32 %v982, %v983
  %v985 = vsel %vm667, %v862, 0.0
  %v986 = vadd.f32 %v984, %v985
  %v987 = vsel %vm667, %v863, 0.0
  %v988 = vadd.f32 %v986, %v987
  %v989 = vsel %vm667, %v864, 0.0
  %v990 = vadd.f32 %v988, %v989
  %v991 = vsel %vm667, %v865, 0.0
  %v992 = vadd.f32 %v990, %v991
  %v993 = vrot.slane %v992, 4
  %v994 = vadd.f32 %v992, %v993
  %v995 = vrot.slane %v994, 2
  %v996 = vadd.f32 %v994, %v995
  %v997 = vrot.slane %v996, 1
  %v998 = vadd.f32 %v996, %v997
  %v999 = vmul.f32 %v998, 0.001953125
  %v1000 = vmul.f32 %v801, %v801
  %v1001 = vsub.f32 %v999, %v1000
  %v1002 = vadd.f32 %v1001, 1e-05
  %v1003 = vrsqrt.pop %v1002
  %v1004 = vsub.f32 %v349, %v801
  %v1005 = vsub.f32 %v354, %v801
  %v1006 = vsub.f32 %v359, %v801
  %v1007 = vsub.f32 %v364, %v801
  %v1008 = vsub.f32 %v369, %v801
  %v1009 = vsub.f32 %v374, %v801
  %v1010 = vsub.f32 %v379, %v801
  %v1011 = vsub.f32 %v384, %v801
  %v1012 = vsub.f32 %v389, %v801
  %v1013 = vsub.f32 %v394, %v801
  %v1014 = vsub.f32 %v399, %v801
  %v1015 = vsub.f32 %v404, %v801
  %v1016 = vsub.f32 %v409, %v801
  %v1017 = vsub.f32 %v414, %v801
  %v1018 = vsub.f32 %v419, %v801
  %v1019 = vsub.f32 %v424, %v801
  %v1020 = vsub.f32 %v429, %v801
  %v1021 = vsub.f32 %v434, %v801
  %v1022 = vsub.f32 %v439, %v801
  %v1023 = vsub.f32 %v444, %v801
  %v1024 = vsub.f32 %v449, %v801
  %v1025 = vsub.f32 %v454, %v801
  %v1026 = vsub.f32 %v459, %v801
  %v1027 = vsub.f32 %v464, %v801
  %v1028 = vsub.f32 %v469, %v801
  %v1029 = vsub.f32 %v474, %v801
  %v1030 = vsub.f32 %v479, %v801
  %v1031 = vsub.f32 %v484, %v801
  %v1032 = vsub.f32 %v489, %v801
  %v1033 = vsub.f32 %v494, %v801
  %v1034 = vsub.f32 %v499, %v801
  %v1035 = vsub.f32 %v504, %v801
  %v1036 = vsub.f32 %v509, %v801
  %v1037 = vsub.f32 %v514, %v801
  %v1038 = vsub.f32 %v519, %v801
  %v1039 = vsub.f32 %v524, %v801
  %v1040 = vsub.f32 %v529, %v801
  %v1041 = vsub.f32 %v534, %v801
  %v1042 = vsub.f32 %v539, %v801
  %v1043 = vsub.f32 %v544, %v801
  %v1044 = vsub.f32 %v549, %v801
  %v1045 = vsub.f32 %v554, %v801
  %v1046 = vsub.f32 %v559, %v801
  %v1047 = vsub.f32 %v564, %v801
  %v1048 = vsub.f32 %v569, %v801
  %v1049 = vsub.f32 %v574, %v801
  %v1050 = vsub.f32 %v579, %v801
  %v1051 = vsub.f32 %v584, %v801
  %v1052 = vsub.f32 %v589, %v801
  %v1053 = vsub.f32 %v594, %v801
  %v1054 = vsub.f32 %v599, %v801
  %v1055 = vsub.f32 %v604, %v801
  %v1056 = vsub.f32 %v609, %v801
  %v1057 = vsub.f32 %v614, %v801
  %v1058 = vsub.f32 %v619, %v801
  %v1059 = vsub.f32 %v624, %v801
  %v1060 = vsub.f32 %v629, %v801
  %v1061 = vsub.f32 %v634, %v801
  %v1062 = vsub.f32 %v639, %v801
  %v1063 = vsub.f32 %v644, %v801
  %v1064 = vsub.f32 %v649, %v801
  %v1065 = vsub.f32 %v654, %v801
  %v1066 = vsub.f32 %v659, %v801
  %v1067 = vsub.f32 %v664, %v801
  %v1068 = vmul.f32 %v1004, %v1003
  %v1069 = vmul.f32 %v1005, %v1003
  %v1070 = vmul.f32 %v1006, %v1003
  %v1071 = vmul.f32 %v1007, %v1003
  %v1072 = vmul.f32 %v1008, %v1003
  %v1073 = vmul.f32 %v1009, %v1003
  %v1074 = vmul.f32 %v1010, %v1003
  %v1075 = vmul.f32 %v1011, %v1003
  %v1076 = vmul.f32 %v1012, %v1003
  %v1077 = vmul.f32 %v1013, %v1003
  %v1078 = vmul.f32 %v1014, %v1003
  %v1079 = vmul.f32 %v1015, %v1003
  %v1080 = vmul.f32 %v1016, %v1003
  %v1081 = vmul.f32 %v1017, %v1003
  %v1082 = vmul.f32 %v1018, %v1003
  %v1083 = vmul.f32 %v1019, %v1003
  %v1084 = vmul.f32 %v1020, %v1003
  %v1085 = vmul.f32 %v1021, %v1003
  %v1086 = vmul.f32 %v1022, %v1003
  %v1087 = vmul.f32 %v1023, %v1003
  %v1088 = vmul.f32 %v1024, %v1003
  %v1089 = vmul.f32 %v1025, %v1003
  %v1090 = vmul.f32 %v1026, %v1003
  %v1091 = vmul.f32 %v1027, %v1003
  %v1092 = vmul.f32 %v1028, %v1003
  %v1093 = vmul.f32 %v1029, %v1003
  %v1094 = vmul.f32 %v1030, %v1003
  %v1095 = vmul.f32 %v1031, %v1003
  %v1096 = vmul.f32 %v1032, %v1003
  %v1097 = vmul.f32 %v1033, %v1003
  %v1098 = vmul.f32 %v1034, %v1003
  %v1099 = vmul.f32 %v1035, %v1003
  %v1100 = vmul.f32 %v1036, %v1003
  %v1101 = vmul.f32 %v1037, %v1003
  %v1102 = vmul.f32 %v1038, %v1003
  %v1103 = vmul.f32 %v1039, %v1003
  %v1104 = vmul.f32 %v1040, %v1003
  %v1105 = vmul.f32 %v1041, %v1003
  %v1106 = vmul.f32 %v1042, %v1003
  %v1107 = vmul.f32 %v1043, %v1003
  %v1108 = vmul.f32 %v1044, %v1003
  %v1109 = vmul.f32 %v1045, %v1003
  %v1110 = vmul.f32 %v1046, %v1003
  %v1111 = vmul.f32 %v1047, %v1003
  %v1112 = vmul.f32 %v1048, %v1003
  %v1113 = vmul.f32 %v1049, %v1003
  %v1114 = vmul.f32 %v1050, %v1003
  %v1115 = vmul.f32 %v1051, %v1003
  %v1116 = vmul.f32 %v1052, %v1003
  %v1117 = vmul.f32 %v1053, %v1003
  %v1118 = vmul.f32 %v1054, %v1003
  %v1119 = vmul.f32 %v1055, %v1003
  %v1120 = vmul.f32 %v1056, %v1003
  %v1121 = vmul.f32 %v1057, %v1003
  %v1122 = vmul.f32 %v1058, %v1003
  %v1123 = vmul.f32 %v1059, %v1003
  %v1124 = vmul.f32 %v1060, %v1003
  %v1125 = vmul.f32 %v1061, %v1003
  %v1126 = vmul.f32 %v1062, %v1003
  %v1127 = vmul.f32 %v1063, %v1003
  %v1128 = vmul.f32 %v1064, %v1003
  %v1129 = vmul.f32 %v1065, %v1003
  %v1130 = vmul.f32 %v1066, %v1003
  %v1131 = vmul.f32 %v1067, %v1003
  %v1132 = vmax.f32 %v1068, 0.0
  %v1133 = vmax.f32 %v1069, 0.0
  %v1134 = vmax.f32 %v1070, 0.0
  %v1135 = vmax.f32 %v1071, 0.0
  %v1136 = vmax.f32 %v1072, 0.0
  %v1137 = vmax.f32 %v1073, 0.0
  %v1138 = vmax.f32 %v1074, 0.0
  %v1139 = vmax.f32 %v1075, 0.0
  %v1140 = vmax.f32 %v1076, 0.0
  %v1141 = vmax.f32 %v1077, 0.0
  %v1142 = vmax.f32 %v1078, 0.0
  %v1143 = vmax.f32 %v1079, 0.0
  %v1144 = vmax.f32 %v1080, 0.0
  %v1145 = vmax.f32 %v1081, 0.0
  %v1146 = vmax.f32 %v1082, 0.0
  %v1147 = vmax.f32 %v1083, 0.0
  %v1148 = vmax.f32 %v1084, 0.0
  %v1149 = vmax.f32 %v1085, 0.0
  %v1150 = vmax.f32 %v1086, 0.0
  %v1151 = vmax.f32 %v1087, 0.0
  %v1152 = vmax.f32 %v1088, 0.0
  %v1153 = vmax.f32 %v1089, 0.0
  %v1154 = vmax.f32 %v1090, 0.0
  %v1155 = vmax.f32 %v1091, 0.0
  %v1156 = vmax.f32 %v1092, 0.0
  %v1157 = vmax.f32 %v1093, 0.0
  %v1158 = vmax.f32 %v1094, 0.0
  %v1159 = vmax.f32 %v1095, 0.0
  %v1160 = vmax.f32 %v1096, 0.0
  %v1161 = vmax.f32 %v1097, 0.0
  %v1162 = vmax.f32 %v1098, 0.0
  %v1163 = vmax.f32 %v1099, 0.0
  %v1164 = vmax.f32 %v1100, 0.0
  %v1165 = vmax.f32 %v1101, 0.0
  %v1166 = vmax.f32 %v1102, 0.0
  %v1167 = vmax.f32 %v1103, 0.0
  %v1168 = vmax.f32 %v1104, 0.0
  %v1169 = vmax.f32 %v1105, 0.0
  %v1170 = vmax.f32 %v1106, 0.0
  %v1171 = vmax.f32 %v1107, 0.0
  %v1172 = vmax.f32 %v1108, 0.0
  %v1173 = vmax.f32 %v1109, 0.0
  %v1174 = vmax.f32 %v1110, 0.0
  %v1175 = vmax.f32 %v1111, 0.0
  %v1176 = vmax.f32 %v1112, 0.0
  %v1177 = vmax.f32 %v1113, 0.0
  %v1178 = vmax.f32 %v1114, 0.0
  %v1179 = vmax.f32 %v1115, 0.0
  %v1180 = vmax.f32 %v1116, 0.0
  %v1181 = vmax.f32 %v1117, 0.0
  %v1182 = vmax.f32 %v1118, 0.0
  %v1183 = vmax.f32 %v1119, 0.0
  %v1184 = vmax.f32 %v1120, 0.0
  %v1185 = vmax.f32 %v1121, 0.0
  %v1186 = vmax.f32 %v1122, 0.0
  %v1187 = vmax.f32 %v1123, 0.0
  %v1188 = vmax.f32 %v1124, 0.0
  %v1189 = vmax.f32 %v1125, 0.0
  %v1190 = vmax.f32 %v1126, 0.0
  %v1191 = vmax.f32 %v1127, 0.0
  %v1192 = vmax.f32 %v1128, 0.0
  %v1193 = vmax.f32 %v1129, 0.0
  %v1194 = vmax.f32 %v1130, 0.0
  %v1195 = vmax.f32 %v1131, 0.0
  %1196 = vst.msk [vmem:[#allocation2] sm:$0xff] %vm667, %v1132
  %1197 = vst.msk [vmem:[#allocation2 + $0x8] sm:$0xff] %vm667, %v1133
  %1198 = vst.msk [vmem:[#allocation2 + $0x10] sm:$0xff] %vm667, %v1134
  %1199 = vst.msk [vmem:[#allocation2 + $0x18] sm:$0xff] %vm667, %v1135
  %1200 = vst.msk [vmem:[#allocation2 + $0x20] sm:$0xff] %vm667, %v1136
  %1201 = vst.msk [vmem:[#allocation2 + $0x28] sm:$0xff] %vm667, %v1137
  %1202 = vst.msk [vmem:[#allocation2 + $0x30] sm:$0xff] %vm667, %v1138
  %1203 = vst.msk [vmem:[#allocation2 + $0x38] sm:$0xff] %vm667, %v1139
  %1204 = vst.msk [vmem:[#allocation2 + $0x40] sm:$0xff] %vm667, %v1140
  %1205 = vst.msk [vmem:[#allocation2 + $0x48] sm:$0xff] %vm667, %v1141
  %1206 = vst.msk [vmem:[#allocation2 + $0x50] sm:$0xff] %vm667, %v1142
  %1207 = vst.msk [vmem:[#allocation2 + $0x58] sm:$0xff] %vm667, %v1143
  %1208 = vst.msk [vmem:[#allocation2 + $0x60] sm:$0xff] %vm667, %v1144
  %1209 = vst.msk [vmem:[#allocation2 + $0x68] sm:$0xff] %vm667, %v1145
  %1210 = vst.msk [vmem:[#allocation2 + $0x70] sm:$0xff] %vm667, %v1146
  %1211 = vst.msk [vmem:[#allocation2 + $0x78] sm:$0xff] %vm667, %v1147
  %1212 = vst.msk [vmem:[#allocation2 + $0x80] sm:$0xff] %vm667, %v1148
  %1213 = vst.msk [vmem:[#allocation2 + $0x88] sm:$0xff] %vm667, %v1149
  %1214 = vst.msk [vmem:[#allocation2 + $0x90] sm:$0xff] %vm667, %v1150
  %1215 = vst.msk [vmem:[#allocation2 + $0x98] sm:$0xff] %vm667, %v1151
  %1216 = vst.msk [vmem:[#allocation2 + $0xa0] sm:$0xff] %vm667, %v1152
  %1217 = vst.msk [vmem:[#allocation2 + $0xa8] sm:$0xff] %vm667, %v1153
  %1218 = vst.msk [vmem:[#allocation2 + $0xb0] sm:$0xff] %vm667, %v1154
  %1219 = vst.msk [vmem:[#allocation2 + $0xb8] sm:$0xff] %vm667, %v1155
  %1220 = vst.msk [vmem:[#allocation2 + $0xc0] sm:$0xff] %vm667, %v1156
  %1221 = vst.msk [vmem:[#allocation2 + $0xc8] sm:$0xff] %vm667, %v1157
  %1222 = vst.msk [vmem:[#allocation2 + $0xd0] sm:$0xff] %vm667, %v1158
  %1223 = vst.msk [vmem:[#allocation2 + $0xd8] sm:$0xff] %vm667, %v1159
  %1224 = vst.msk [vmem:[#allocation2 + $0xe0] sm:$0xff] %vm667, %v1160
  %1225 = vst.msk [vmem:[#allocation2 + $0xe8] sm:$0xff] %vm667, %v1161
  %1226 = vst.msk [vmem:[#allocation2 + $0xf0] sm:$0xff] %vm667, %v1162
  %1227 = vst.msk [vmem:[#allocation2 + $0xf8] sm:$0xff] %vm667, %v1163
  %1228 = vst.msk [vmem:[#allocation2 + $0x100] sm:$0xff] %vm667, %v1164
  %1229 = vst.msk [vmem:[#allocation2 + $0x108] sm:$0xff] %vm667, %v1165
  %1230 = vst.msk [vmem:[#allocation2 + $0x110] sm:$0xff] %vm667, %v1166
  %1231 = vst.msk [vmem:[#allocation2 + $0x118] sm:$0xff] %vm667, %v1167
  %1232 = vst.msk [vmem:[#allocation2 + $0x120] sm:$0xff] %vm667, %v1168
  %1233 = vst.msk [vmem:[#allocation2 + $0x128] sm:$0xff] %vm667, %v1169
  %1234 = vst.msk [vmem:[#allocation2 + $0x130] sm:$0xff] %vm667, %v1170
  %1235 = vst.msk [vmem:[#allocation2 + $0x138] sm:$0xff] %vm667, %v1171
  %1236 = vst.msk [vmem:[#allocation2 + $0x140] sm:$0xff] %vm667, %v1172
  %1237 = vst.msk [vmem:[#allocation2 + $0x148] sm:$0xff] %vm667, %v1173
  %1238 = vst.msk [vmem:[#allocation2 + $0x150] sm:$0xff] %vm667, %v1174
  %1239 = vst.msk [vmem:[#allocation2 + $0x158] sm:$0xff] %vm667, %v1175
  %1240 = vst.msk [vmem:[#allocation2 + $0x160] sm:$0xff] %vm667, %v1176
  %1241 = vst.msk [vmem:[#allocation2 + $0x168] sm:$0xff] %vm667, %v1177
  %1242 = vst.msk [vmem:[#allocation2 + $0x170] sm:$0xff] %vm667, %v1178
  %1243 = vst.msk [vmem:[#allocation2 + $0x178] sm:$0xff] %vm667, %v1179
  %1244 = vst.msk [vmem:[#allocation2 + $0x180] sm:$0xff] %vm667, %v1180
  %1245 = vst.msk [vmem:[#allocation2 + $0x188] sm:$0xff] %vm667, %v1181
  %1246 = vst.msk [vmem:[#allocation2 + $0x190] sm:$0xff] %vm667, %v1182
  %1247 = vst.msk [vmem:[#allocation2 + $0x198] sm:$0xff] %vm667, %v1183
  %1248 = vst.msk [vmem:[#allocation2 + $0x1a0] sm:$0xff] %vm667, %v1184
  %1249 = vst.msk [vmem:[#allocation2 + $0x1a8] sm:$0xff] %vm667, %v1185
  %1250 = vst.msk [vmem:[#allocation2 + $0x1b0] sm:$0xff] %vm667, %v1186
  %1251 = vst.msk [vmem:[#allocation2 + $0x1b8] sm:$0xff] %vm667, %v1187
  %1252 = vst.msk [vmem:[#allocation2 + $0x1c0] sm:$0xff] %vm667, %v1188
  %1253 = vst.msk [vmem:[#allocation2 + $0x1c8] sm:$0xff] %vm667, %v1189
  %1254 = vst.msk [vmem:[#allocation2 + $0x1d0] sm:$0xff] %vm667, %v1190
  %1255 = vst.msk [vmem:[#allocation2 + $0x1d8] sm:$0xff] %vm667, %v1191
  %1256 = vst.msk [vmem:[#allocation2 + $0x1e0] sm:$0xff] %vm667, %v1192
  %1257 = vst.msk [vmem:[#allocation2 + $0x1e8] sm:$0xff] %vm667, %v1193
  %1258 = vst.msk [vmem:[#allocation2 + $0x1f0] sm:$0xff] %vm667, %v1194
  %1259 = vst.msk [vmem:[#allocation2 + $0x1f8] sm:$0xff] %vm667, %v1195
  %v1260 = vld [vmem:[#allocation2] sm:$0xff]
  %v1261 = vld [vmem:[#allocation2 + $0x8] sm:$0xff]
  %v1262 = vld [vmem:[#allocation2 + $0x10] sm:$0xff]
  %v1263 = vld [vmem:[#allocation2 + $0x18] sm:$0xff]
  %v1264 = vmax.f32 %v1260, %v1262
  %v1265 = vmax.f32 %v1261, %v1263
  %v1266 = vld [vmem:[#allocation2 + $0x20] sm:$0xff]
  %v1267 = vld [vmem:[#allocation2 + $0x28] sm:$0xff]
  %v1268 = vmax.f32 %v1264, %v1266
  %v1269 = vmax.f32 %v1265, %v1267
  %vm1272 = vcmask 1046528
  %v1273 = vrot.slane %v1268, 1
  %v1274 = vrot.slane %v1269, 1
  %v1275 = vsel %vm1272, %v1273, %v1274
  %v1278 = vmax.f32 %v1268, %v1275
  %v1279 = vmax.f32 %v1269, %v1274
  %vm1280 = vcmask 1045504
  %v1281 = vrot.slane %v1268, 2
  %v1282 = vrot.slane %v1269, 2
  %v1283 = vsel %vm1280, %v1281, %v1282
  %v1286 = vmax.f32 %v1278, %v1283
  %v1287 = vmax.f32 %v1279, %v1282
  %v1289 = vrot.slane %v1286, 1
  %v1291 = vrot.slane %v1286, 2
  %v1293 = vrot.slane %v1286, 3
  %v1296 = vrot.slane %v1287, 4
  %v1298 = vrot.slane %v1287, 5
  %v1300 = vrot.slane %v1287, 6
  %vm1302 = vcmask 1040384
  %v1303 = vsel %vm1302, %v1286, %v1289
  %vm1304 = vcmask 1041408
  %v1305 = vsel %vm1304, %v1303, %v1291
  %v1306 = vsel %vm278, %v1305, %v1293
  %vm1307 = vcmask 1043456
  %v1308 = vsel %vm1307, %v1306, %v1296
  %vm1309 = vcmask 1044480
  %v1310 = vsel %vm1309, %v1308, %v1298
  %v1311 = vsel %vm1280, %v1310, %v1300
  %vm1312 = vcmask 260096
  %1313 = vst.msk [vmem:[%s2] sm:$0x7f] %vm1312, %v1311
  %v1314 = vld [vmem:[#allocation2 + $0x20] sm:$0xff]
  %v1315 = vld [vmem:[#allocation2 + $0x28] sm:$0xff]
  %v1316 = vld [vmem:[#allocation2 + $0x30] sm:$0xff]
  %v1317 = vld [vmem:[#allocation2 + $0x38] sm:$0xff]
  %v1318 = vmax.f32 %v1314, %v1316
  %v1319 = vmax.f32 %v1315, %v1317
  %v1320 = vld [vmem:[#allocation2 + $0x40] sm:$0xff]
  %v1321 = vld [vmem:[#allocation2 + $0x48] sm:$0xff]
  %v1322 = vmax.f32 %v1318, %v1320
  %v1323 = vmax.f32 %v1319, %v1321
  %v1326 = vrot.slane %v1322, 1
  %v1327 = vrot.slane %v1323, 1
  %v1328 = vsel %vm1272, %v1326, %v1327
  %v1331 = vmax.f32 %v1322, %v1328
  %v1332 = vmax.f32 %v1323, %v1327
  %v1333 = vrot.slane %v1322, 2
  %v1334 = vrot.slane %v1323, 2
  %v1335 = vsel %vm1280, %v1333, %v1334
  %v1338 = vmax.f32 %v1331, %v1335
  %v1339 = vmax.f32 %v1332, %v1334
  %v1341 = vrot.slane %v1338, 1
  %v1343 = vrot.slane %v1338, 2
  %v1345 = vrot.slane %v1338, 3
  %v1348 = vrot.slane %v1339, 4
  %v1350 = vrot.slane %v1339, 5
  %v1352 = vrot.slane %v1339, 6
  %v1354 = vsel %vm1302, %v1338, %v1341
  %v1355 = vsel %vm1304, %v1354, %v1343
  %v1356 = vsel %vm278, %v1355, %v1345
  %v1357 = vsel %vm1307, %v1356, %v1348
  %v1358 = vsel %vm1309, %v1357, %v1350
  %v1359 = vsel %vm1280, %v1358, %v1352
  %1360 = vst.msk [vmem:[%s2 + $0x7] sm:$0x7f] %vm1312, %v1359
  %v1361 = vld [vmem:[#allocation2 + $0x40] sm:$0xff]
  %v1362 = vld [vmem:[#allocation2 + $0x48] sm:$0xff]
  %v1363 = vld [vmem:[#allocation2 + $0x50] sm:$0xff]
  %v1364 = vld [vmem:[#allocation2 + $0x58] sm:$0xff]
  %v1365 = vmax.f32 %v1361, %v1363
  %v1366 = vmax.f32 %v1362, %v1364
  %v1367 = vld [vmem:[#allocation2 + $0x60] sm:$0xff]
  %v1368 = vld [vmem:[#allocation2 + $0x68] sm:$0xff]
  %v1369 = vmax.f32 %v1365, %v1367
  %v1370 = vmax.f32 %v1366, %v1368
  %v1373 = vrot.slane %v1369, 1
  %v1374 = vrot.slane %v1370, 1
  %v1375 = vsel %vm1272, %v1373, %v1374
  %v1378 = vmax.f32 %v1369, %v1375
  %v1379 = vmax.f32 %v1370, %v1374
  %v1380 = vrot.slane %v1369, 2
  %v1381 = vrot.slane %v1370, 2
  %v1382 = vsel %vm1280, %v1380, %v1381
  %v1385 = vmax.f32 %v1378, %v1382
  %v1386 = vmax.f32 %v1379, %v1381
  %v1388 = vrot.slane %v1385, 1
  %v1390 = vrot.slane %v1385, 2
  %v1392 = vrot.slane %v1385, 3
  %v1395 = vrot.slane %v1386, 4
  %v1397 = vrot.slane %v1386, 5
  %v1399 = vrot.slane %v1386, 6
  %v1401 = vsel %vm1302, %v1385, %v1388
  %v1402 = vsel %vm1304, %v1401, %v1390
  %v1403 = vsel %vm278, %v1402, %v1392
  %v1404 = vsel %vm1307, %v1403, %v1395
  %v1405 = vsel %vm1309, %v1404, %v1397
  %v1406 = vsel %vm1280, %v1405, %v1399
  %1407 = vst.msk [vmem:[%s2 + $0xe] sm:$0x7f] %vm1312, %v1406
  %v1408 = vld [vmem:[#allocation2 + $0x60] sm:$0xff]
  %v1409 = vld [vmem:[#allocation2 + $0x68] sm:$0xff]
  %v1410 = vld [vmem:[#allocation2 + $0x70] sm:$0xff]
  %v1411 = vld [vmem:[#allocation2 + $0x78] sm:$0xff]
  %v1412 = vmax.f32 %v1408, %v1410
  %v1413 = vmax.f32 %v1409, %v1411
  %v1414 = vld [vmem:[#allocation2 + $0x80] sm:$0xff]
  %v1415 = vld [vmem:[#allocation2 + $0x88] sm:$0xff]
  %v1416 = vmax.f32 %v1412, %v1414
  %v1417 = vmax.f32 %v1413, %v1415
  %v1420 = vrot.slane %v1416, 1
  %v1421 = vrot.slane %v1417, 1
  %v1422 = vsel %vm1272, %v1420, %v1421
  %v1425 = vmax.f32 %v1416, %v1422
  %v1426 = vmax.f32 %v1417, %v1421
  %v1427 = vrot.slane %v1416, 2
  %v1428 = vrot.slane %v1417, 2
  %v1429 = vsel %vm1280, %v1427, %v1428
  %v1432 = vmax.f32 %v1425, %v1429
  %v1433 = vmax.f32 %v1426, %v1428
  %v1435 = vrot.slane %v1432, 1
  %v1437 = vrot.slane %v1432, 2
  %v1439 = vrot.slane %v1432, 3
  %v1442 = vrot.slane %v1433, 4
  %v1444 = vrot.slane %v1433, 5
  %v1446 = vrot.slane %v1433, 6
  %v1448 = vsel %vm1302, %v1432, %v1435
  %v1449 = vsel %vm1304, %v1448, %v1437
  %v1450 = vsel %vm278, %v1449, %v1439
  %v1451 = vsel %vm1307, %v1450, %v1442
  %v1452 = vsel %vm1309, %v1451, %v1444
  %v1453 = vsel %vm1280, %v1452, %v1446
  %1454 = vst.msk [vmem:[%s2 + $0x15] sm:$0x7f] %vm1312, %v1453
  %v1455 = vld [vmem:[#allocation2 + $0x80] sm:$0xff]
  %v1456 = vld [vmem:[#allocation2 + $0x88] sm:$0xff]
  %v1457 = vld [vmem:[#allocation2 + $0x90] sm:$0xff]
  %v1458 = vld [vmem:[#allocation2 + $0x98] sm:$0xff]
  %v1459 = vmax.f32 %v1455, %v1457
  %v1460 = vmax.f32 %v1456, %v1458
  %v1461 = vld [vmem:[#allocation2 + $0xa0] sm:$0xff]
  %v1462 = vld [vmem:[#allocation2 + $0xa8] sm:$0xff]
  %v1463 = vmax.f32 %v1459, %v1461
  %v1464 = vmax.f32 %v1460, %v1462
  %v1467 = vrot.slane %v1463, 1
  %v1468 = vrot.slane %v1464, 1
  %v1469 = vsel %vm1272, %v1467, %v1468
  %v1472 = vmax.f32 %v1463, %v1469
  %v1473 = vmax.f32 %v1464, %v1468
  %v1474 = vrot.slane %v1463, 2
  %v1475 = vrot.slane %v1464, 2
  %v1476 = vsel %vm1280, %v1474, %v1475
  %v1479 = vmax.f32 %v1472, %v1476
  %v1480 = vmax.f32 %v1473, %v1475
  %v1482 = vrot.slane %v1479, 1
  %v1484 = vrot.slane %v1479, 2
  %v1486 = vrot.slane %v1479, 3
  %v1489 = vrot.slane %v1480, 4
  %v1491 = vrot.slane %v1480, 5
  %v1493 = vrot.slane %v1480, 6
  %v1495 = vsel %vm1302, %v1479, %v1482
  %v1496 = vsel %vm1304, %v1495, %v1484
  %v1497 = vsel %vm278, %v1496, %v1486
  %v1498 = vsel %vm1307, %v1497, %v1489
  %v1499 = vsel %vm1309, %v1498, %v1491
  %v1500 = vsel %vm1280, %v1499, %v1493
  %1501 = vst.msk [vmem:[%s2 + $0x1c] sm:$0x7f] %vm1312, %v1500
  %v1502 = vld [vmem:[#allocation2 + $0xa0] sm:$0xff]
  %v1503 = vld [vmem:[#allocation2 + $0xa8] sm:$0xff]
  %v1504 = vld [vmem:[#allocation2 + $0xb0] sm:$0xff]
  %v1505 = vld [vmem:[#allocation2 + $0xb8] sm:$0xff]
  %v1506 = vmax.f32 %v1502, %v1504
  %v1507 = vmax.f32 %v1503, %v1505
  %v1508 = vld [vmem:[#allocation2 + $0xc0] sm:$0xff]
  %v1509 = vld [vmem:[#allocation2 + $0xc8] sm:$0xff]
  %v1510 = vmax.f32 %v1506, %v1508
  %v1511 = vmax.f32 %v1507, %v1509
  %v1514 = vrot.slane %v1510, 1
  %v1515 = vrot.slane %v1511, 1
  %v1516 = vsel %vm1272, %v1514, %v1515
  %v1519 = vmax.f32 %v1510, %v1516
  %v1520 = vmax.f32 %v1511, %v1515
  %v1521 = vrot.slane %v1510, 2
  %v1522 = vrot.slane %v1511, 2
  %v1523 = vsel %vm1280, %v1521, %v1522
  %v1526 = vmax.f32 %v1519, %v1523
  %v1527 = vmax.f32 %v1520, %v1522
  %v1529 = vrot.slane %v1526, 1
  %v1531 = vrot.slane %v1526, 2
  %v1533 = vrot.slane %v1526, 3
  %v1536 = vrot.slane %v1527, 4
  %v1538 = vrot.slane %v1527, 5
  %v1540 = vrot.slane %v1527, 6
  %v1542 = vsel %vm1302, %v1526, %v1529
  %v1543 = vsel %vm1304, %v1542, %v1531
  %v1544 = vsel %vm278, %v1543, %v1533
  %v1545 = vsel %vm1307, %v1544, %v1536
  %v1546 = vsel %vm1309, %v1545, %v1538
  %v1547 = vsel %vm1280, %v1546, %v1540
  %1548 = vst.msk [vmem:[%s2 + $0x23] sm:$0x7f] %vm1312, %v1547
  %v1549 = vld [vmem:[#allocation2 + $0xc0] sm:$0xff]
  %v1550 = vld [vmem:[#allocation2 + $0xc8] sm:$0xff]
  %v1551 = vld [vmem:[#allocation2 + $0xd0] sm:$0xff]
  %v1552 = vld [vmem:[#allocation2 + $0xd8] sm:$0xff]
  %v1553 = vmax.f32 %v1549, %v1551
  %v1554 = vmax.f32 %v1550, %v1552
  %v1555 = vld [vmem:[#allocation2 + $0xe0] sm:$0xff]
  %v1556 = vld [vmem:[#allocation2 + $0xe8] sm:$0xff]
  %v1557 = vmax.f32 %v1553, %v1555
  %v1558 = vmax.f32 %v1554, %v1556
  %v1561 = vrot.slane %v1557, 1
  %v1562 = vrot.slane %v1558, 1
  %v1563 = vsel %vm1272, %v1561, %v1562
  %v1566 = vmax.f32 %v1557, %v1563
  %v1567 = vmax.f32 %v1558, %v1562
  %v1568 = vrot.slane %v1557, 2
  %v1569 = vrot.slane %v1558, 2
  %v1570 = vsel %vm1280, %v1568, %v1569
  %v1573 = vmax.f32 %v1566, %v1570
  %v1574 = vmax.f32 %v1567, %v1569
  %v1576 = vrot.slane %v1573, 1
  %v1578 = vrot.slane %v1573, 2
  %v1580 = vrot.slane %v1573, 3
  %v1583 = vrot.slane %v1574, 4
  %v1585 = vrot.slane %v1574, 5
  %v1587 = vrot.slane %v1574, 6
  %v1589 = vsel %vm1302, %v1573, %v1576
  %v1590 = vsel %vm1304, %v1589, %v1578
  %v1591 = vsel %vm278, %v1590, %v1580
  %v1592 = vsel %vm1307, %v1591, %v1583
  %v1593 = vsel %vm1309, %v1592, %v1585
  %v1594 = vsel %vm1280, %v1593, %v1587
  %1595 = vst.msk [vmem:[%s2 + $0x2a] sm:$0x7f] %vm1312, %v1594
  %v1596 = vld [vmem:[#allocation2 + $0x100] sm:$0xff]
  %v1597 = vld [vmem:[#allocation2 + $0x108] sm:$0xff]
  %v1598 = vld [vmem:[#allocation2 + $0x110] sm:$0xff]
  %v1599 = vld [vmem:[#allocation2 + $0x118] sm:$0xff]
  %v1600 = vmax.f32 %v1596, %v1598
  %v1601 = vmax.f32 %v1597, %v1599
  %v1602 = vld [vmem:[#allocation2 + $0x120] sm:$0xff]
  %v1603 = vld [vmem:[#allocation2 + $0x128] sm:$0xff]
  %v1604 = vmax.f32 %v1600, %v1602
  %v1605 = vmax.f32 %v1601, %v1603
  %v1608 = vrot.slane %v1604, 1
  %v1609 = vrot.slane %v1605, 1
  %v1610 = vsel %vm1272, %v1608, %v1609
  %v1613 = vmax.f32 %v1604, %v1610
  %v1614 = vmax.f32 %v1605, %v1609
  %v1615 = vrot.slane %v1604, 2
  %v1616 = vrot.slane %v1605, 2
  %v1617 = vsel %vm1280, %v1615, %v1616
  %v1620 = vmax.f32 %v1613, %v1617
  %v1621 = vmax.f32 %v1614, %v1616
  %v1623 = vrot.slane %v1620, 1
  %v1625 = vrot.slane %v1620, 2
  %v1627 = vrot.slane %v1620, 3
  %v1630 = vrot.slane %v1621, 4
  %v1632 = vrot.slane %v1621, 5
  %v1634 = vrot.slane %v1621, 6
  %v1636 = vsel %vm1302, %v1620, %v1623
  %v1637 = vsel %vm1304, %v1636, %v1625
  %v1638 = vsel %vm278, %v1637, %v1627
  %v1639 = vsel %vm1307, %v1638, %v1630
  %v1640 = vsel %vm1309, %v1639, %v1632
  %v1641 = vsel %vm1280, %v1640, %v1634
  %1642 = vst.msk [vmem:[%s2 + $0x31] sm:$0x7f] %vm1312, %v1641
  %v1643 = vld [vmem:[#allocation2 + $0x120] sm:$0xff]
  %v1644 = vld [vmem:[#allocation2 + $0x128] sm:$0xff]
  %v1645 = vld [vmem:[#allocation2 + $0x130] sm:$0xff]
  %v1646 = vld [vmem:[#allocation2 + $0x138] sm:$0xff]
  %v1647 = vmax.f32 %v1643, %v1645
  %v1648 = vmax.f32 %v1644, %v1646
  %v1649 = vld [vmem:[#allocation2 + $0x140] sm:$0xff]
  %v1650 = vld [vmem:[#allocation2 + $0x148] sm:$0xff]
  %v1651 = vmax.f32 %v1647, %v1649
  %v1652 = vmax.f32 %v1648, %v1650
  %v1655 = vrot.slane %v1651, 1
  %v1656 = vrot.slane %v1652, 1
  %v1657 = vsel %vm1272, %v1655, %v1656
  %v1660 = vmax.f32 %v1651, %v1657
  %v1661 = vmax.f32 %v1652, %v1656
  %v1662 = vrot.slane %v1651, 2
  %v1663 = vrot.slane %v1652, 2
  %v1664 = vsel %vm1280, %v1662, %v1663
  %v1667 = vmax.f32 %v1660, %v1664
  %v1668 = vmax.f32 %v1661, %v1663
  %v1670 = vrot.slane %v1667, 1
  %v1672 = vrot.slane %v1667, 2
  %v1674 = vrot.slane %v1667, 3
  %v1677 = vrot.slane %v1668, 4
  %v1679 = vrot.slane %v1668, 5
  %v1681 = vrot.slane %v1668, 6
  %v1683 = vsel %vm1302, %v1667, %v1670
  %v1684 = vsel %vm1304, %v1683, %v1672
  %v1685 = vsel %vm278, %v1684, %v1674
  %v1686 = vsel %vm1307, %v1685, %v1677
  %v1687 = vsel %vm1309, %v1686, %v1679
  %v1688 = vsel %vm1280, %v1687, %v1681
  %1689 = vst.msk [vmem:[%s2 + $0x38] sm:$0x7f] %vm1312, %v1688
  %v1690 = vld [vmem:[#allocation2 + $0x140] sm:$0xff]
  %v1691 = vld [vmem:[#allocation2 + $0x148] sm:$0xff]
  %v1692 = vld [vmem:[#allocation2 + $0x150] sm:$0xff]
  %v1693 = vld [vmem:[#allocation2 + $0x158] sm:$0xff]
  %v1694 = vmax.f32 %v1690, %v1692
  %v1695 = vmax.f32 %v1691, %v1693
  %v1696 = vld [vmem:[#allocation2 + $0x160] sm:$0xff]
  %v1697 = vld [vmem:[#allocation2 + $0x168] sm:$0xff]
  %v1698 = vmax.f32 %v1694, %v1696
  %v1699 = vmax.f32 %v1695, %v1697
  %v1702 = vrot.slane %v1698, 1
  %v1703 = vrot.slane %v1699, 1
  %v1704 = vsel %vm1272, %v1702, %v1703
  %v1707 = vmax.f32 %v1698, %v1704
  %v1708 = vmax.f32 %v1699, %v1703
  %v1709 = vrot.slane %v1698, 2
  %v1710 = vrot.slane %v1699, 2
  %v1711 = vsel %vm1280, %v1709, %v1710
  %v1714 = vmax.f32 %v1707, %v1711
  %v1715 = vmax.f32 %v1708, %v1710
  %v1717 = vrot.slane %v1714, 1
  %v1719 = vrot.slane %v1714, 2
  %v1721 = vrot.slane %v1714, 3
  %v1724 = vrot.slane %v1715, 4
  %v1726 = vrot.slane %v1715, 5
  %v1728 = vrot.slane %v1715, 6
  %v1730 = vsel %vm1302, %v1714, %v1717
  %v1731 = vsel %vm1304, %v1730, %v1719
  %v1732 = vsel %vm278, %v1731, %v1721
  %v1733 = vsel %vm1307, %v1732, %v1724
  %v1734 = vsel %vm1309, %v1733, %v1726
  %v1735 = vsel %vm1280, %v1734, %v1728
  %1736 = vst.msk [vmem:[%s2 + $0x3f] sm:$0x7f] %vm1312, %v1735
  %v1737 = vld [vmem:[#allocation2 + $0x160] sm:$0xff]
  %v1738 = vld [vmem:[#allocation2 + $0x168] sm:$0xff]
  %v1739 = vld [vmem:[#allocation2 + $0x170] sm:$0xff]
  %v1740 = vld [vmem:[#allocation2 + $0x178] sm:$0xff]
  %v1741 = vmax.f32 %v1737, %v1739
  %v1742 = vmax.f32 %v1738, %v1740
  %v1743 = vld [vmem:[#allocation2 + $0x180] sm:$0xff]
  %v1744 = vld [vmem:[#allocation2 + $0x188] sm:$0xff]
  %v1745 = vmax.f32 %v1741, %v1743
  %v1746 = vmax.f32 %v1742, %v1744
  %v1749 = vrot.slane %v1745, 1
  %v1750 = vrot.slane %v1746, 1
  %v1751 = vsel %vm1272, %v1749, %v1750
  %v1754 = vmax.f32 %v1745, %v1751
  %v1755 = vmax.f32 %v1746, %v1750
  %v1756 = vrot.slane %v1745, 2
  %v1757 = vrot.slane %v1746, 2
  %v1758 = vsel %vm1280, %v1756, %v1757
  %v1761 = vmax.f32 %v1754, %v1758
  %v1762 = vmax.f32 %v1755, %v1757
  %v1764 = vrot.slane %v1761, 1
  %v1766 = vrot.slane %v1761, 2
  %v1768 = vrot.slane %v1761, 3
  %v1771 = vrot.slane %v1762, 4
  %v1773 = vrot.slane %v1762, 5
  %v1775 = vrot.slane %v1762, 6
  %v1777 = vsel %vm1302, %v1761, %v1764
  %v1778 = vsel %vm1304, %v1777, %v1766
  %v1779 = vsel %vm278, %v1778, %v1768
  %v1780 = vsel %vm1307, %v1779, %v1771
  %v1781 = vsel %vm1309, %v1780, %v1773
  %v1782 = vsel %vm1280, %v1781, %v1775
  %1783 = vst.msk [vmem:[%s2 + $0x46] sm:$0x7f] %vm1312, %v1782
  %v1784 = vld [vmem:[#allocation2 + $0x180] sm:$0xff]
  %v1785 = vld [vmem:[#allocation2 + $0x188] sm:$0xff]
  %v1786 = vld [vmem:[#allocation2 + $0x190] sm:$0xff]
  %v1787 = vld [vmem:[#allocation2 + $0x198] sm:$0xff]
  %v1788 = vmax.f32 %v1784, %v1786
  %v1789 = vmax.f32 %v1785, %v1787
  %v1790 = vld [vmem:[#allocation2 + $0x1a0] sm:$0xff]
  %v1791 = vld [vmem:[#allocation2 + $0x1a8] sm:$0xff]
  %v1792 = vmax.f32 %v1788, %v1790
  %v1793 = vmax.f32 %v1789, %v1791
  %v1796 = vrot.slane %v1792, 1
  %v1797 = vrot.slane %v1793, 1
  %v1798 = vsel %vm1272, %v1796, %v1797
  %v1801 = vmax.f32 %v1792, %v1798
  %v1802 = vmax.f32 %v1793, %v1797
  %v1803 = vrot.slane %v1792, 2
  %v1804 = vrot.slane %v1793, 2
  %v1805 = vsel %vm1280, %v1803, %v1804
  %v1808 = vmax.f32 %v1801, %v1805
  %v1809 = vmax.f32 %v1802, %v1804
  %v1811 = vrot.slane %v1808, 1
  %v1813 = vrot.slane %v1808, 2
  %v1815 = vrot.slane %v1808, 3
  %v1818 = vrot.slane %v1809, 4
  %v1820 = vrot.slane %v1809, 5
  %v1822 = vrot.slane %v1809, 6
  %v1824 = vsel %vm1302, %v1808, %v1811
  %v1825 = vsel %vm1304, %v1824, %v1813
  %v1826 = vsel %vm278, %v1825, %v1815
  %v1827 = vsel %vm1307, %v1826, %v1818
  %v1828 = vsel %vm1309, %v1827, %v1820
  %v1829 = vsel %vm1280, %v1828, %v1822
  %1830 = vst.msk [vmem:[%s2 + $0x4d] sm:$0x7f] %vm1312, %v1829
  %v1831 = vld [vmem:[#allocation2 + $0x1a0] sm:$0xff]
  %v1832 = vld [vmem:[#allocation2 + $0x1a8] sm:$0xff]
  %v1833 = vld [vmem:[#allocation2 + $0x1b0] sm:$0xff]
  %v1834 = vld [vmem:[#allocation2 + $0x1b8] sm:$0xff]
  %v1835 = vmax.f32 %v1831, %v1833
  %v1836 = vmax.f32 %v1832, %v1834
  %v1837 = vld [vmem:[#allocation2 + $0x1c0] sm:$0xff]
  %v1838 = vld [vmem:[#allocation2 + $0x1c8] sm:$0xff]
  %v1839 = vmax.f32 %v1835, %v1837
  %v1840 = vmax.f32 %v1836, %v1838
  %v1843 = vrot.slane %v1839, 1
  %v1844 = vrot.slane %v1840, 1
  %v1845 = vsel %vm1272, %v1843, %v1844
  %v1848 = vmax.f32 %v1839, %v1845
  %v1849 = vmax.f32 %v1840, %v1844
  %v1850 = vrot.slane %v1839, 2
  %v1851 = vrot.slane %v1840, 2
  %v1852 = vsel %vm1280, %v1850, %v1851
  %v1855 = vmax.f32 %v1848, %v1852
  %v1856 = vmax.f32 %v1849, %v1851
  %v1858 = vrot.slane %v1855, 1
  %v1860 = vrot.slane %v1855, 2
  %v1862 = vrot.slane %v1855, 3
  %v1865 = vrot.slane %v1856, 4
  %v1867 = vrot.slane %v1856, 5
  %v1869 = vrot.slane %v1856, 6
  %v1871 = vsel %vm1302, %v1855, %v1858
  %v1872 = vsel %vm1304, %v1871, %v1860
  %v1873 = vsel %vm278, %v1872, %v1862
  %v1874 = vsel %vm1307, %v1873, %v1865
  %v1875 = vsel %vm1309, %v1874, %v1867
  %v1876 = vsel %vm1280, %v1875, %v1869
  %1877 = vst.msk [vmem:[%s2 + $0x54] sm:$0x7f] %vm1312, %v1876
  %v1878 = vld [vmem:[#allocation2 + $0x1c0] sm:$0xff]
  %v1879 = vld [vmem:[#allocation2 + $0x1c8] sm:$0xff]
  %v1880 = vld [vmem:[#allocation2 + $0x1d0] sm:$0xff]
  %v1881 = vld [vmem:[#allocation2 + $0x1d8] sm:$0xff]
  %v1882 = vmax.f32 %v1878, %v1880
  %v1883 = vmax.f32 %v1879, %v1881
  %v1884 = vld [vmem:[#allocation2 + $0x1e0] sm:$0xff]
  %v1885 = vld [vmem:[#allocation2 + $0x1e8] sm:$0xff]
  %v1886 = vmax.f32 %v1882, %v1884
  %v1887 = vmax.f32 %v1883, %v1885
  %v1890 = vrot.slane %v1886, 1
  %v1891 = vrot.slane %v1887, 1
  %v1892 = vsel %vm1272, %v1890, %v1891
  %v1895 = vmax.f32 %v1886, %v1892
  %v1896 = vmax.f32 %v1887, %v1891
  %v1897 = vrot.slane %v1886, 2
  %v1898 = vrot.slane %v1887, 2
  %v1899 = vsel %vm1280, %v1897, %v1898
  %v1902 = vmax.f32 %v1895, %v1899
  %v1903 = vmax.f32 %v1896, %v1898
  %v1905 = vrot.slane %v1902, 1
  %v1907 = vrot.slane %v1902, 2
  %v1909 = vrot.slane %v1902, 3
  %v1912 = vrot.slane %v1903, 4
  %v1914 = vrot.slane %v1903, 5
  %v1916 = vrot.slane %v1903, 6
  %v1918 = vsel %vm1302, %v1902, %v1905
  %v1919 = vsel %vm1304, %v1918, %v1907
  %v1920 = vsel %vm278, %v1919, %v1909
  %v1921 = vsel %vm1307, %v1920, %v1912
  %v1922 = vsel %vm1309, %v1921, %v1914
  %v1923 = vsel %vm1280, %v1922, %v1916
  %1924 = vst.msk [vmem:[%s2 + $0x5b] sm:$0x7f] %vm1312, %v1923
  // Predicated region
  $region10: #{cbr_teacher_forward.3} parent=0 // pred_check
    _
  $region11: #{cbr_teacher_forward.3} parent=0 // pred_check_branch
    %1926 = sbr.rel (0) target = $region13
  $region12: #{cbr_teacher_forward.3} parent=0 // pred_region
    _
  $region13: #{cbr_teacher_forward.3} parent=0 // pred_fallthru
    _
  // Predicated region
  $region14: #{cbr_teacher_forward.3} parent=0 // pred_check
    _
  $region15: #{cbr_teacher_forward.3} parent=0 // pred_check_branch
    %1928 = sbr.rel (0) target = $region17
  $region16: #{cbr_teacher_forward.3} parent=0 // pred_region
    _
  $region17: #{cbr_teacher_forward.3} parent=0 // pred_fallthru
    _

// kernel: cbr_teacher_forward.5
$region0: #{cbr_teacher_forward.5}
  #allocation0 [shape = 'u32[]', space=smem, size = 0x4, offset = 0x4, fixed_abs, tag = 'smem constant byte address 0x4 - core index']
  #allocation1 [shape = 'u32[144,128]{1,0:T(1,128)}', space=vmem, size = 0x12000, scoped, tag = 'internal scratch']
  %s0 = inlined_call_operand.vmem [shape: f32[2,256], index: 0, kind: input, shape index: {}]
  %s1 = inlined_call_operand.vmem [shape: f32[256,4], index: 1, kind: input, shape index: {}]
  %s2 = inlined_call_operand.vmem [shape: f32[1,4], index: 2, kind: input, shape index: {}]
  %s3 = inlined_call_operand.vmem [shape: f32[2,1024], index: 3, kind: output, shape index: {}]
  %s4 = sld [smem:[#allocation0]]
  $region22: #{cbr_teacher_forward.5} parent=0
    _
  %s6 = ssub.s32 1, %s4
  %s7 = scalar_select 0, %s6, %s4
  // Predicated region
  $region2: #{cbr_teacher_forward.5} parent=0 // pred_check
    _
  $region3: #{cbr_teacher_forward.5} parent=0 // pred_check_branch
    %9 = sbr.rel (0) target = $region5
  $region4: #{cbr_teacher_forward.5} parent=0 // pred_region
    _
  $region5: #{cbr_teacher_forward.5} parent=0 // pred_fallthru
    _
  // Predicated region
  $region6: #{cbr_teacher_forward.5} parent=0 // pred_check
    _
  $region7: #{cbr_teacher_forward.5} parent=0 // pred_check_branch
    %11 = sbr.rel (0) target = $region9
  $region8: #{cbr_teacher_forward.5} parent=0 // pred_region
    _
  $region9: #{cbr_teacher_forward.5} parent=0 // pred_fallthru
    _
  // Predicated region
  $region10: #{cbr_teacher_forward.5} parent=0 // pred_check
    _
  $region11: #{cbr_teacher_forward.5} parent=0 // pred_check_branch
    %13 = sbr.rel (0) target = $region13
  $region12: #{cbr_teacher_forward.5} parent=0 // pred_region
    _
  $region13: #{cbr_teacher_forward.5} parent=0 // pred_fallthru
    _
  %v14 = vld [vmem:[%s0] sm:$0xf]
  %v15 = vld [vmem:[%s1] sm:$0xff]
  %v16 = vld [vmem:[%s1 + $0x8] sm:$0xff]
  %v17 = vld [vmem:[%s1 + $0x10] sm:$0xff]
  %v18 = vld [vmem:[%s1 + $0x18] sm:$0xff]
  %v19 = vld [vmem:[%s1 + $0x20] sm:$0xff]
  %v20 = vld [vmem:[%s1 + $0x28] sm:$0xff]
  %v21 = vld [vmem:[%s1 + $0x30] sm:$0xff]
  %v22 = vld [vmem:[%s1 + $0x38] sm:$0xff]
  %v23 = vld [vmem:[%s1 + $0x40] sm:$0xff]
  %v24 = vld [vmem:[%s1 + $0x48] sm:$0xff]
  %v25 = vld [vmem:[%s1 + $0x50] sm:$0xff]
  %v26 = vld [vmem:[%s1 + $0x58] sm:$0xff]
  %v27 = vld [vmem:[%s1 + $0x60] sm:$0xff]
  %v28 = vld [vmem:[%s1 + $0x68] sm:$0xff]
  %v29 = vld [vmem:[%s1 + $0x70] sm:$0xff]
  %v30 = vld [vmem:[%s1 + $0x78] sm:$0xff]
  %v31 = vld [vmem:[%s1 + $0x80] sm:$0xff]
  %v32 = vld [vmem:[%s1 + $0x88] sm:$0xff]
  %v33 = vld [vmem:[%s1 + $0x90] sm:$0xff]
  %v34 = vld [vmem:[%s1 + $0x98] sm:$0xff]
  %v35 = vld [vmem:[%s1 + $0xa0] sm:$0xff]
  %v36 = vld [vmem:[%s1 + $0xa8] sm:$0xff]
  %v37 = vld [vmem:[%s1 + $0xb0] sm:$0xff]
  %v38 = vld [vmem:[%s1 + $0xb8] sm:$0xff]
  %v39 = vld [vmem:[%s1 + $0xc0] sm:$0xff]
  %v40 = vld [vmem:[%s1 + $0xc8] sm:$0xff]
  %v41 = vld [vmem:[%s1 + $0xd0] sm:$0xff]
  %v42 = vld [vmem:[%s1 + $0xd8] sm:$0xff]
  %v43 = vld [vmem:[%s1 + $0xe0] sm:$0xff]
  %v44 = vld [vmem:[%s1 + $0xe8] sm:$0xff]
  %v45 = vld [vmem:[%s1 + $0xf0] sm:$0xff]
  %v46 = vld [vmem:[%s1 + $0xf8] sm:$0xff]
  %v47 = vld [vmem:[%s2] sm:$0x1]
  %v49 = vlaneseq
  %v50 = vshrl.u32 %v49, 7
  %v51 = vsub.s32 0, %v50
  %v52 = vrot.slane %v47, %v51
  %v56 = vunpack.c.l.s4 1983009808
  %v57 = vunpack.c.0.s8 %v56
  %v58 = vlaneseq
  %v59 = vshrl.u32 %v58, 7
  %v60 = vsub.s32 %v57, %v59
  %v61 = vrot.slane %v14, %v60
  %v62 = vcombine.high %v61, %v61
  %65 = vmatprep.subr.mxu0 0.0
  %66 = vmatpush1.msra.mxu0 %v30
  %67 = vmatprep.subr.mxu0 0.0
  %68 = vmatpush1.msra.mxu0 %v29
  %69 = vmatprep.subr.mxu0 0.0
  %70 = vmatpush1.msra.mxu0 %v28
  %71 = vmatprep.subr.mxu0 0.0
  %72 = vmatpush1.msra.mxu0 %v27
  %73 = vmatprep.subr.mxu0 0.0
  %74 = vmatpush1.msra.mxu0 %v26
  %75 = vmatprep.subr.mxu0 0.0
  %76 = vmatpush1.msra.mxu0 %v25
  %77 = vmatprep.subr.mxu0 0.0
  %78 = vmatpush1.msra.mxu0 %v24
  %79 = vmatprep.subr.mxu0 0.0
  %80 = vmatpush1.msra.mxu0 %v23
  %81 = vmatprep.subr.mxu0 0.0
  %82 = vmatpush1.msra.mxu0 %v22
  %83 = vmatprep.subr.mxu0 0.0
  %84 = vmatpush1.msra.mxu0 %v21
  %85 = vmatprep.subr.mxu0 0.0
  %86 = vmatpush1.msra.mxu0 %v20
  %87 = vmatprep.subr.mxu0 0.0
  %88 = vmatpush1.msra.mxu0 %v19
  %89 = vmatprep.subr.mxu0 0.0
  %90 = vmatpush1.msra.mxu0 %v18
  %91 = vmatprep.subr.mxu0 0.0
  %92 = vmatpush1.msra.mxu0 %v17
  %93 = vmatprep.subr.mxu0 0.0
  %94 = vmatpush1.msra.mxu0 %v16
  %95 = vmatprep.subr.mxu0 0.0
  %96 = vmatpush1.msra.mxu0 %v15
  %97 = vmatprep.subr.mxu0 0.0
  %98 = vmatpush2.msra.mxu0 %v46
  %99 = vmatprep.subr.mxu0 0.0
  %100 = vmatpush2.msra.mxu0 %v45
  %101 = vmatprep.subr.mxu0 0.0
  %102 = vmatpush2.msra.mxu0 %v44
  %103 = vmatprep.subr.mxu0 0.0
  %104 = vmatpush2.msra.mxu0 %v43
  %105 = vmatprep.subr.mxu0 0.0
  %106 = vmatpush2.msra.mxu0 %v42
  %107 = vmatprep.subr.mxu0 0.0
  %108 = vmatpush2.msra.mxu0 %v41
  %109 = vmatprep.subr.mxu0 0.0
  %110 = vmatpush2.msra.mxu0 %v40
  %111 = vmatprep.subr.mxu0 0.0
  %112 = vmatpush2.msra.mxu0 %v39
  %113 = vmatprep.subr.mxu0 0.0
  %114 = vmatpush2.msra.mxu0 %v38
  %115 = vmatprep.subr.mxu0 0.0
  %116 = vmatpush2.msra.mxu0 %v37
  %117 = vmatprep.subr.mxu0 0.0
  %118 = vmatpush2.msra.mxu0 %v36
  %119 = vmatprep.subr.mxu0 0.0
  %120 = vmatpush2.msra.mxu0 %v35
  %121 = vmatprep.subr.mxu0 0.0
  %122 = vmatpush2.msra.mxu0 %v34
  %123 = vmatprep.subr.mxu0 0.0
  %124 = vmatpush2.msra.mxu0 %v33
  %125 = vmatprep.subr.mxu0 0.0
  %126 = vmatpush2.msra.mxu0 %v32
  %127 = vmatprep.subr.mxu0 0.0
  %128 = vmatpush2.msra.mxu0 %v31
  %129 = vmatprep.mubr.f32.mxu0 %v62
  %130 = vmatmul.mubr.f32.gmra.mxu0 %v61
  %v131 = vpop.f32.mrf.mxu0
  %v132 = vadd.f32 %v52, %v131
  %v133 = vpop.f32.mrf.mxu0
  %134 = vdwg.mxu0
  %v135 = vtanh.pop %v132
  %v136 = vmul.f32 %v135, 16.0
  %v137 = vadd.f32 %v136, 16.0
  %v138 = vxor.u32 %v132, 2147483648
  %v139 = vmul.f32 %v138, 1.442695
  %v140 = vpow.pop %v139
  %v141 = vadd.f32 %v140, 1.0
  %v142 = vrcp.pop %v141
  %v143 = vmul.f32 1.0, %v142
  %v144 = vmul.f32 %v143, 10.0
  %v145 = vadd.f32 %v144, 2.0
  %v146 = vmul.f32 %v145, 2.0
  %v147 = vmul.f32 %v146, %v145
  %v148 = vrcp.pop %v147
  %v149 = vmul.f32 1.0, %v148
  %v150 = vlaneseq
  %v151 = vand.u32 %v150, 127
  %v152 = vadd.s32 %v151, 128
  %v153 = vadd.s32 %v151, 256
  %v154 = vadd.s32 %v151, 384
  %v155 = vadd.s32 %v151, 512
  %v156 = vadd.s32 %v151, 640
  %v157 = vadd.s32 %v151, 768
  %v158 = vadd.s32 %v151, 896
  %v159 = vcvt.s32.f32 %v151
  %v160 = vcvt.s32.f32 %v152
  %v161 = vcvt.s32.f32 %v153
  %v162 = vcvt.s32.f32 %v154
  %v163 = vcvt.s32.f32 %v155
  %v164 = vcvt.s32.f32 %v156
  %v165 = vcvt.s32.f32 %v157
  %v166 = vcvt.s32.f32 %v158
  %v167 = vadd.f32 %v159, 0.5
  %v168 = vadd.f32 %v160, 0.5
  %v169 = vadd.f32 %v161, 0.5
  %v170 = vadd.f32 %v162, 0.5
  %v171 = vadd.f32 %v163, 0.5
  %v172 = vadd.f32 %v164, 0.5
  %v173 = vadd.f32 %v165, 0.5
  %v174 = vadd.f32 %v166, 0.5
  %v175 = vmul.f32 %v167, 0.03125
  %v176 = vmul.f32 %v168, 0.03125
  %v177 = vmul.f32 %v169, 0.03125
  %v178 = vmul.f32 %v170, 0.03125
  %v179 = vmul.f32 %v171, 0.03125
  %v180 = vmul.f32 %v172, 0.03125
  %v181 = vmul.f32 %v173, 0.03125
  %v182 = vmul.f32 %v174, 0.03125
  %v183 = vfloor.f32 %v175
  %v184 = vfloor.f32 %v176
  %v185 = vfloor.f32 %v177
  %v186 = vfloor.f32 %v178
  %v187 = vfloor.f32 %v179
  %v188 = vfloor.f32 %v180
  %v189 = vfloor.f32 %v181
  %v190 = vfloor.f32 %v182
  %v191 = vmul.f32 %v183, 32.0
  %v192 = vmul.f32 %v184, 32.0
  %v193 = vmul.f32 %v185, 32.0
  %v194 = vmul.f32 %v186, 32.0
  %v195 = vmul.f32 %v187, 32.0
  %v196 = vmul.f32 %v188, 32.0
  %v197 = vmul.f32 %v189, 32.0
  %v198 = vmul.f32 %v190, 32.0
  %v199 = vsub.f32 %v159, %v191
  %v200 = vsub.f32 %v160, %v192
  %v201 = vsub.f32 %v161, %v193
  %v202 = vsub.f32 %v162, %v194
  %v203 = vsub.f32 %v163, %v195
  %v204 = vsub.f32 %v164, %v196
  %v205 = vsub.f32 %v165, %v197
  %v206 = vsub.f32 %v166, %v198
  %208 = vset.pattern.permute.xlu0 0
  %209 = vperm.xlu0 %208, %v137
  %v210 = vpop.permute.xlu0 %209
  %v212 = vsub.f32 %v210, %v183
  %v213 = vsub.f32 %v210, %v184
  %v214 = vsub.f32 %v210, %v185
  %v215 = vsub.f32 %v210, %v186
  %v216 = vsub.f32 %v210, %v187
  %v217 = vsub.f32 %v210, %v188
  %v218 = vsub.f32 %v210, %v189
  %v219 = vsub.f32 %v210, %v190
  %v220 = vmul.f32 %v212, %v212
  %v221 = vmul.f32 %v213, %v213
  %v222 = vmul.f32 %v214, %v214
  %v223 = vmul.f32 %v215, %v215
  %v224 = vmul.f32 %v216, %v216
  %v225 = vmul.f32 %v217, %v217
  %v226 = vmul.f32 %v218, %v218
  %v227 = vmul.f32 %v219, %v219
  %229 = vset.pattern.permute.xlu0 2
  %230 = vperm.xlu0 %229, %v149
  %v231 = vpop.permute.xlu0 %230
  %v233 = vmul.f32 %v220, %v231
  %v234 = vmul.f32 %v221, %v231
  %v235 = vmul.f32 %v222, %v231
  %v236 = vmul.f32 %v223, %v231
  %v237 = vmul.f32 %v224, %v231
  %v238 = vmul.f32 %v225, %v231
  %v239 = vmul.f32 %v226, %v231
  %v240 = vmul.f32 %v227, %v231
  %241 = vset.pattern.permute.xlu0 1
  %242 = vperm.xlu0 %241, %v137
  %v243 = vpop.permute.xlu0 %242
  %v245 = vsub.f32 %v243, %v199
  %v246 = vsub.f32 %v243, %v200
  %v247 = vsub.f32 %v243, %v201
  %v248 = vsub.f32 %v243, %v202
  %v249 = vsub.f32 %v243, %v203
  %v250 = vsub.f32 %v243, %v204
  %v251 = vsub.f32 %v243, %v205
  %v252 = vsub.f32 %v243, %v206
  %v253 = vmul.f32 %v245, %v245
  %v254 = vmul.f32 %v246, %v246
  %v255 = vmul.f32 %v247, %v247
  %v256 = vmul.f32 %v248, %v248
  %v257 = vmul.f32 %v249, %v249
  %v258 = vmul.f32 %v250, %v250
  %v259 = vmul.f32 %v251, %v251
  %v260 = vmul.f32 %v252, %v252
  %261 = vset.pattern.permute.xlu0 3
  %262 = vperm.xlu0 %261, %v149
  %v263 = vpop.permute.xlu0 %262
  %v265 = vmul.f32 %v253, %v263
  %v266 = vmul.f32 %v254, %v263
  %v267 = vmul.f32 %v255, %v263
  %v268 = vmul.f32 %v256, %v263
  %v269 = vmul.f32 %v257, %v263
  %v270 = vmul.f32 %v258, %v263
  %v271 = vmul.f32 %v259, %v263
  %v272 = vmul.f32 %v260, %v263
  %v273 = vadd.f32 %v233, %v265
  %v274 = vadd.f32 %v234, %v266
  %v275 = vadd.f32 %v235, %v267
  %v276 = vadd.f32 %v236, %v268
  %v277 = vadd.f32 %v237, %v269
  %v278 = vadd.f32 %v238, %v270
  %v279 = vadd.f32 %v239, %v271
  %v280 = vadd.f32 %v240, %v272
  %v281 = vsub.f32 0.0, %v273
  %v282 = vsub.f32 0.0, %v274
  %v283 = vsub.f32 0.0, %v275
  %v284 = vsub.f32 0.0, %v276
  %v285 = vsub.f32 0.0, %v277
  %v286 = vsub.f32 0.0, %v278
  %v287 = vsub.f32 0.0, %v279
  %v288 = vsub.f32 0.0, %v280
  %v289 = vmul.f32 %v281, 1.442695
  %v290 = vpow.pop %v289
  %v291 = vmul.f32 %v282, 1.442695
  %v292 = vpow.pop %v291
  %v293 = vmul.f32 %v283, 1.442695
  %v294 = vpow.pop %v293
  %v295 = vmul.f32 %v284, 1.442695
  %v296 = vpow.pop %v295
  %v297 = vmul.f32 %v285, 1.442695
  %v298 = vpow.pop %v297
  %v299 = vmul.f32 %v286, 1.442695
  %v300 = vpow.pop %v299
  %v301 = vmul.f32 %v287, 1.442695
  %v302 = vpow.pop %v301
  %v303 = vmul.f32 %v288, 1.442695
  %v304 = vpow.pop %v303
  %v305 = vadd.f32 %v290, 0.5
  %v306 = vadd.f32 %v292, 0.5
  %v307 = vadd.f32 %v294, 0.5
  %v308 = vadd.f32 %v296, 0.5
  %v309 = vadd.f32 %v298, 0.5
  %v310 = vadd.f32 %v300, 0.5
  %v311 = vadd.f32 %v302, 0.5
  %v312 = vadd.f32 %v304, 0.5
  %v321 = vcombine.low %v305, %v306
  %v322 = vcombine.low %v307, %v308
  %v324 = vunpack.c.l.s4 1983009808
  %v325 = vunpack.c.0.s8 %v324
  %v326 = vlaneseq
  %v327 = vshrl.u32 %v326, 7
  %v328 = vsub.s32 %v325, %v327
  %v329 = vrot.slane %v321, %v328
  %v331 = vunpack.c.l.s4 1983009808
  %v332 = vunpack.c.0.s8 %v331
  %v333 = vlaneseq
  %v334 = vshrl.u32 %v333, 7
  %v335 = vsub.s32 %v332, %v334
  %v336 = vrot.slane %v322, %v335
  %v337 = vcombine.low %v329, %v336
  %v338 = vcombine.low %v309, %v310
  %v339 = vcombine.low %v311, %v312
  %v341 = vunpack.c.l.s4 1983009808
  %v342 = vunpack.c.0.s8 %v341
  %v343 = vlaneseq
  %v344 = vshrl.u32 %v343, 7
  %v345 = vsub.s32 %v342, %v344
  %v346 = vrot.slane %v338, %v345
  %v348 = vunpack.c.l.s4 1983009808
  %v349 = vunpack.c.0.s8 %v348
  %v350 = vlaneseq
  %v351 = vshrl.u32 %v350, 7
  %v352 = vsub.s32 %v349, %v351
  %v353 = vrot.slane %v339, %v352
  %v354 = vcombine.low %v346, %v353
  %357 = vst [vmem:[%s3] sm:$0xff] %v337
  %358 = vst [vmem:[%s3 + $0x8] sm:$0xff] %v354
  // Predicated region
  $region14: #{cbr_teacher_forward.5} parent=0 // pred_check
    _
  $region15: #{cbr_teacher_forward.5} parent=0 // pred_check_branch
    %360 = sbr.rel (0) target = $region17
  $region16: #{cbr_teacher_forward.5} parent=0 // pred_region
    _
  $region17: #{cbr_teacher_forward.5} parent=0 // pred_fallthru
    _
  // Predicated region
  $region18: #{cbr_teacher_forward.5} parent=0 // pred_check
    _
  $region19: #{cbr_teacher_forward.5} parent=0 // pred_check_branch
    %362 = sbr.rel (0) target = $region21
  $region20: #{cbr_teacher_forward.5} parent=0 // pred_region
    _
  $region21: #{cbr_teacher_forward.5} parent=0 // pred_fallthru
    _

</llo_original>
